<compile_context>
chip_gen: v7x
topology: tpu7x:2x2x1
jax: 0.10.0
libtpu: 0.0.40
codegen_flags: <defaults>
</compile_context>

<pallas_src>
import functools

import jax
import jax.numpy as jnp
from jax.experimental import pallas as pl
from jax.experimental.pallas import tpu as pltpu


_LN_EPS = 1e-5   # PyTorch nn.LayerNorm default


def _vmem_limit_bytes():
    # Generation-aware scoped-VMEM budget: ~3/4 of physical VMEM, capped.
    # v5e/v6e (128 MiB) -> 96 MiB; v7x (64 MiB) -> 48 MiB; fallback 48 MiB.
    try:
        cap = pltpu.get_tpu_info().vmem_capacity_bytes
    except Exception:  # attribute/name drift or no device info: safe fallback
        cap = 64 * 1024 * 1024
    return int(min(cap * 3 // 4, 96 * 1024 * 1024))


# ---------------------------------------------------------------------------
# Fused per-layer kernel: [pos add] + PreNormAttention + residual + FFN + residual
# ---------------------------------------------------------------------------

def _layer_kernel(*refs, bt, n, dim, heads, dim_head, scale, add_pos):
    if add_pos:
        (x_ref, pos_ref, wqkv_ref, bqkv_ref, wo_ref, bo_ref,
         w1_ref, b1_ref, w2_ref, b2_ref, o_ref) = refs
    else:
        (x_ref, wqkv_ref, bqkv_ref, wo_ref, bo_ref,
         w1_ref, b1_ref, w2_ref, b2_ref, o_ref) = refs

    inner = heads * dim_head
    rows = bt * n

    x = x_ref[...].astype(jnp.float32)                    # (bt, n, dim)
    if add_pos:
        x = x + pos_ref[...].astype(jnp.float32)          # (1, n, dim) broadcast
    x2 = x.reshape(rows, dim)                             # fold (b, n) into sublanes

    # ---- PreNormAttention: shared LN stats; the per-branch (q/k/v) affines are
    # folded into the fused projection weight/bias on the host. -----------------
    mu = jnp.mean(x2, axis=-1, keepdims=True)
    xc = x2 - mu
    var = jnp.mean(xc * xc, axis=-1, keepdims=True)
    xn = (xc * jax.lax.rsqrt(var + _LN_EPS)).astype(jnp.bfloat16)

    # Fused Q/K/V projection: one wide bf16 MXU matmul, f32 accumulation.
    qkv = jnp.dot(xn, wqkv_ref[...], preferred_element_type=jnp.float32)
    qkv = (qkv + bqkv_ref[...]).reshape(bt, n, 3 * inner)

    # Heads: static loop of batch-blocked contractions.  No VMEM scratch, no
    # masked scatter stores; the output projection is accumulated per head
    # (w_o split along K), which is the same single matmul split by K.
    # TODO(synk): when Mosaic lowers dot_general with two batch dims, replace
    # this loop with einsum('bqhd,bkhd->bhqk') / einsum('bhqk,bkhd->bqhd').
    attn_out = jnp.zeros((rows, dim), jnp.float32)
    for h in range(heads):
        lo = h * dim_head
        q = qkv[:, :, lo:lo + dim_head].astype(jnp.bfloat16)             # (bt,n,dh)
        k = qkv[:, :, inner + lo:inner + lo + dim_head].astype(jnp.bfloat16)
        v = qkv[:, :, 2 * inner + lo:2 * inner + lo + dim_head].astype(jnp.bfloat16)

        dots = jnp.einsum('bqd,bkd->bqk', q, k,
                          preferred_element_type=jnp.float32) * scale    # (bt,n,n)
        m = jnp.max(dots, axis=-1, keepdims=True)
        e = jnp.exp(dots - m)
        s = jnp.sum(e, axis=-1, keepdims=True)
        p = (e * pl.reciprocal(s, approx=True)).astype(jnp.bfloat16)     # EUP recip

        ctx = jnp.einsum('bqk,bkd->bqd', p, v,
                         preferred_element_type=jnp.float32)             # (bt,n,dh)
        ctx2 = ctx.reshape(rows, dim_head).astype(jnp.bfloat16)
        attn_out = attn_out + jnp.dot(ctx2, wo_ref[lo:lo + dim_head, :],
                                      preferred_element_type=jnp.float32)

    x2 = x2 + attn_out + bo_ref[...]                       # attention residual

    # ---- PreNormForward (LN affine folded into w1/b1) + residual --------------
    mu2 = jnp.mean(x2, axis=-1, keepdims=True)
    xc2 = x2 - mu2
    var2 = jnp.mean(xc2 * xc2, axis=-1, keepdims=True)
    xn2 = (xc2 * jax.lax.rsqrt(var2 + _LN_EPS)).astype(jnp.bfloat16)

    hdn = jnp.dot(xn2, w1_ref[...], preferred_element_type=jnp.float32) + b1_ref[...]
    # TODO(synk): PyTorch nn.GELU defaults to the exact erf form; the tanh
    # approximation is used here (and in the in-script reference).
    hdn = jax.nn.gelu(hdn, approximate=True).astype(jnp.bfloat16)
    y = jnp.dot(hdn, w2_ref[...], preferred_element_type=jnp.float32) + b2_ref[...]
    x2 = x2 + y                                            # FFN residual

    o_ref[...] = x2.reshape(bt, n, dim).astype(o_ref.dtype)


# ---------------------------------------------------------------------------
# pallas_call wrapper (one call per encoder layer)
# ---------------------------------------------------------------------------

def transformer_layer(x, layer, pos=None, *, heads, dim_head, block_b):
    b, n, dim = x.shape
    inner = heads * dim_head
    mlp = layer['w1'].shape[1]
    assert b % block_b == 0, "batch must be divisible by block_b"
    # Lane/sublane-dense layout assumptions (violations are correct but slow).
    assert n % 8 == 0 and dim % 128 == 0 and inner % 128 == 0 and mlp % 128 == 0

    add_pos = pos is not None
    kernel = functools.partial(_layer_kernel, bt=block_b, n=n, dim=dim,
                               heads=heads, dim_head=dim_head,
                               scale=dim_head ** -0.5, add_pos=add_pos)

    def const_spec(shape):
        # Grid-invariant operand: single-buffered (default double-buffering
        # would just duplicate its VMEM).
        nd = len(shape)
        return pl.BlockSpec(shape, lambda i: (0,) * nd,
                            pipeline_mode=pl.Buffered(1))

    in_specs = [pl.BlockSpec((block_b, n, dim), lambda i: (i, 0, 0))]
    operands = [x]
    if add_pos:
        in_specs.append(const_spec((1, n, dim)))
        operands.append(pos)
    in_specs += [
        const_spec((dim, 3 * inner)),   # w_qkv (bf16)
        const_spec((1, 3 * inner)),     # b_qkv (f32)
        const_spec((inner, dim)),       # w_o   (bf16)
        const_spec((1, dim)),           # b_o   (f32)
        const_spec((dim, mlp)),         # w1    (bf16)
        const_spec((1, mlp)),           # b1    (f32)
        const_spec((mlp, dim)),         # w2    (bf16)
        const_spec((1, dim)),           # b2    (f32)
    ]
    operands += [layer['w_qkv'], layer['b_qkv'], layer['w_o'], layer['b_o'],
                 layer['w1'], layer['b1'], layer['w2'], layer['b2']]

    flops = (2 * b * n * dim * 3 * inner            # fused QKV projection
             + 4 * b * heads * n * n * dim_head     # q@k^T and attn@v
             + 2 * b * n * inner * dim              # output projection
             + 4 * b * n * dim * mlp)               # FFN (two matmuls)
    transcendentals = b * heads * n * n + b * n * mlp + 3 * b * n
    bytes_accessed = (2 * b * n * dim * 4 + (n * dim * 4 if add_pos else 0)
                      + 2 * (dim * 3 * inner + inner * dim + 2 * dim * mlp)
                      + 4 * (3 * inner + 2 * dim + mlp))

    return pl.pallas_call(
        kernel,
        out_shape=jax.ShapeDtypeStruct((b, n, dim), x.dtype),
        grid=(b // block_b,),
        in_specs=in_specs,
        out_specs=pl.BlockSpec((block_b, n, dim), lambda i: (i, 0, 0)),
        compiler_params=pltpu.CompilerParams(
            dimension_semantics=("parallel",),
            vmem_limit_bytes=_vmem_limit_bytes()),
        cost_estimate=pl.CostEstimate(flops=flops,
                                      transcendentals=transcendentals,
                                      bytes_accessed=bytes_accessed),
    )(*operands)


# ---------------------------------------------------------------------------
# Parameters (PyTorch layout) + host-side folding / relayout
# ---------------------------------------------------------------------------

def init_params(key, *, dim, depth, heads, dim_head, mlp_dim, num_frames, token_len):
    inner = heads * dim_head
    n_total = num_frames + (token_len if token_len is not None else 0)
    keys = jax.random.split(key, depth + 1)
    w_scale = 0.05
    params = {
        'pos_embedding': jax.random.normal(keys[0], (1, n_total, dim), jnp.float32),
        'extra_token': (jnp.zeros((1, token_len, dim), jnp.float32)
                        if token_len is not None else None),
        'layers': [],
    }
    for li in range(depth):
        ks = jax.random.split(keys[1 + li], 17)
        attn = {
            'g_q': 1.0 + 0.1 * jax.random.normal(ks[0], (dim,), jnp.float32),
            'beta_q': 0.1 * jax.random.normal(ks[1], (dim,), jnp.float32),
            'g_k': 1.0 + 0.1 * jax.random.normal(ks[2], (dim,), jnp.float32),
            'beta_k': 0.1 * jax.random.normal(ks[3], (dim,), jnp.float32),
            'g_v': 1.0 + 0.1 * jax.random.normal(ks[4], (dim,), jnp.float32),
            'beta_v': 0.1 * jax.random.normal(ks[5], (dim,), jnp.float32),
            'wq': w_scale * jax.random.normal(ks[6], (inner, dim), jnp.float32),
            'wk': w_scale * jax.random.normal(ks[7], (inner, dim), jnp.float32),
            'wv': w_scale * jax.random.normal(ks[8], (inner, dim), jnp.float32),
            'wo': w_scale * jax.random.normal(ks[9], (dim, inner), jnp.float32),
            'bo': w_scale * jax.random.normal(ks[10], (dim,), jnp.float32),
        }
        ffn = {
            'g': 1.0 + 0.1 * jax.random.normal(ks[11], (dim,), jnp.float32),
            'beta': 0.1 * jax.random.normal(ks[12], (dim,), jnp.float32),
            'w1': w_scale * jax.random.normal(ks[13], (mlp_dim, dim), jnp.float32),
            'b1': w_scale * jax.random.normal(ks[14], (mlp_dim,), jnp.float32),
            'w2': w_scale * jax.random.normal(ks[15], (dim, mlp_dim), jnp.float32),
            'b2': w_scale * jax.random.normal(ks[16], (dim,), jnp.float32),
        }
        params['layers'].append({'attn': attn, 'ffn': ffn})
    return params


def fold_params(raw):
    """One-time host-side weight relayout: pre-transpose every projection,
    fold the PreNorm affine transforms into it, fuse Wq/Wk/Wv into a single
    (dim, 3*inner) slab, and cast MXU weight slabs to bf16 (exactly equivalent
    linear algebra up to bf16 rounding of the weights)."""
    def fold(w, gamma, beta):
        wt = w.T                                         # (in_dim, out_dim)
        return gamma[:, None] * wt, beta @ wt
    folded = {'pos_embedding': raw['pos_embedding'],
              'extra_token': raw['extra_token'],
              'layers': []}
    for layer in raw['layers']:
        a, f = layer['attn'], layer['ffn']
        wq_e, bq_e = fold(a['wq'], a['g_q'], a['beta_q'])
        wk_e, bk_e = fold(a['wk'], a['g_k'], a['beta_k'])
        wv_e, bv_e = fold(a['wv'], a['g_v'], a['beta_v'])
        w1_e, b1_e = fold(f['w1'], f['g'], f['beta'])
        folded['layers'].append({
            'w_qkv': jnp.concatenate([wq_e, wk_e, wv_e], axis=1).astype(jnp.bfloat16),
            'b_qkv': jnp.concatenate([bq_e, bk_e, bv_e])[None, :],      # f32 (1,3*inner)
            'w_o': a['wo'].T.astype(jnp.bfloat16),                      # (inner, dim)
            'b_o': a['bo'][None, :],                                    # f32 (1, dim)
            'w1': w1_e.astype(jnp.bfloat16),                            # (dim, mlp)
            'b1': (b1_e + f['b1'])[None, :],                            # f32 (1, mlp)
            'w2': f['w2'].T.astype(jnp.bfloat16),                       # (mlp, dim)
            'b2': f['b2'][None, :],                                     # f32 (1, dim)
        })
    return folded


def transformer_forward(x, folded, *, heads, dim_head, token_len, block_b):
    b, _, dim = x.shape
    if token_len is not None:
        extra = jnp.broadcast_to(folded['extra_token'], (b, token_len, dim))
        x = jnp.concatenate([extra, x], axis=1)   # pure shape plumbing: host-side
    pos = folded['pos_embedding'][:, :x.shape[1]]
    if not folded['layers']:
        return x + pos
    # emb_dropout / layer dropout: identity at inference (omitted).
    # Pos-embedding add is fused into the first layer's kernel.
    # TODO(synk): production: make depth a grid axis with stacked weights and a
    # VMEM-resident x accumulator (no inter-layer HBM round trips).
    for li, layer in enumerate(folded['layers']):
        x = transformer_layer(x, layer, pos=pos if li == 0 else None,
                              heads=heads, dim_head=dim_head, block_b=block_b)
    return x


# ---------------------------------------------------------------------------
# Pure-JAX reference (mirrors the PyTorch module, save_hidden=False)
# ---------------------------------------------------------------------------

def _layer_norm_ref(x, gamma, beta):
    mu = jnp.mean(x, axis=-1, keepdims=True)
    var = jnp.mean((x - mu) ** 2, axis=-1, keepdims=True)
    return (x - mu) / jnp.sqrt(var + _LN_EPS) * gamma + beta


def _attention_ref(q, k, v, a, *, heads, dim_head):
    b, n, _ = q.shape
    scale = dim_head ** -0.5
    qp, kp, vp = q @ a['wq'].T, k @ a['wk'].T, v @ a['wv'].T
    def split(t):
        return t.reshape(b, n, heads, dim_head).transpose(0, 2, 1, 3)
    qh, kh, vh = split(qp), split(kp), split(vp)
    dots = jnp.einsum('bhid,bhjd->bhij', qh, kh) * scale
    attn = jax.nn.softmax(dots, axis=-1)
    out = jnp.einsum('bhij,bhjd->bhid', attn, vh)
    out = out.transpose(0, 2, 1, 3).reshape(b, n, heads * dim_head)
    return out @ a['wo'].T + a['bo']


def transformer_reference(x, raw, *, heads, dim_head, token_len):
    b, _, dim = x.shape
    if token_len is not None:
        extra = jnp.broadcast_to(raw['extra_token'], (b, token_len, dim))
        x = jnp.concatenate([extra, x], axis=1)
    x = x + raw['pos_embedding'][:, :x.shape[1]]
    for layer in raw['layers']:
        a, f = layer['attn'], layer['ffn']
        xq = _layer_norm_ref(x, a['g_q'], a['beta_q'])
        xk = _layer_norm_ref(x, a['g_k'], a['beta_k'])
        xv = _layer_norm_ref(x, a['g_v'], a['beta_v'])
        x = _attention_ref(xq, xk, xv, a, heads=heads, dim_head=dim_head) + x
        xn = _layer_norm_ref(x, f['g'], f['beta'])
        h = jax.nn.gelu(xn @ f['w1'].T + f['b1'], approximate=True)
        x = h @ f['w2'].T + f['b2'] + x
    return x


# ---------------------------------------------------------------------------
# Demo / self-test
# ---------------------------------------------------------------------------

if __name__ == "__main__":
    # Small lane-dense demo shapes (dim/inner/mlp_dim % 128 == 0, n % 8 == 0).
    batch, num_frames, token_len = 16, 6, 2
    dim, depth, heads, dim_head, mlp_dim = 128, 2, 4, 32, 256
    # 4 grid steps -> 2 per TensorCore on v7x megacore; block_b*n rows per matmul.
    block_b = 4

    assert not (heads == 1 and dim_head == dim)   # module's project_out == True

    key = jax.random.PRNGKey(0)
    k_x, k_p = jax.random.split(key)
    x = jax.random.normal(k_x, (batch, num_frames, dim), dtype=jnp.float32)

    raw = init_params(k_p, dim=dim, depth=depth, heads=heads, dim_head=dim_head,
                      mlp_dim=mlp_dim, num_frames=num_frames, token_len=token_len)
    folded = fold_params(raw)

    out = transformer_forward(x, folded, heads=heads, dim_head=dim_head,
                              token_len=token_len, block_b=block_b)
    out = jax.block_until_ready(out)

    with jax.default_matmul_precision("float32"):
        ref = transformer_reference(x, raw, heads=heads, dim_head=dim_head,
                                    token_len=token_len)
    ref = jax.block_until_ready(ref)

    assert out.shape == (batch, num_frames + token_len, dim)
    err = float(jnp.max(jnp.abs(out - ref)))
    # Tolerance covers bf16 MXU operands (weights/activations), the approximate
    # EUP reciprocal in the softmax, and MXU vs. XLA rounding; genuine layout /
    # head-ordering bugs would be O(0.1+).
    assert jnp.allclose(out, ref, atol=2e-2, rtol=2e-2), \
        f"mismatch vs reference (max abs err {err})"

    print("KERNEL_OK")
</pallas_src>

<mosaic_0001>
module attributes {stable_mosaic.version = 11 : i64} {
  func.func @_layer_kernel(%arg0: i32, %arg1: memref<4x8x128xf32, #tpu.memory_space<vmem>>, %arg2: memref<1x8x128xf32, #tpu.memory_space<vmem>>, %arg3: memref<128x384xbf16, #tpu.memory_space<vmem>>, %arg4: memref<1x384xf32, #tpu.memory_space<vmem>>, %arg5: memref<128x128xbf16, #tpu.memory_space<vmem>>, %arg6: memref<1x128xf32, #tpu.memory_space<vmem>>, %arg7: memref<128x256xbf16, #tpu.memory_space<vmem>>, %arg8: memref<1x256xf32, #tpu.memory_space<vmem>>, %arg9: memref<256x128xbf16, #tpu.memory_space<vmem>>, %arg10: memref<1x128xf32, #tpu.memory_space<vmem>>, %arg11: memref<4x8x128xf32, #tpu.memory_space<vmem>>) attributes {dimension_semantics = [#tpu.dimension_semantics<parallel>], iteration_bounds = array<i64: 4>, scalar_prefetch = 0 : i64, scratch_operands = 0 : i64, tpu.core_type = #tpu.core_type<tc>, window_params = [{transform_indices = @transform_0, window_bounds = array<i64: 4, 8, 128>}, {pipeline_mode = #tpu.pipeline_mode<synchronous>, transform_indices = @transform_1, window_bounds = array<i64: 1, 8, 128>}, {pipeline_mode = #tpu.pipeline_mode<synchronous>, transform_indices = @transform_2, window_bounds = array<i64: 128, 384>}, {pipeline_mode = #tpu.pipeline_mode<synchronous>, transform_indices = @transform_3, window_bounds = array<i64: 1, 384>}, {pipeline_mode = #tpu.pipeline_mode<synchronous>, transform_indices = @transform_4, window_bounds = array<i64: 128, 128>}, {pipeline_mode = #tpu.pipeline_mode<synchronous>, transform_indices = @transform_5, window_bounds = array<i64: 1, 128>}, {pipeline_mode = #tpu.pipeline_mode<synchronous>, transform_indices = @transform_6, window_bounds = array<i64: 128, 256>}, {pipeline_mode = #tpu.pipeline_mode<synchronous>, transform_indices = @transform_7, window_bounds = array<i64: 1, 256>}, {pipeline_mode = #tpu.pipeline_mode<synchronous>, transform_indices = @transform_8, window_bounds = array<i64: 256, 128>}, {pipeline_mode = #tpu.pipeline_mode<synchronous>, transform_indices = @transform_9, window_bounds = array<i64: 1, 128>}, {transform_indices = @transform_10, window_bounds = array<i64: 4, 8, 128>}]} {
    %c0 = arith.constant 0 : index
    %c0_0 = arith.constant 0 : index
    %c0_1 = arith.constant 0 : index
    %0 = vector.load %arg1[%c0, %c0_0, %c0_1] : memref<4x8x128xf32, #tpu.memory_space<vmem>>, vector<4x8x128xf32>
    %c0_2 = arith.constant 0 : index
    %c0_3 = arith.constant 0 : index
    %c0_4 = arith.constant 0 : index
    %1 = vector.load %arg2[%c0_2, %c0_3, %c0_4] : memref<1x8x128xf32, #tpu.memory_space<vmem>>, vector<1x8x128xf32>
    %2 = vector.broadcast %1 : vector<1x8x128xf32> to vector<4x8x128xf32>
    %3 = arith.addf %0, %2 : vector<4x8x128xf32>
    %4 = vector.shape_cast %3 : vector<4x8x128xf32> to vector<32x128xf32>
    %cst = arith.constant dense<0.000000e+00> : vector<32xf32>
    %5 = vector.multi_reduction <add>, %4, %cst [1] : vector<32x128xf32> to vector<32xf32>
    %6 = vector.shape_cast %5 : vector<32xf32> to vector<32x1xf32>
    %cst_5 = arith.constant 1.280000e+02 : f32
    %7 = vector.broadcast %cst_5 : f32 to vector<32x1xf32>
    %8 = arith.divf %6, %7 : vector<32x1xf32>
    %9 = vector.broadcast %8 : vector<32x1xf32> to vector<32x128xf32>
    %10 = arith.subf %4, %9 : vector<32x128xf32>
    %11 = arith.mulf %10, %10 : vector<32x128xf32>
    %cst_6 = arith.constant dense<0.000000e+00> : vector<32xf32>
    %12 = vector.multi_reduction <add>, %11, %cst_6 [1] : vector<32x128xf32> to vector<32xf32>
    %13 = vector.shape_cast %12 : vector<32xf32> to vector<32x1xf32>
    %cst_7 = arith.constant 1.280000e+02 : f32
    %14 = vector.broadcast %cst_7 : f32 to vector<32x1xf32>
    %15 = arith.divf %13, %14 : vector<32x1xf32>
    %cst_8 = arith.constant 9.99999974E-6 : f32
    %16 = vector.broadcast %cst_8 : f32 to vector<32x1xf32>
    %17 = arith.addf %15, %16 : vector<32x1xf32>
    %18 = math.rsqrt %17 : vector<32x1xf32>
    %19 = vector.broadcast %18 : vector<32x1xf32> to vector<32x128xf32>
    %20 = arith.mulf %10, %19 : vector<32x128xf32>
    %21 = arith.truncf %20 : vector<32x128xf32> to vector<32x128xbf16>
    %c0_9 = arith.constant 0 : index
    %c0_10 = arith.constant 0 : index
    %22 = vector.load %arg3[%c0_9, %c0_10] : memref<128x384xbf16, #tpu.memory_space<vmem>>, vector<128x384xbf16>
    %cst_11 = arith.constant dense<0.000000e+00> : vector<32x384xf32>
    %23 = tpu.matmul %21, %22, %cst_11 {dimension_numbers = #tpu.dot_dimension_numbers<[1], [0], [0], [1], [0, 0, 1, 1], [], []>} : vector<32x128xbf16>, vector<128x384xbf16>, vector<32x384xf32> -> vector<32x384xf32>
    %c0_12 = arith.constant 0 : index
    %c0_13 = arith.constant 0 : index
    %24 = vector.load %arg4[%c0_12, %c0_13] : memref<1x384xf32, #tpu.memory_space<vmem>>, vector<1x384xf32>
    %25 = vector.broadcast %24 : vector<1x384xf32> to vector<32x384xf32>
    %26 = arith.addf %23, %25 : vector<32x384xf32>
    %27 = vector.shape_cast %26 : vector<32x384xf32> to vector<4x8x384xf32>
    %cst_14 = arith.constant 0.000000e+00 : f32
    %28 = vector.broadcast %cst_14 : f32 to vector<32x128xf32>
    %29 = vector.extract_strided_slice %27 {offsets = [0, 0, 0], sizes = [4, 8, 32], strides = [1, 1, 1]} : vector<4x8x384xf32> to vector<4x8x32xf32>
    %30 = arith.truncf %29 : vector<4x8x32xf32> to vector<4x8x32xbf16>
    %31 = vector.extract_strided_slice %27 {offsets = [0, 0, 128], sizes = [4, 8, 32], strides = [1, 1, 1]} : vector<4x8x384xf32> to vector<4x8x32xf32>
    %32 = arith.truncf %31 : vector<4x8x32xf32> to vector<4x8x32xbf16>
    %33 = vector.extract_strided_slice %27 {offsets = [0, 0, 256], sizes = [4, 8, 32], strides = [1, 1, 1]} : vector<4x8x384xf32> to vector<4x8x32xf32>
    %34 = arith.truncf %33 : vector<4x8x32xf32> to vector<4x8x32xbf16>
    "tpu.trace_start"() <{level = 10 : i32, message = "bqd,bkd->bqk"}> : () -> ()
    %cst_15 = arith.constant dense<0.000000e+00> : vector<4x8x8xf32>
    %35 = tpu.matmul %30, %32, %cst_15 {dimension_numbers = #tpu.dot_dimension_numbers<[2], [2], [1], [1], [0, 0, 0, 1, 1, 1], [0], [0]>} : vector<4x8x32xbf16>, vector<4x8x32xbf16>, vector<4x8x8xf32> -> vector<4x8x8xf32>
    "tpu.trace_stop"() : () -> ()
    %cst_16 = arith.constant 0.176776692 : f32
    %36 = vector.broadcast %cst_16 : f32 to vector<4x8x8xf32>
    %37 = arith.mulf %35, %36 : vector<4x8x8xf32>
    %cst_17 = arith.constant dense<0xFF800000> : vector<4x8xf32>
    %38 = vector.multi_reduction <maximumf>, %37, %cst_17 [2] : vector<4x8x8xf32> to vector<4x8xf32>
    %39 = vector.shape_cast %38 : vector<4x8xf32> to vector<4x8x1xf32>
    %40 = vector.broadcast %39 : vector<4x8x1xf32> to vector<4x8x8xf32>
    %41 = arith.subf %37, %40 : vector<4x8x8xf32>
    %42 = math.exp %41 : vector<4x8x8xf32>
    %cst_18 = arith.constant dense<0.000000e+00> : vector<4x8xf32>
    %43 = vector.multi_reduction <add>, %42, %cst_18 [2] : vector<4x8x8xf32> to vector<4x8xf32>
    %44 = vector.shape_cast %43 : vector<4x8xf32> to vector<4x8x1xf32>
    %45 = tpu.reciprocal %44 {approx = true} : vector<4x8x1xf32> -> vector<4x8x1xf32>
    %46 = vector.broadcast %45 : vector<4x8x1xf32> to vector<4x8x8xf32>
    %47 = arith.mulf %42, %46 : vector<4x8x8xf32>
    %48 = arith.truncf %47 : vector<4x8x8xf32> to vector<4x8x8xbf16>
    "tpu.trace_start"() <{level = 10 : i32, message = "bqk,bkd->bqd"}> : () -> ()
    %cst_19 = arith.constant dense<0.000000e+00> : vector<4x8x32xf32>
    %49 = tpu.matmul %48, %34, %cst_19 {dimension_numbers = #tpu.dot_dimension_numbers<[2], [1], [1], [2], [0, 0, 0, 1, 1, 2], [0], [0]>} : vector<4x8x8xbf16>, vector<4x8x32xbf16>, vector<4x8x32xf32> -> vector<4x8x32xf32>
    "tpu.trace_stop"() : () -> ()
    %50 = vector.shape_cast %49 : vector<4x8x32xf32> to vector<32x32xf32>
    %51 = arith.truncf %50 : vector<32x32xf32> to vector<32x32xbf16>
    %c0_20 = arith.constant 0 : index
    %c0_21 = arith.constant 0 : index
    %52 = vector.load %arg5[%c0_20, %c0_21] : memref<128x128xbf16, #tpu.memory_space<vmem>>, vector<32x128xbf16>
    %cst_22 = arith.constant dense<0.000000e+00> : vector<32x128xf32>
    %53 = tpu.matmul %51, %52, %cst_22 {dimension_numbers = #tpu.dot_dimension_numbers<[1], [0], [0], [1], [0, 0, 1, 1], [], []>} : vector<32x32xbf16>, vector<32x128xbf16>, vector<32x128xf32> -> vector<32x128xf32>
    %54 = arith.addf %28, %53 : vector<32x128xf32>
    %55 = vector.extract_strided_slice %27 {offsets = [0, 0, 32], sizes = [4, 8, 32], strides = [1, 1, 1]} : vector<4x8x384xf32> to vector<4x8x32xf32>
    %56 = arith.truncf %55 : vector<4x8x32xf32> to vector<4x8x32xbf16>
    %57 = vector.extract_strided_slice %27 {offsets = [0, 0, 160], sizes = [4, 8, 32], strides = [1, 1, 1]} : vector<4x8x384xf32> to vector<4x8x32xf32>
    %58 = arith.truncf %57 : vector<4x8x32xf32> to vector<4x8x32xbf16>
    %59 = vector.extract_strided_slice %27 {offsets = [0, 0, 288], sizes = [4, 8, 32], strides = [1, 1, 1]} : vector<4x8x384xf32> to vector<4x8x32xf32>
    %60 = arith.truncf %59 : vector<4x8x32xf32> to vector<4x8x32xbf16>
    "tpu.trace_start"() <{level = 10 : i32, message = "bqd,bkd->bqk"}> : () -> ()
    %cst_23 = arith.constant dense<0.000000e+00> : vector<4x8x8xf32>
    %61 = tpu.matmul %56, %58, %cst_23 {dimension_numbers = #tpu.dot_dimension_numbers<[2], [2], [1], [1], [0, 0, 0, 1, 1, 1], [0], [0]>} : vector<4x8x32xbf16>, vector<4x8x32xbf16>, vector<4x8x8xf32> -> vector<4x8x8xf32>
    "tpu.trace_stop"() : () -> ()
    %cst_24 = arith.constant 0.176776692 : f32
    %62 = vector.broadcast %cst_24 : f32 to vector<4x8x8xf32>
    %63 = arith.mulf %61, %62 : vector<4x8x8xf32>
    %cst_25 = arith.constant dense<0xFF800000> : vector<4x8xf32>
    %64 = vector.multi_reduction <maximumf>, %63, %cst_25 [2] : vector<4x8x8xf32> to vector<4x8xf32>
    %65 = vector.shape_cast %64 : vector<4x8xf32> to vector<4x8x1xf32>
    %66 = vector.broadcast %65 : vector<4x8x1xf32> to vector<4x8x8xf32>
    %67 = arith.subf %63, %66 : vector<4x8x8xf32>
    %68 = math.exp %67 : vector<4x8x8xf32>
    %cst_26 = arith.constant dense<0.000000e+00> : vector<4x8xf32>
    %69 = vector.multi_reduction <add>, %68, %cst_26 [2] : vector<4x8x8xf32> to vector<4x8xf32>
    %70 = vector.shape_cast %69 : vector<4x8xf32> to vector<4x8x1xf32>
    %71 = tpu.reciprocal %70 {approx = true} : vector<4x8x1xf32> -> vector<4x8x1xf32>
    %72 = vector.broadcast %71 : vector<4x8x1xf32> to vector<4x8x8xf32>
    %73 = arith.mulf %68, %72 : vector<4x8x8xf32>
    %74 = arith.truncf %73 : vector<4x8x8xf32> to vector<4x8x8xbf16>
    "tpu.trace_start"() <{level = 10 : i32, message = "bqk,bkd->bqd"}> : () -> ()
    %cst_27 = arith.constant dense<0.000000e+00> : vector<4x8x32xf32>
    %75 = tpu.matmul %74, %60, %cst_27 {dimension_numbers = #tpu.dot_dimension_numbers<[2], [1], [1], [2], [0, 0, 0, 1, 1, 2], [0], [0]>} : vector<4x8x8xbf16>, vector<4x8x32xbf16>, vector<4x8x32xf32> -> vector<4x8x32xf32>
    "tpu.trace_stop"() : () -> ()
    %76 = vector.shape_cast %75 : vector<4x8x32xf32> to vector<32x32xf32>
    %77 = arith.truncf %76 : vector<32x32xf32> to vector<32x32xbf16>
    %c32 = arith.constant 32 : index
    %c0_28 = arith.constant 0 : index
    %78 = vector.load %arg5[%c32, %c0_28] : memref<128x128xbf16, #tpu.memory_space<vmem>>, vector<32x128xbf16>
    %cst_29 = arith.constant dense<0.000000e+00> : vector<32x128xf32>
    %79 = tpu.matmul %77, %78, %cst_29 {dimension_numbers = #tpu.dot_dimension_numbers<[1], [0], [0], [1], [0, 0, 1, 1], [], []>} : vector<32x32xbf16>, vector<32x128xbf16>, vector<32x128xf32> -> vector<32x128xf32>
    %80 = arith.addf %54, %79 : vector<32x128xf32>
    %81 = vector.extract_strided_slice %27 {offsets = [0, 0, 64], sizes = [4, 8, 32], strides = [1, 1, 1]} : vector<4x8x384xf32> to vector<4x8x32xf32>
    %82 = arith.truncf %81 : vector<4x8x32xf32> to vector<4x8x32xbf16>
    %83 = vector.extract_strided_slice %27 {offsets = [0, 0, 192], sizes = [4, 8, 32], strides = [1, 1, 1]} : vector<4x8x384xf32> to vector<4x8x32xf32>
    %84 = arith.truncf %83 : vector<4x8x32xf32> to vector<4x8x32xbf16>
    %85 = vector.extract_strided_slice %27 {offsets = [0, 0, 320], sizes = [4, 8, 32], strides = [1, 1, 1]} : vector<4x8x384xf32> to vector<4x8x32xf32>
    %86 = arith.truncf %85 : vector<4x8x32xf32> to vector<4x8x32xbf16>
    "tpu.trace_start"() <{level = 10 : i32, message = "bqd,bkd->bqk"}> : () -> ()
    %cst_30 = arith.constant dense<0.000000e+00> : vector<4x8x8xf32>
    %87 = tpu.matmul %82, %84, %cst_30 {dimension_numbers = #tpu.dot_dimension_numbers<[2], [2], [1], [1], [0, 0, 0, 1, 1, 1], [0], [0]>} : vector<4x8x32xbf16>, vector<4x8x32xbf16>, vector<4x8x8xf32> -> vector<4x8x8xf32>
    "tpu.trace_stop"() : () -> ()
    %cst_31 = arith.constant 0.176776692 : f32
    %88 = vector.broadcast %cst_31 : f32 to vector<4x8x8xf32>
    %89 = arith.mulf %87, %88 : vector<4x8x8xf32>
    %cst_32 = arith.constant dense<0xFF800000> : vector<4x8xf32>
    %90 = vector.multi_reduction <maximumf>, %89, %cst_32 [2] : vector<4x8x8xf32> to vector<4x8xf32>
    %91 = vector.shape_cast %90 : vector<4x8xf32> to vector<4x8x1xf32>
    %92 = vector.broadcast %91 : vector<4x8x1xf32> to vector<4x8x8xf32>
    %93 = arith.subf %89, %92 : vector<4x8x8xf32>
    %94 = math.exp %93 : vector<4x8x8xf32>
    %cst_33 = arith.constant dense<0.000000e+00> : vector<4x8xf32>
    %95 = vector.multi_reduction <add>, %94, %cst_33 [2] : vector<4x8x8xf32> to vector<4x8xf32>
    %96 = vector.shape_cast %95 : vector<4x8xf32> to vector<4x8x1xf32>
    %97 = tpu.reciprocal %96 {approx = true} : vector<4x8x1xf32> -> vector<4x8x1xf32>
    %98 = vector.broadcast %97 : vector<4x8x1xf32> to vector<4x8x8xf32>
    %99 = arith.mulf %94, %98 : vector<4x8x8xf32>
    %100 = arith.truncf %99 : vector<4x8x8xf32> to vector<4x8x8xbf16>
    "tpu.trace_start"() <{level = 10 : i32, message = "bqk,bkd->bqd"}> : () -> ()
    %cst_34 = arith.constant dense<0.000000e+00> : vector<4x8x32xf32>
    %101 = tpu.matmul %100, %86, %cst_34 {dimension_numbers = #tpu.dot_dimension_numbers<[2], [1], [1], [2], [0, 0, 0, 1, 1, 2], [0], [0]>} : vector<4x8x8xbf16>, vector<4x8x32xbf16>, vector<4x8x32xf32> -> vector<4x8x32xf32>
    "tpu.trace_stop"() : () -> ()
    %102 = vector.shape_cast %101 : vector<4x8x32xf32> to vector<32x32xf32>
    %103 = arith.truncf %102 : vector<32x32xf32> to vector<32x32xbf16>
    %c64 = arith.constant 64 : index
    %c0_35 = arith.constant 0 : index
    %104 = vector.load %arg5[%c64, %c0_35] : memref<128x128xbf16, #tpu.memory_space<vmem>>, vector<32x128xbf16>
    %cst_36 = arith.constant dense<0.000000e+00> : vector<32x128xf32>
    %105 = tpu.matmul %103, %104, %cst_36 {dimension_numbers = #tpu.dot_dimension_numbers<[1], [0], [0], [1], [0, 0, 1, 1], [], []>} : vector<32x32xbf16>, vector<32x128xbf16>, vector<32x128xf32> -> vector<32x128xf32>
    %106 = arith.addf %80, %105 : vector<32x128xf32>
    %107 = vector.extract_strided_slice %27 {offsets = [0, 0, 96], sizes = [4, 8, 32], strides = [1, 1, 1]} : vector<4x8x384xf32> to vector<4x8x32xf32>
    %108 = arith.truncf %107 : vector<4x8x32xf32> to vector<4x8x32xbf16>
    %109 = vector.extract_strided_slice %27 {offsets = [0, 0, 224], sizes = [4, 8, 32], strides = [1, 1, 1]} : vector<4x8x384xf32> to vector<4x8x32xf32>
    %110 = arith.truncf %109 : vector<4x8x32xf32> to vector<4x8x32xbf16>
    %111 = vector.extract_strided_slice %27 {offsets = [0, 0, 352], sizes = [4, 8, 32], strides = [1, 1, 1]} : vector<4x8x384xf32> to vector<4x8x32xf32>
    %112 = arith.truncf %111 : vector<4x8x32xf32> to vector<4x8x32xbf16>
    "tpu.trace_start"() <{level = 10 : i32, message = "bqd,bkd->bqk"}> : () -> ()
    %cst_37 = arith.constant dense<0.000000e+00> : vector<4x8x8xf32>
    %113 = tpu.matmul %108, %110, %cst_37 {dimension_numbers = #tpu.dot_dimension_numbers<[2], [2], [1], [1], [0, 0, 0, 1, 1, 1], [0], [0]>} : vector<4x8x32xbf16>, vector<4x8x32xbf16>, vector<4x8x8xf32> -> vector<4x8x8xf32>
    "tpu.trace_stop"() : () -> ()
    %cst_38 = arith.constant 0.176776692 : f32
    %114 = vector.broadcast %cst_38 : f32 to vector<4x8x8xf32>
    %115 = arith.mulf %113, %114 : vector<4x8x8xf32>
    %cst_39 = arith.constant dense<0xFF800000> : vector<4x8xf32>
    %116 = vector.multi_reduction <maximumf>, %115, %cst_39 [2] : vector<4x8x8xf32> to vector<4x8xf32>
    %117 = vector.shape_cast %116 : vector<4x8xf32> to vector<4x8x1xf32>
    %118 = vector.broadcast %117 : vector<4x8x1xf32> to vector<4x8x8xf32>
    %119 = arith.subf %115, %118 : vector<4x8x8xf32>
    %120 = math.exp %119 : vector<4x8x8xf32>
    %cst_40 = arith.constant dense<0.000000e+00> : vector<4x8xf32>
    %121 = vector.multi_reduction <add>, %120, %cst_40 [2] : vector<4x8x8xf32> to vector<4x8xf32>
    %122 = vector.shape_cast %121 : vector<4x8xf32> to vector<4x8x1xf32>
    %123 = tpu.reciprocal %122 {approx = true} : vector<4x8x1xf32> -> vector<4x8x1xf32>
    %124 = vector.broadcast %123 : vector<4x8x1xf32> to vector<4x8x8xf32>
    %125 = arith.mulf %120, %124 : vector<4x8x8xf32>
    %126 = arith.truncf %125 : vector<4x8x8xf32> to vector<4x8x8xbf16>
    "tpu.trace_start"() <{level = 10 : i32, message = "bqk,bkd->bqd"}> : () -> ()
    %cst_41 = arith.constant dense<0.000000e+00> : vector<4x8x32xf32>
    %127 = tpu.matmul %126, %112, %cst_41 {dimension_numbers = #tpu.dot_dimension_numbers<[2], [1], [1], [2], [0, 0, 0, 1, 1, 2], [0], [0]>} : vector<4x8x8xbf16>, vector<4x8x32xbf16>, vector<4x8x32xf32> -> vector<4x8x32xf32>
    "tpu.trace_stop"() : () -> ()
    %128 = vector.shape_cast %127 : vector<4x8x32xf32> to vector<32x32xf32>
    %129 = arith.truncf %128 : vector<32x32xf32> to vector<32x32xbf16>
    %c96 = arith.constant 96 : index
    %c0_42 = arith.constant 0 : index
    %130 = vector.load %arg5[%c96, %c0_42] : memref<128x128xbf16, #tpu.memory_space<vmem>>, vector<32x128xbf16>
    %cst_43 = arith.constant dense<0.000000e+00> : vector<32x128xf32>
    %131 = tpu.matmul %129, %130, %cst_43 {dimension_numbers = #tpu.dot_dimension_numbers<[1], [0], [0], [1], [0, 0, 1, 1], [], []>} : vector<32x32xbf16>, vector<32x128xbf16>, vector<32x128xf32> -> vector<32x128xf32>
    %132 = arith.addf %106, %131 : vector<32x128xf32>
    %133 = arith.addf %4, %132 : vector<32x128xf32>
    %c0_44 = arith.constant 0 : index
    %c0_45 = arith.constant 0 : index
    %134 = vector.load %arg6[%c0_44, %c0_45] : memref<1x128xf32, #tpu.memory_space<vmem>>, vector<1x128xf32>
    %135 = vector.broadcast %134 : vector<1x128xf32> to vector<32x128xf32>
    %136 = arith.addf %133, %135 : vector<32x128xf32>
    %cst_46 = arith.constant dense<0.000000e+00> : vector<32xf32>
    %137 = vector.multi_reduction <add>, %136, %cst_46 [1] : vector<32x128xf32> to vector<32xf32>
    %138 = vector.shape_cast %137 : vector<32xf32> to vector<32x1xf32>
    %cst_47 = arith.constant 1.280000e+02 : f32
    %139 = vector.broadcast %cst_47 : f32 to vector<32x1xf32>
    %140 = arith.divf %138, %139 : vector<32x1xf32>
    %141 = vector.broadcast %140 : vector<32x1xf32> to vector<32x128xf32>
    %142 = arith.subf %136, %141 : vector<32x128xf32>
    %143 = arith.mulf %142, %142 : vector<32x128xf32>
    %cst_48 = arith.constant dense<0.000000e+00> : vector<32xf32>
    %144 = vector.multi_reduction <add>, %143, %cst_48 [1] : vector<32x128xf32> to vector<32xf32>
    %145 = vector.shape_cast %144 : vector<32xf32> to vector<32x1xf32>
    %cst_49 = arith.constant 1.280000e+02 : f32
    %146 = vector.broadcast %cst_49 : f32 to vector<32x1xf32>
    %147 = arith.divf %145, %146 : vector<32x1xf32>
    %cst_50 = arith.constant 9.99999974E-6 : f32
    %148 = vector.broadcast %cst_50 : f32 to vector<32x1xf32>
    %149 = arith.addf %147, %148 : vector<32x1xf32>
    %150 = math.rsqrt %149 : vector<32x1xf32>
    %151 = vector.broadcast %150 : vector<32x1xf32> to vector<32x128xf32>
    %152 = arith.mulf %142, %151 : vector<32x128xf32>
    %153 = arith.truncf %152 : vector<32x128xf32> to vector<32x128xbf16>
    %c0_51 = arith.constant 0 : index
    %c0_52 = arith.constant 0 : index
    %154 = vector.load %arg7[%c0_51, %c0_52] : memref<128x256xbf16, #tpu.memory_space<vmem>>, vector<128x256xbf16>
    %cst_53 = arith.constant dense<0.000000e+00> : vector<32x256xf32>
    %155 = tpu.matmul %153, %154, %cst_53 {dimension_numbers = #tpu.dot_dimension_numbers<[1], [0], [0], [1], [0, 0, 1, 1], [], []>} : vector<32x128xbf16>, vector<128x256xbf16>, vector<32x256xf32> -> vector<32x256xf32>
    %c0_54 = arith.constant 0 : index
    %c0_55 = arith.constant 0 : index
    %156 = vector.load %arg8[%c0_54, %c0_55] : memref<1x256xf32, #tpu.memory_space<vmem>>, vector<1x256xf32>
    %157 = vector.broadcast %156 : vector<1x256xf32> to vector<32x256xf32>
    %158 = arith.addf %155, %157 : vector<32x256xf32>
    %159 = arith.mulf %158, %158 : vector<32x256xf32>
    %160 = arith.mulf %158, %159 : vector<32x256xf32>
    %cst_56 = arith.constant 4.471500e-02 : f32
    %161 = vector.broadcast %cst_56 : f32 to vector<32x256xf32>
    %162 = arith.mulf %161, %160 : vector<32x256xf32>
    %163 = arith.addf %158, %162 : vector<32x256xf32>
    %cst_57 = arith.constant 0.797884583 : f32
    %164 = vector.broadcast %cst_57 : f32 to vector<32x256xf32>
    %165 = arith.mulf %164, %163 : vector<32x256xf32>
    %166 = math.tanh %165 : vector<32x256xf32>
    %cst_58 = arith.constant 1.000000e+00 : f32
    %167 = vector.broadcast %cst_58 : f32 to vector<32x256xf32>
    %168 = arith.addf %167, %166 : vector<32x256xf32>
    %cst_59 = arith.constant 5.000000e-01 : f32
    %169 = vector.broadcast %cst_59 : f32 to vector<32x256xf32>
    %170 = arith.mulf %169, %168 : vector<32x256xf32>
    %171 = arith.mulf %158, %170 : vector<32x256xf32>
    %172 = arith.truncf %171 : vector<32x256xf32> to vector<32x256xbf16>
    %c0_60 = arith.constant 0 : index
    %c0_61 = arith.constant 0 : index
    %173 = vector.load %arg9[%c0_60, %c0_61] : memref<256x128xbf16, #tpu.memory_space<vmem>>, vector<256x128xbf16>
    %cst_62 = arith.constant dense<0.000000e+00> : vector<32x128xf32>
    %174 = tpu.matmul %172, %173, %cst_62 {dimension_numbers = #tpu.dot_dimension_numbers<[1], [0], [0], [1], [0, 0, 1, 1], [], []>} : vector<32x256xbf16>, vector<256x128xbf16>, vector<32x128xf32> -> vector<32x128xf32>
    %c0_63 = arith.constant 0 : index
    %c0_64 = arith.constant 0 : index
    %175 = vector.load %arg10[%c0_63, %c0_64] : memref<1x128xf32, #tpu.memory_space<vmem>>, vector<1x128xf32>
    %176 = vector.broadcast %175 : vector<1x128xf32> to vector<32x128xf32>
    %177 = arith.addf %174, %176 : vector<32x128xf32>
    %178 = arith.addf %136, %177 : vector<32x128xf32>
    %179 = vector.shape_cast %178 : vector<32x128xf32> to vector<4x8x128xf32>
    %c0_65 = arith.constant 0 : index
    %c0_66 = arith.constant 0 : index
    %c0_67 = arith.constant 0 : index
    %180 = vector.load %arg11[%c0_65, %c0_66, %c0_67] : memref<4x8x128xf32, #tpu.memory_space<vmem>>, vector<4x8x128xf32>
    tpu.vector_store %arg11[%c0_65, %c0_66, %c0_67], %179 {strides = array<i32>} : memref<4x8x128xf32, #tpu.memory_space<vmem>>, vector<4x8x128xf32>,
    return
  }
  func.func @transform_0(%arg0: i32) -> (i32, i32, i32) {
    %c0_i32 = arith.constant 0 : i32
    %c0_i32_0 = arith.constant 0 : i32
    %c0_i32_1 = arith.constant 0 : i32
    return %arg0, %c0_i32, %c0_i32_0 : i32, i32, i32
  }
  func.func @transform_1(%arg0: i32) -> (i32, i32, i32) {
    %c0_i32 = arith.constant 0 : i32
    %c0_i32_0 = arith.constant 0 : i32
    %c0_i32_1 = arith.constant 0 : i32
    %c0_i32_2 = arith.constant 0 : i32
    return %c0_i32, %c0_i32_0, %c0_i32_1 : i32, i32, i32
  }
  func.func @transform_2(%arg0: i32) -> (i32, i32) {
    %c0_i32 = arith.constant 0 : i32
    %c0_i32_0 = arith.constant 0 : i32
    %c0_i32_1 = arith.constant 0 : i32
    return %c0_i32, %c0_i32_0 : i32, i32
  }
  func.func @transform_3(%arg0: i32) -> (i32, i32) {
    %c0_i32 = arith.constant 0 : i32
    %c0_i32_0 = arith.constant 0 : i32
    %c0_i32_1 = arith.constant 0 : i32
    return %c0_i32, %c0_i32_0 : i32, i32
  }
  func.func @transform_4(%arg0: i32) -> (i32, i32) {
    %c0_i32 = arith.constant 0 : i32
    %c0_i32_0 = arith.constant 0 : i32
    %c0_i32_1 = arith.constant 0 : i32
    return %c0_i32, %c0_i32_0 : i32, i32
  }
  func.func @transform_5(%arg0: i32) -> (i32, i32) {
    %c0_i32 = arith.constant 0 : i32
    %c0_i32_0 = arith.constant 0 : i32
    %c0_i32_1 = arith.constant 0 : i32
    return %c0_i32, %c0_i32_0 : i32, i32
  }
  func.func @transform_6(%arg0: i32) -> (i32, i32) {
    %c0_i32 = arith.constant 0 : i32
    %c0_i32_0 = arith.constant 0 : i32
    %c0_i32_1 = arith.constant 0 : i32
    return %c0_i32, %c0_i32_0 : i32, i32
  }
  func.func @transform_7(%arg0: i32) -> (i32, i32) {
    %c0_i32 = arith.constant 0 : i32
    %c0_i32_0 = arith.constant 0 : i32
    %c0_i32_1 = arith.constant 0 : i32
    return %c0_i32, %c0_i32_0 : i32, i32
  }
  func.func @transform_8(%arg0: i32) -> (i32, i32) {
    %c0_i32 = arith.constant 0 : i32
    %c0_i32_0 = arith.constant 0 : i32
    %c0_i32_1 = arith.constant 0 : i32
    return %c0_i32, %c0_i32_0 : i32, i32
  }
  func.func @transform_9(%arg0: i32) -> (i32, i32) {
    %c0_i32 = arith.constant 0 : i32
    %c0_i32_0 = arith.constant 0 : i32
    %c0_i32_1 = arith.constant 0 : i32
    return %c0_i32, %c0_i32_0 : i32, i32
  }
  func.func @transform_10(%arg0: i32) -> (i32, i32, i32) {
    %c0_i32 = arith.constant 0 : i32
    %c0_i32_0 = arith.constant 0 : i32
    %c0_i32_1 = arith.constant 0 : i32
    return %arg0, %c0_i32, %c0_i32_0 : i32, i32, i32
  }
}

</mosaic_0001>

<llo_original>
// kernel: tpu_custom_call.1
$region0: #{tpu_custom_call.1}
  #allocation0 [shape = 'u32[]', space=smem, size = 0x4, offset = 0x4, fixed_abs, tag = 'smem constant byte address 0x4 - core index']
  #allocation1 [shape = 'u32[144,128]{1,0:T(1,128)}', space=vmem, size = 0x12000, scoped, tag = 'internal scratch']
  %s0 = inlined_call_operand.hbm [shape: f32[16,8,128], index: 0, kind: input, shape index: {}]
  %s1 = inlined_call_operand.hbm [shape: f32[1,8,128], index: 1, kind: input, shape index: {}]
  %s2 = inlined_call_operand.hbm [shape: bf16[128,384], index: 2, kind: input, shape index: {}]
  %s3 = inlined_call_operand.vmem [shape: f32[1,384], index: 3, kind: input, shape index: {}]
  %s4 = inlined_call_operand.hbm [shape: bf16[128,128], index: 4, kind: input, shape index: {}]
  %s5 = inlined_call_operand.vmem [shape: f32[1,128], index: 5, kind: input, shape index: {}]
  %s6 = inlined_call_operand.hbm [shape: bf16[128,256], index: 6, kind: input, shape index: {}]
  %s7 = inlined_call_operand.vmem [shape: f32[1,256], index: 7, kind: input, shape index: {}]
  %s8 = inlined_call_operand.hbm [shape: bf16[256,128], index: 8, kind: input, shape index: {}]
  %s9 = inlined_call_operand.vmem [shape: f32[1,128], index: 9, kind: input, shape index: {}]
  %s10 = inlined_call_operand.hbm [shape: f32[16,8,128], index: 10, kind: output, shape index: {}]
  %s11 = sld [smem:[#allocation0]]
  $region97: #{tpu_custom_call.1} parent=0
    _
  %s13 = ssub.s32 1, %s11
  %s14 = scalar_select 0, %s13, %s11
  $region1: #{tpu_custom_call.1} parent=0
    #allocation2 [shape = 'u8[32768]{0}', space=vmem, size = 0x8000, scoped, tag = 'input window, operand 0']
    #allocation3 [shape = 's32[2]{0}', space=sflag, size = 0x8, scoped, tag = 'scoped memory for tpu_custom_call.1']
    #allocation4 [shape = 's32[2]{0}', space=sflag, size = 0x8, scoped, tag = 'scoped memory for tpu_custom_call.1']
    #allocation5 [shape = 'u8[4096]{0}', space=vmem, size = 0x1000, scoped, tag = 'input window, operand 1, single buffered']
    #allocation6 [shape = 's32[1]{0}', space=sflag, size = 0x4, scoped, tag = 'scoped memory for tpu_custom_call.1']
    #allocation7 [shape = 'u8[98304]{0}', space=vmem, size = 0x18000, scoped, tag = 'input window, operand 2, single buffered']
    #allocation8 [shape = 'u8[32768]{0}', space=vmem, size = 0x8000, scoped, tag = 'input window, operand 4, single buffered']
    #allocation9 [shape = 's32[1]{0}', space=sflag, size = 0x4, scoped, tag = 'scoped memory for tpu_custom_call.1']
    #allocation10 [shape = 'u8[65536]{0}', space=vmem, size = 0x10000, scoped, tag = 'input window, operand 6, single buffered']
    #allocation11 [shape = 'u8[65536]{0}', space=vmem, size = 0x10000, scoped, tag = 'input window, operand 8, single buffered']
    #allocation12 [shape = 's32[1]{0}', space=sflag, size = 0x4, scoped, tag = 'scoped memory for tpu_custom_call.1']
    #allocation13 [shape = 'u8[32768]{0}', space=vmem, size = 0x8000, scoped, tag = 'output window, operand 0']
    %15 = vsyncpa [#allocation3], 0
    %s16 = scalar_lea.sflag [#allocation3], 1
    %17 = vsyncpa %s16, 0
    %18 = vsyncpa [#allocation6], 0
    %19 = vsyncpa [#allocation9], 0
    %20 = vsyncpa [#allocation12], 0
    %21 = vsyncpa [#allocation4], 0
    %s22 = scalar_lea.sflag [#allocation4], 1
    %23 = vsyncpa %s22, 0
    loop: start=0, step=1, limit=6
    $region2: #{tpu_custom_call.1} parent=1 // loop_pre_header
      _
    $region3: #{tpu_custom_call.1} parent=1 // loop_header
      %s25 = sphi 0, %s29
      %p26 = scmp.ge.s32.totalorder %s25, 6
      %s35 = sphi 0, %s37
      %s38 = sphi 0, %s35
      %s39 = sphi 0, %s38
      %s55 = sphi 0, %s39
      %s59 = sphi 0, %s59
      %s61 = sphi 0, %s59
      %s62 = sphi 0, %s61
      %s76 = sphi 0, %s62
      %s80 = sphi 0, %s80
      %s82 = sphi 0, %s80
      %s83 = sphi 0, %s82
      %s97 = sphi 0, %s83
      %s101 = sphi 0, %s101
      %s103 = sphi 0, %s101
      %s104 = sphi 0, %s103
      %s118 = sphi 0, %s104
      %s122 = sphi 0, %s122
      %s124 = sphi 0, %s122
      %s125 = sphi 0, %s124
      %s139 = sphi 0, %s125
      %s143 = sphi 0, %s143
      %s145 = sphi 0, %s143
      %s146 = sphi 0, %s145
      %s160 = sphi 0, %s146
      %s164 = sphi 0, %s164
      %s166 = sphi 0, %s164
      %s167 = sphi 0, %s166
      %s181 = sphi 0, %s167
      %s185 = sphi 0, %s185
      %s187 = sphi 0, %s185
      %s188 = sphi 0, %s187
      %s202 = sphi 0, %s188
      %s206 = sphi 0, %s206
      %s208 = sphi 0, %s206
      %s209 = sphi 0, %s208
      %s223 = sphi 0, %s209
      %s227 = sphi 0, %s227
      %s229 = sphi 0, %s227
      %s230 = sphi 0, %s229
      %s244 = sphi 0, %s230
      %s250 = sphi 0, %s252
      %s253 = sphi 0, %s250
      %s254 = sphi 0, %s253
      %s270 = sphi 0, %s254
    $region4: #{tpu_custom_call.1} parent=1 // loop_header_branch
      %28 = sbr.rel (%p26) target = $region8
    $region5: #{tpu_custom_call.1} parent=1 // loop_body
      %s30 = ssub.s32 %s25, 1
      %s31 = ssub.s32 %s25, 2
      %s32 = sadd.s32 %s25, 1
      %s33 = ssub.s32 %s25, %s32
      %p34 = scmp.eq.s32.totalorder %s33, 0
      %s36 = sadd.s32 %s35, 1
      %s37 = scalar_select %p34, %s35, %s36
      %p40 = pneg %p34
      %p41 = scmp.eq.s32.totalorder %s25, 3
      %p42 = por %p40, %p41
      %p43 = scmp.ne.s32.totalorder %s35, %s38
      %p44 = scmp.eq.s32.totalorder %s25, 0
      %p45 = por %p43, %p44
      %p46 = scmp.ne.s32.totalorder %s35, %s38
      %p47 = scmp.eq.s32.totalorder %s30, 3
      %p48 = por %p46, %p47
      %p49 = scmp.ne.s32.totalorder %s38, %s39
      %p50 = scmp.eq.s32.totalorder %s30, 0
      %p51 = por %p49, %p50
      %p52 = scmp.ne.s32.totalorder %s38, %s39
      %p53 = scmp.eq.s32.totalorder %s31, 3
      %p54 = por %p52, %p53
      %p56 = scmp.ne.s32.totalorder %s39, %s55
      %p57 = scmp.eq.s32.totalorder %s31, 0
      %p58 = por %p56, %p57
      %s60 = sadd.s32 %s59, 1
      %p63 = scmp.eq.s32.totalorder %s25, 3
      %p64 = scmp.ne.s32.totalorder %s59, %s61
      %p65 = scmp.eq.s32.totalorder %s25, 0
      %p66 = por %p64, %p65
      %p67 = scmp.ne.s32.totalorder %s59, %s61
      %p68 = scmp.eq.s32.totalorder %s30, 3
      %p69 = por %p67, %p68
      %p70 = scmp.ne.s32.totalorder %s61, %s62
      %p71 = scmp.eq.s32.totalorder %s30, 0
      %p72 = por %p70, %p71
      %p73 = scmp.ne.s32.totalorder %s61, %s62
      %p74 = scmp.eq.s32.totalorder %s31, 3
      %p75 = por %p73, %p74
      %p77 = scmp.ne.s32.totalorder %s62, %s76
      %p78 = scmp.eq.s32.totalorder %s31, 0
      %p79 = por %p77, %p78
      %s81 = sadd.s32 %s80, 1
      %p84 = scmp.eq.s32.totalorder %s25, 3
      %p85 = scmp.ne.s32.totalorder %s80, %s82
      %p86 = scmp.eq.s32.totalorder %s25, 0
      %p87 = por %p85, %p86
      %p88 = scmp.ne.s32.totalorder %s80, %s82
      %p89 = scmp.eq.s32.totalorder %s30, 3
      %p90 = por %p88, %p89
      %p91 = scmp.ne.s32.totalorder %s82, %s83
      %p92 = scmp.eq.s32.totalorder %s30, 0
      %p93 = por %p91, %p92
      %p94 = scmp.ne.s32.totalorder %s82, %s83
      %p95 = scmp.eq.s32.totalorder %s31, 3
      %p96 = por %p94, %p95
      %p98 = scmp.ne.s32.totalorder %s83, %s97
      %p99 = scmp.eq.s32.totalorder %s31, 0
      %p100 = por %p98, %p99
      %s102 = sadd.s32 %s101, 1
      %p105 = scmp.eq.s32.totalorder %s25, 3
      %p106 = scmp.ne.s32.totalorder %s101, %s103
      %p107 = scmp.eq.s32.totalorder %s25, 0
      %p108 = por %p106, %p107
      %p109 = scmp.ne.s32.totalorder %s101, %s103
      %p110 = scmp.eq.s32.totalorder %s30, 3
      %p111 = por %p109, %p110
      %p112 = scmp.ne.s32.totalorder %s103, %s104
      %p113 = scmp.eq.s32.totalorder %s30, 0
      %p114 = por %p112, %p113
      %p115 = scmp.ne.s32.totalorder %s103, %s104
      %p116 = scmp.eq.s32.totalorder %s31, 3
      %p117 = por %p115, %p116
      %p119 = scmp.ne.s32.totalorder %s104, %s118
      %p120 = scmp.eq.s32.totalorder %s31, 0
      %p121 = por %p119, %p120
      %s123 = sadd.s32 %s122, 1
      %p126 = scmp.eq.s32.totalorder %s25, 3
      %p127 = scmp.ne.s32.totalorder %s122, %s124
      %p128 = scmp.eq.s32.totalorder %s25, 0
      %p129 = por %p127, %p128
      %p130 = scmp.ne.s32.totalorder %s122, %s124
      %p131 = scmp.eq.s32.totalorder %s30, 3
      %p132 = por %p130, %p131
      %p133 = scmp.ne.s32.totalorder %s124, %s125
      %p134 = scmp.eq.s32.totalorder %s30, 0
      %p135 = por %p133, %p134
      %p136 = scmp.ne.s32.totalorder %s124, %s125
      %p137 = scmp.eq.s32.totalorder %s31, 3
      %p138 = por %p136, %p137
      %p140 = scmp.ne.s32.totalorder %s125, %s139
      %p141 = scmp.eq.s32.totalorder %s31, 0
      %p142 = por %p140, %p141
      %s144 = sadd.s32 %s143, 1
      %p147 = scmp.eq.s32.totalorder %s25, 3
      %p148 = scmp.ne.s32.totalorder %s143, %s145
      %p149 = scmp.eq.s32.totalorder %s25, 0
      %p150 = por %p148, %p149
      %p151 = scmp.ne.s32.totalorder %s143, %s145
      %p152 = scmp.eq.s32.totalorder %s30, 3
      %p153 = por %p151, %p152
      %p154 = scmp.ne.s32.totalorder %s145, %s146
      %p155 = scmp.eq.s32.totalorder %s30, 0
      %p156 = por %p154, %p155
      %p157 = scmp.ne.s32.totalorder %s145, %s146
      %p158 = scmp.eq.s32.totalorder %s31, 3
      %p159 = por %p157, %p158
      %p161 = scmp.ne.s32.totalorder %s146, %s160
      %p162 = scmp.eq.s32.totalorder %s31, 0
      %p163 = por %p161, %p162
      %s165 = sadd.s32 %s164, 1
      %p168 = scmp.eq.s32.totalorder %s25, 3
      %p169 = scmp.ne.s32.totalorder %s164, %s166
      %p170 = scmp.eq.s32.totalorder %s25, 0
      %p171 = por %p169, %p170
      %p172 = scmp.ne.s32.totalorder %s164, %s166
      %p173 = scmp.eq.s32.totalorder %s30, 3
      %p174 = por %p172, %p173
      %p175 = scmp.ne.s32.totalorder %s166, %s167
      %p176 = scmp.eq.s32.totalorder %s30, 0
      %p177 = por %p175, %p176
      %p178 = scmp.ne.s32.totalorder %s166, %s167
      %p179 = scmp.eq.s32.totalorder %s31, 3
      %p180 = por %p178, %p179
      %p182 = scmp.ne.s32.totalorder %s167, %s181
      %p183 = scmp.eq.s32.totalorder %s31, 0
      %p184 = por %p182, %p183
      %s186 = sadd.s32 %s185, 1
      %p189 = scmp.eq.s32.totalorder %s25, 3
      %p190 = scmp.ne.s32.totalorder %s185, %s187
      %p191 = scmp.eq.s32.totalorder %s25, 0
      %p192 = por %p190, %p191
      %p193 = scmp.ne.s32.totalorder %s185, %s187
      %p194 = scmp.eq.s32.totalorder %s30, 3
      %p195 = por %p193, %p194
      %p196 = scmp.ne.s32.totalorder %s187, %s188
      %p197 = scmp.eq.s32.totalorder %s30, 0
      %p198 = por %p196, %p197
      %p199 = scmp.ne.s32.totalorder %s187, %s188
      %p200 = scmp.eq.s32.totalorder %s31, 3
      %p201 = por %p199, %p200
      %p203 = scmp.ne.s32.totalorder %s188, %s202
      %p204 = scmp.eq.s32.totalorder %s31, 0
      %p205 = por %p203, %p204
      %s207 = sadd.s32 %s206, 1
      %p210 = scmp.eq.s32.totalorder %s25, 3
      %p211 = scmp.ne.s32.totalorder %s206, %s208
      %p212 = scmp.eq.s32.totalorder %s25, 0
      %p213 = por %p211, %p212
      %p214 = scmp.ne.s32.totalorder %s206, %s208
      %p215 = scmp.eq.s32.totalorder %s30, 3
      %p216 = por %p214, %p215
      %p217 = scmp.ne.s32.totalorder %s208, %s209
      %p218 = scmp.eq.s32.totalorder %s30, 0
      %p219 = por %p217, %p218
      %p220 = scmp.ne.s32.totalorder %s208, %s209
      %p221 = scmp.eq.s32.totalorder %s31, 3
      %p222 = por %p220, %p221
      %p224 = scmp.ne.s32.totalorder %s209, %s223
      %p225 = scmp.eq.s32.totalorder %s31, 0
      %p226 = por %p224, %p225
      %s228 = sadd.s32 %s227, 1
      %p231 = scmp.eq.s32.totalorder %s25, 3
      %p232 = scmp.ne.s32.totalorder %s227, %s229
      %p233 = scmp.eq.s32.totalorder %s25, 0
      %p234 = por %p232, %p233
      %p235 = scmp.ne.s32.totalorder %s227, %s229
      %p236 = scmp.eq.s32.totalorder %s30, 3
      %p237 = por %p235, %p236
      %p238 = scmp.ne.s32.totalorder %s229, %s230
      %p239 = scmp.eq.s32.totalorder %s30, 0
      %p240 = por %p238, %p239
      %p241 = scmp.ne.s32.totalorder %s229, %s230
      %p242 = scmp.eq.s32.totalorder %s31, 3
      %p243 = por %p241, %p242
      %p245 = scmp.ne.s32.totalorder %s230, %s244
      %p246 = scmp.eq.s32.totalorder %s31, 0
      %p247 = por %p245, %p246
      %s248 = ssub.s32 %s25, %s32
      %p249 = scmp.eq.s32.totalorder %s248, 0
      %s251 = sadd.s32 %s250, 1
      %s252 = scalar_select %p249, %s250, %s251
      %p255 = pneg %p249
      %p256 = scmp.eq.s32.totalorder %s25, 3
      %p257 = por %p255, %p256
      %p258 = scmp.ne.s32.totalorder %s250, %s253
      %p259 = scmp.eq.s32.totalorder %s25, 0
      %p260 = por %p258, %p259
      %p261 = scmp.ne.s32.totalorder %s250, %s253
      %p262 = scmp.eq.s32.totalorder %s30, 3
      %p263 = por %p261, %p262
      %p264 = scmp.ne.s32.totalorder %s253, %s254
      %p265 = scmp.eq.s32.totalorder %s30, 0
      %p266 = por %p264, %p265
      %p267 = scmp.ne.s32.totalorder %s253, %s254
      %p268 = scmp.eq.s32.totalorder %s31, 3
      %p269 = por %p267, %p268
      %p271 = scmp.ne.s32.totalorder %s254, %s270
      %p272 = scmp.eq.s32.totalorder %s31, 0
      %p273 = por %p271, %p272
      %p274 = scmp.le.s32.totalorder 1, %s25
      %p275 = scmp.lt.s32.totalorder %s25, 5
      %p276 = pnand %p274, %p275
      %p277 = pneg %p276
      // Predicated region
      $region9: #{tpu_custom_call.1} parent=5 // pred_check
        _
      $region10: #{tpu_custom_call.1} parent=5 // pred_check_branch
        %279 = sbr.rel (%p276) target = $region12
      $region11: #{tpu_custom_call.1} parent=5 // pred_region
        %s280 = ssub.s32 %s25, 1
        // Predicated region
        $region13: #{tpu_custom_call.1} parent=11 // pred_check
          %p281 = pneg %p72
        $region14: #{tpu_custom_call.1} parent=11 // pred_check_branch
          %283 = sbr.rel (%p281) target = $region16
        $region15: #{tpu_custom_call.1} parent=11 // pred_region
          %s285 = ssub.s32 128, 128
          %286 = vsyncadd [#allocation6], %s285
          %s288 = sshll.u32 [#allocation5], 4
          %s289 = int_to_ptr.vmem [resolvable:$true] %s288
          %291 = dma.hbm_to_vmem [thread:$0]  %s1, 128, %s289, [#allocation6]
        $region16: #{tpu_custom_call.1} parent=11 // pred_fallthru
          _
        // Predicated region
        $region17: #{tpu_custom_call.1} parent=11 // pred_check
          %p292 = pneg %p93
        $region18: #{tpu_custom_call.1} parent=11 // pred_check_branch
          %294 = sbr.rel (%p292) target = $region20
        $region19: #{tpu_custom_call.1} parent=11 // pred_region
          %s296 = ssub.s32 3072, 3072
          %297 = vsyncadd [#allocation6], %s296
          %s298 = sshll.u32 [#allocation7], 4
          %s299 = int_to_ptr.vmem [resolvable:$true] %s298
          %304 = dma.hbm_to_vmem [thread:$0]  %s2, 3072, %s299, [#allocation6], 192, 192, 12
        $region20: #{tpu_custom_call.1} parent=11 // pred_fallthru
          _
        // Predicated region
        $region21: #{tpu_custom_call.1} parent=11 // pred_check
          %p305 = pneg %p114
        $region22: #{tpu_custom_call.1} parent=11 // pred_check_branch
          %307 = sbr.rel (%p305) target = $region24
        $region23: #{tpu_custom_call.1} parent=11 // pred_region
          _
        $region24: #{tpu_custom_call.1} parent=11 // pred_fallthru
          _
        // Predicated region
        $region25: #{tpu_custom_call.1} parent=11 // pred_check
          %p308 = pneg %p135
        $region26: #{tpu_custom_call.1} parent=11 // pred_check_branch
          %310 = sbr.rel (%p308) target = $region28
        $region27: #{tpu_custom_call.1} parent=11 // pred_region
          %s312 = ssub.s32 1024, 1024
          %313 = vsyncadd [#allocation9], %s312
          %s314 = sshll.u32 [#allocation8], 4
          %s315 = int_to_ptr.vmem [resolvable:$true] %s314
          %320 = dma.hbm_to_vmem [thread:$0]  %s4, 1024, %s315, [#allocation9], 64, 64, 4
        $region28: #{tpu_custom_call.1} parent=11 // pred_fallthru
          _
        // Predicated region
        $region29: #{tpu_custom_call.1} parent=11 // pred_check
          %p321 = pneg %p156
        $region30: #{tpu_custom_call.1} parent=11 // pred_check_branch
          %323 = sbr.rel (%p321) target = $region32
        $region31: #{tpu_custom_call.1} parent=11 // pred_region
          _
        $region32: #{tpu_custom_call.1} parent=11 // pred_fallthru
          _
        // Predicated region
        $region33: #{tpu_custom_call.1} parent=11 // pred_check
          %p324 = pneg %p177
        $region34: #{tpu_custom_call.1} parent=11 // pred_check_branch
          %326 = sbr.rel (%p324) target = $region36
        $region35: #{tpu_custom_call.1} parent=11 // pred_region
          %s328 = ssub.s32 2048, 2048
          %329 = vsyncadd [#allocation9], %s328
          %s330 = sshll.u32 [#allocation10], 4
          %s331 = int_to_ptr.vmem [resolvable:$true] %s330
          %336 = dma.hbm_to_vmem [thread:$0]  %s6, 2048, %s331, [#allocation9], 128, 128, 8
        $region36: #{tpu_custom_call.1} parent=11 // pred_fallthru
          _
        // Predicated region
        $region37: #{tpu_custom_call.1} parent=11 // pred_check
          %p337 = pneg %p198
        $region38: #{tpu_custom_call.1} parent=11 // pred_check_branch
          %339 = sbr.rel (%p337) target = $region40
        $region39: #{tpu_custom_call.1} parent=11 // pred_region
          _
        $region40: #{tpu_custom_call.1} parent=11 // pred_fallthru
          _
        // Predicated region
        $region41: #{tpu_custom_call.1} parent=11 // pred_check
          %p340 = pneg %p219
        $region42: #{tpu_custom_call.1} parent=11 // pred_check_branch
          %342 = sbr.rel (%p340) target = $region44
        $region43: #{tpu_custom_call.1} parent=11 // pred_region
          %s344 = ssub.s32 2048, 2048
          %345 = vsyncadd [#allocation12], %s344
          %s346 = sshll.u32 [#allocation11], 4
          %s347 = int_to_ptr.vmem [resolvable:$true] %s346
          %352 = dma.hbm_to_vmem [thread:$0]  %s8, 2048, %s347, [#allocation12], 64, 64, 4
        $region44: #{tpu_custom_call.1} parent=11 // pred_fallthru
          _
        // Predicated region
        $region45: #{tpu_custom_call.1} parent=11 // pred_check
          %p353 = pneg %p240
        $region46: #{tpu_custom_call.1} parent=11 // pred_check_branch
          %355 = sbr.rel (%p353) target = $region48
        $region47: #{tpu_custom_call.1} parent=11 // pred_region
          _
        $region48: #{tpu_custom_call.1} parent=11 // pred_fallthru
          _
      $region12: #{tpu_custom_call.1} parent=5 // pred_fallthru
        _
      %p356 = scmp.lt.s32.totalorder %s25, 4
      // Predicated region
      $region49: #{tpu_custom_call.1} parent=5 // pred_check
        %p357 = pneg %p356
      $region50: #{tpu_custom_call.1} parent=5 // pred_check_branch
        %359 = sbr.rel (%p357) target = $region52
      $region51: #{tpu_custom_call.1} parent=5 // pred_region
        // Predicated region
        $region53: #{tpu_custom_call.1} parent=51 // pred_check
          %p360 = pneg %p45
        $region54: #{tpu_custom_call.1} parent=51 // pred_check_branch
          %362 = sbr.rel (%p360) target = $region56
        $region55: #{tpu_custom_call.1} parent=51 // pred_region
          %s363 = sand.u32 %s35, 1
          %s364 = scalar_lea.sflag [#allocation3], %s363
          %s365 = sand.u32 %s35, 1
          %s366 = smul.addr %s365, 32
          %s367 = scalar_lea.vmem [#allocation2], %s366
          %s368 = smul.u32 4, %s25
          %s370 = ssub.s32 512, 512
          %371 = vsyncadd %s364, %s370
          %s372 = smul.addr %s368, 128
          %s373 = scalar_lea.hbm %s0, %s372
          %s374 = sshll.u32 %s367, 4
          %s375 = int_to_ptr.vmem [resolvable:$true] %s374
          %380 = dma.hbm_to_vmem [thread:$0]  %s373, 512, %s375, %s364, 128, 128, 8
        $region56: #{tpu_custom_call.1} parent=51 // pred_fallthru
          _
      $region52: #{tpu_custom_call.1} parent=5 // pred_fallthru
        _
      %p381 = scmp.le.s32.totalorder 1, %s25
      %p382 = scmp.lt.s32.totalorder %s25, 5
      %p383 = pnand %p381, %p382
      %p384 = pneg %p383
      // Predicated region
      $region57: #{tpu_custom_call.1} parent=5 // pred_check
        _
      $region58: #{tpu_custom_call.1} parent=5 // pred_check_branch
        %386 = sbr.rel (%p383) target = $region60
      $region59: #{tpu_custom_call.1} parent=5 // pred_region
        %s387 = ssub.s32 %s25, 1
        %s388 = sand.u32 %s38, 1
        %s389 = scalar_lea.sflag [#allocation3], %s388
        %s390 = sand.u32 %s38, 1
        %s391 = smul.addr %s390, 32
        %s392 = scalar_lea.vmem [#allocation2], %s391
        // Predicated region
        $region61: #{tpu_custom_call.1} parent=59 // pred_check
          %p393 = pneg %p51
        $region62: #{tpu_custom_call.1} parent=59 // pred_check_branch
          %395 = sbr.rel (%p393) target = $region64
        $region63: #{tpu_custom_call.1} parent=59 // pred_region
          %396 = dma.done %s389, 512
        $region64: #{tpu_custom_call.1} parent=59 // pred_fallthru
          _
        // Predicated region
        $region65: #{tpu_custom_call.1} parent=59 // pred_check
          %p397 = pneg %p72
        $region66: #{tpu_custom_call.1} parent=59 // pred_check_branch
          %399 = sbr.rel (%p397) target = $region68
        $region67: #{tpu_custom_call.1} parent=59 // pred_region
          %400 = dma.done [#allocation6], 128
        $region68: #{tpu_custom_call.1} parent=59 // pred_fallthru
          _
        // Predicated region
        $region69: #{tpu_custom_call.1} parent=59 // pred_check
          %p401 = pneg %p93
        $region70: #{tpu_custom_call.1} parent=59 // pred_check_branch
          %403 = sbr.rel (%p401) target = $region72
        $region71: #{tpu_custom_call.1} parent=59 // pred_region
          %404 = dma.done [#allocation6], 3072
        $region72: #{tpu_custom_call.1} parent=59 // pred_fallthru
          _
        // Predicated region
        $region73: #{tpu_custom_call.1} parent=59 // pred_check
          %p405 = pneg %p135
        $region74: #{tpu_custom_call.1} parent=59 // pred_check_branch
          %407 = sbr.rel (%p405) target = $region76
        $region75: #{tpu_custom_call.1} parent=59 // pred_region
          %408 = dma.done [#allocation9], 1024
        $region76: #{tpu_custom_call.1} parent=59 // pred_fallthru
          _
        // Predicated region
        $region77: #{tpu_custom_call.1} parent=59 // pred_check
          %p409 = pneg %p177
        $region78: #{tpu_custom_call.1} parent=59 // pred_check_branch
          %411 = sbr.rel (%p409) target = $region80
        $region79: #{tpu_custom_call.1} parent=59 // pred_region
          %412 = dma.done [#allocation9], 2048
        $region80: #{tpu_custom_call.1} parent=59 // pred_fallthru
          _
        // Predicated region
        $region81: #{tpu_custom_call.1} parent=59 // pred_check
          %p413 = pneg %p219
        $region82: #{tpu_custom_call.1} parent=59 // pred_check_branch
          %415 = sbr.rel (%p413) target = $region84
        $region83: #{tpu_custom_call.1} parent=59 // pred_region
          %416 = dma.done [#allocation12], 2048
        $region84: #{tpu_custom_call.1} parent=59 // pred_fallthru
          _
        %s417 = sand.u32 %s38, 1
        %s418 = scalar_lea.sflag [#allocation3], %s417
        %s419 = sand.u32 %s38, 1
        %s420 = smul.addr %s419, 32
        %s421 = scalar_lea.vmem [#allocation2], %s420
        %p422 = pneg %p51
        %p423 = pneg %p48
        %p424 = pneg %p72
        %p425 = pneg %p69
        %p426 = pneg %p93
        %p427 = pneg %p90
        %p428 = pneg %p114
        %p429 = pneg %p111
        %p430 = pneg %p135
        %p431 = pneg %p132
        %p432 = pneg %p156
        %p433 = pneg %p153
        %p434 = pneg %p177
        %p435 = pneg %p174
        %p436 = pneg %p198
        %p437 = pneg %p195
        %p438 = pneg %p219
        %p439 = pneg %p216
        %p440 = pneg %p240
        %p441 = pneg %p237
        %p442 = pneg %p266
        %p443 = pneg %p263
        %s444 = sand.u32 %s253, 1
        %s445 = scalar_lea.sflag [#allocation4], %s444
        %s446 = sand.u32 %s253, 1
        %s447 = smul.addr %s446, 32
        %s448 = scalar_lea.vmem [#allocation13], %s447
        %s449 = smul.u32 4, %s30
        %s450 = smul.u32 4, %s30
        %v452 = vld [vmem:[%s392] sm:$0xff]
        %v453 = vld [vmem:[%s392 + $0x8] sm:$0xff]
        %v454 = vld [vmem:[%s392 + $0x10] sm:$0xff]
        %v455 = vld [vmem:[%s392 + $0x18] sm:$0xff]
        %v456 = vld [vmem:[#allocation5] sm:$0xff]
        %v457 = vadd.f32 %v452, %v456
        %v458 = vadd.f32 %v453, %v456
        %v459 = vadd.f32 %v454, %v456
        %v460 = vadd.f32 %v455, %v456
        %461 = vadd.xlane.f32.xlu0 %v457
        %v462 = vpop.xlane.xlu0 %461
        %463 = vadd.xlane.f32.xlu0 %v458
        %v464 = vpop.xlane.xlu0 %463
        %465 = vadd.xlane.f32.xlu0 %v459
        %v466 = vpop.xlane.xlu0 %465
        %467 = vadd.xlane.f32.xlu0 %v460
        %v468 = vpop.xlane.xlu0 %467
        %v469 = vrcp.pop 128.0
        %v470 = vmul.f32 %v462, %v469
        %v471 = vmul.f32 %v464, %v469
        %v472 = vmul.f32 %v466, %v469
        %v473 = vmul.f32 %v468, %v469
        %v474 = vsub.f32 %v457, %v470
        %v475 = vsub.f32 %v458, %v471
        %v476 = vsub.f32 %v459, %v472
        %v477 = vsub.f32 %v460, %v473
        %v478 = vmul.f32 %v474, %v474
        %v479 = vmul.f32 %v475, %v475
        %v480 = vmul.f32 %v476, %v476
        %v481 = vmul.f32 %v477, %v477
        %482 = vadd.xlane.f32.xlu0 %v478
        %v483 = vpop.xlane.xlu0 %482
        %484 = vadd.xlane.f32.xlu0 %v479
        %v485 = vpop.xlane.xlu0 %484
        %486 = vadd.xlane.f32.xlu0 %v480
        %v487 = vpop.xlane.xlu0 %486
        %488 = vadd.xlane.f32.xlu0 %v481
        %v489 = vpop.xlane.xlu0 %488
        %v490 = vmul.f32 %v483, %v469
        %v491 = vmul.f32 %v485, %v469
        %v492 = vmul.f32 %v487, %v469
        %v493 = vmul.f32 %v489, %v469
        %v494 = vadd.f32 %v490, 1e-05
        %v495 = vadd.f32 %v491, 1e-05
        %v496 = vadd.f32 %v492, 1e-05
        %v497 = vadd.f32 %v493, 1e-05
        %v498 = vrsqrt.pop %v494
        %v499 = vrsqrt.pop %v495
        %v500 = vrsqrt.pop %v496
        %v501 = vrsqrt.pop %v497
        %v502 = vmul.f32 %v474, %v498
        %v503 = vmul.f32 %v475, %v499
        %v504 = vmul.f32 %v476, %v500
        %v505 = vmul.f32 %v477, %v501
        %v506 = vpack.c.bf16 %v503, %v502
        %v507 = vpack.c.bf16 %v505, %v504
        %v508 = vld [vmem:[#allocation7] sm:$0xff]
        %v509 = vld [vmem:[#allocation7 + $0x8] sm:$0xf]
        %v510 = vld [vmem:[#allocation7 + $0xc] sm:$0xff]
        %v511 = vld [vmem:[#allocation7 + $0x14] sm:$0xf]
        %v512 = vld [vmem:[#allocation7 + $0x18] sm:$0xff]
        %v513 = vld [vmem:[#allocation7 + $0x20] sm:$0xf]
        %v514 = vld [vmem:[#allocation7 + $0x24] sm:$0xff]
        %v515 = vld [vmem:[#allocation7 + $0x2c] sm:$0xf]
        %v516 = vld [vmem:[#allocation7 + $0x30] sm:$0xff]
        %v517 = vld [vmem:[#allocation7 + $0x38] sm:$0xf]
        %v518 = vld [vmem:[#allocation7 + $0x3c] sm:$0xff]
        %v519 = vld [vmem:[#allocation7 + $0x44] sm:$0xf]
        %v520 = vld [vmem:[#allocation7 + $0x48] sm:$0xff]
        %v521 = vld [vmem:[#allocation7 + $0x50] sm:$0xf]
        %v522 = vld [vmem:[#allocation7 + $0x54] sm:$0xff]
        %v523 = vld [vmem:[#allocation7 + $0x5c] sm:$0xf]
        %v524 = vld [vmem:[#allocation7 + $0x60] sm:$0xff]
        %v525 = vld [vmem:[#allocation7 + $0x68] sm:$0xf]
        %v526 = vld [vmem:[#allocation7 + $0x6c] sm:$0xff]
        %v527 = vld [vmem:[#allocation7 + $0x74] sm:$0xf]
        %v528 = vld [vmem:[#allocation7 + $0x78] sm:$0xff]
        %v529 = vld [vmem:[#allocation7 + $0x80] sm:$0xf]
        %v530 = vld [vmem:[#allocation7 + $0x84] sm:$0xff]
        %v531 = vld [vmem:[#allocation7 + $0x8c] sm:$0xf]
        %v532 = vld [vmem:[#allocation7 + $0x90] sm:$0xff]
        %v533 = vld [vmem:[#allocation7 + $0x98] sm:$0xf]
        %v534 = vld [vmem:[#allocation7 + $0x9c] sm:$0xff]
        %v535 = vld [vmem:[#allocation7 + $0xa4] sm:$0xf]
        %v536 = vld [vmem:[#allocation7 + $0xa8] sm:$0xff]
        %v537 = vld [vmem:[#allocation7 + $0xb0] sm:$0xf]
        %v538 = vld [vmem:[#allocation7 + $0xb4] sm:$0xff]
        %v539 = vld [vmem:[#allocation7 + $0xbc] sm:$0xf]
        %v540 = vld [vmem:[%s3] sm:$0x7]
        %v542 = vlaneseq
        %v543 = vshrl.u32 %v542, 7
        %v544 = vsub.s32 0, %v543
        %v545 = vrot.slane %v540, %v544
        %v546 = vlaneseq
        %v547 = vshrl.u32 %v546, 7
        %v548 = vsub.s32 1, %v547
        %v549 = vrot.slane %v540, %v548
        %v550 = vlaneseq
        %v551 = vshrl.u32 %v550, 7
        %v552 = vsub.s32 2, %v551
        %v553 = vrot.slane %v540, %v552
        %v589 = vunpack.c.l.b16 %v508
        %v590 = vunpack.c.h.b16 %v508
        %v591 = vunpack.c.l.b16 %v509
        %v592 = vunpack.c.l.b16 %v510
        %v593 = vunpack.c.h.b16 %v510
        %v594 = vunpack.c.l.b16 %v511
        %v595 = vunpack.c.l.b16 %v512
        %v596 = vunpack.c.h.b16 %v512
        %v597 = vunpack.c.l.b16 %v513
        %v598 = vunpack.c.l.b16 %v514
        %v599 = vunpack.c.h.b16 %v514
        %v600 = vunpack.c.l.b16 %v515
        %v601 = vunpack.c.l.b16 %v516
        %v602 = vunpack.c.h.b16 %v516
        %v603 = vunpack.c.l.b16 %v517
        %v604 = vunpack.c.l.b16 %v518
        %v605 = vunpack.c.h.b16 %v518
        %v606 = vunpack.c.l.b16 %v519
        %v607 = vunpack.c.l.b16 %v520
        %v608 = vunpack.c.h.b16 %v520
        %v609 = vunpack.c.l.b16 %v521
        %v610 = vunpack.c.l.b16 %v522
        %v611 = vunpack.c.h.b16 %v522
        %v612 = vunpack.c.l.b16 %v523
        %v613 = vunpack.c.l.b16 %v524
        %v614 = vunpack.c.h.b16 %v524
        %v615 = vunpack.c.l.b16 %v525
        %v616 = vunpack.c.l.b16 %v526
        %v617 = vunpack.c.h.b16 %v526
        %v618 = vunpack.c.l.b16 %v527
        %v619 = vunpack.c.l.b16 %v528
        %v620 = vunpack.c.h.b16 %v528
        %v621 = vunpack.c.l.b16 %v529
        %v622 = vunpack.c.l.b16 %v530
        %v623 = vunpack.c.h.b16 %v530
        %v624 = vunpack.c.l.b16 %v531
        %v625 = vunpack.c.l.b16 %v532
        %v626 = vunpack.c.h.b16 %v532
        %v627 = vunpack.c.l.b16 %v533
        %v628 = vunpack.c.l.b16 %v534
        %v629 = vunpack.c.h.b16 %v534
        %v630 = vunpack.c.l.b16 %v535
        %v631 = vunpack.c.l.b16 %v536
        %v632 = vunpack.c.h.b16 %v536
        %v633 = vunpack.c.l.b16 %v537
        %v634 = vunpack.c.l.b16 %v538
        %v635 = vunpack.c.h.b16 %v538
        %v636 = vunpack.c.l.b16 %v539
        %v637 = vpack.c.b16 %v592, %v589
        %v638 = vpack.c.b16 %v593, %v590
        %v639 = vpack.c.b16 %v594, %v591
        %v640 = vpack.c.b16 %v598, %v595
        %v641 = vpack.c.b16 %v599, %v596
        %v642 = vpack.c.b16 %v600, %v597
        %v643 = vpack.c.b16 %v604, %v601
        %v644 = vpack.c.b16 %v605, %v602
        %v645 = vpack.c.b16 %v606, %v603
        %v646 = vpack.c.b16 %v610, %v607
        %v647 = vpack.c.b16 %v611, %v608
        %v648 = vpack.c.b16 %v612, %v609
        %v649 = vpack.c.b16 %v616, %v613
        %v650 = vpack.c.b16 %v617, %v614
        %v651 = vpack.c.b16 %v618, %v615
        %v652 = vpack.c.b16 %v622, %v619
        %v653 = vpack.c.b16 %v623, %v620
        %v654 = vpack.c.b16 %v624, %v621
        %v655 = vpack.c.b16 %v628, %v625
        %v656 = vpack.c.b16 %v629, %v626
        %v657 = vpack.c.b16 %v630, %v627
        %v658 = vpack.c.b16 %v634, %v631
        %v659 = vpack.c.b16 %v635, %v632
        %v660 = vpack.c.b16 %v636, %v633
        %685 = vmatprep.subr.bf16.mxu0 %v638
        %686 = vmatpush1.bf16.msra.mxu0 %v637
        %687 = vmatprep.subr.bf16.mxu0 %v641
        %688 = vmatpush1.bf16.msra.mxu0 %v640
        %689 = vmatprep.subr.bf16.mxu0 %v644
        %690 = vmatpush1.bf16.msra.mxu0 %v643
        %691 = vmatprep.subr.bf16.mxu0 %v647
        %692 = vmatpush1.bf16.msra.mxu0 %v646
        %693 = vmatprep.subr.bf16.mxu0 %v650
        %694 = vmatpush1.bf16.msra.mxu0 %v649
        %695 = vmatprep.subr.bf16.mxu0 %v653
        %696 = vmatpush1.bf16.msra.mxu0 %v652
        %697 = vmatprep.subr.bf16.mxu0 %v656
        %698 = vmatpush1.bf16.msra.mxu0 %v655
        %699 = vmatprep.subr.bf16.mxu0 %v659
        %700 = vmatpush1.bf16.msra.mxu0 %v658
        %701 = vmatprep.subr.bf16.mxu0 0
        %702 = vmatpush1.bf16.msra.mxu0 0
        %703 = vmatprep.subr.bf16.mxu0 0
        %704 = vmatpush1.bf16.msra.mxu0 0
        %705 = vmatprep.subr.bf16.mxu0 0
        %706 = vmatpush1.bf16.msra.mxu0 0
        %707 = vmatprep.subr.bf16.mxu0 0
        %708 = vmatpush1.bf16.msra.mxu0 0
        %709 = vmatprep.subr.bf16.mxu0 0
        %710 = vmatpush1.bf16.msra.mxu0 0
        %711 = vmatprep.subr.bf16.mxu0 0
        %712 = vmatpush1.bf16.msra.mxu0 0
        %713 = vmatprep.subr.bf16.mxu0 0
        %714 = vmatpush1.bf16.msra.mxu0 0
        %715 = vmatprep.subr.bf16.mxu0 0
        %716 = vmatpush1.bf16.msra.mxu0 0
        %717 = vmatprep.mubr.bf16.mxu0 0
        %718 = vmatmul.mubr.bf16.gmra.mrb[0].mxu0 %v506
        %v719 = vpop.f32.mrb[0].mxu0
        %v720 = vadd.f32 %v545, %v719
        %v721 = vpop.f32.mrb[0].mxu0
        %v722 = vadd.f32 %v549, %v721
        %v723 = vpop.f32.mrb[0].mxu0
        %v724 = vadd.f32 %v545, %v723
        %v725 = vpop.f32.mrb[0].mxu0
        %v726 = vadd.f32 %v549, %v725
        %727 = vmatprep.mubr.bf16.mxu0 0
        %728 = vmatmul.mubr.bf16.gmra.mrb[0].mxu0 %v507
        %v729 = vpop.f32.mrb[0].mxu0
        %v730 = vadd.f32 %v545, %v729
        %v731 = vpop.f32.mrb[0].mxu0
        %v732 = vadd.f32 %v549, %v731
        %v733 = vpop.f32.mrb[0].mxu0
        %v734 = vadd.f32 %v545, %v733
        %v735 = vpop.f32.mrb[0].mxu0
        %v736 = vadd.f32 %v549, %v735
        %737 = vdwg.mxu0
        %738 = vmatprep.subr.bf16.mxu0 0
        %739 = vmatpush1.bf16.msra.mxu0 %v639
        %740 = vmatprep.subr.bf16.mxu0 0
        %741 = vmatpush1.bf16.msra.mxu0 %v642
        %742 = vmatprep.subr.bf16.mxu0 0
        %743 = vmatpush1.bf16.msra.mxu0 %v645
        %744 = vmatprep.subr.bf16.mxu0 0
        %745 = vmatpush1.bf16.msra.mxu0 %v648
        %746 = vmatprep.subr.bf16.mxu0 0
        %747 = vmatpush1.bf16.msra.mxu0 %v651
        %748 = vmatprep.subr.bf16.mxu0 0
        %749 = vmatpush1.bf16.msra.mxu0 %v654
        %750 = vmatprep.subr.bf16.mxu0 0
        %751 = vmatpush1.bf16.msra.mxu0 %v657
        %752 = vmatprep.subr.bf16.mxu0 0
        %753 = vmatpush1.bf16.msra.mxu0 %v660
        %754 = vmatprep.subr.bf16.mxu0 0
        %755 = vmatpush1.bf16.msra.mxu0 0
        %756 = vmatprep.subr.bf16.mxu0 0
        %757 = vmatpush1.bf16.msra.mxu0 0
        %758 = vmatprep.subr.bf16.mxu0 0
        %759 = vmatpush1.bf16.msra.mxu0 0
        %760 = vmatprep.subr.bf16.mxu0 0
        %761 = vmatpush1.bf16.msra.mxu0 0
        %762 = vmatprep.subr.bf16.mxu0 0
        %763 = vmatpush1.bf16.msra.mxu0 0
        %764 = vmatprep.subr.bf16.mxu0 0
        %765 = vmatpush1.bf16.msra.mxu0 0
        %766 = vmatprep.subr.bf16.mxu0 0
        %767 = vmatpush1.bf16.msra.mxu0 0
        %768 = vmatprep.subr.bf16.mxu0 0
        %769 = vmatpush1.bf16.msra.mxu0 0
        %770 = vmatprep.mubr.bf16.mxu0 0
        %771 = vmatmul.mubr.bf16.gmra.mrb[0].mxu0 %v506
        %v772 = vpop.f32.mrb[0].mxu0
        %v773 = vadd.f32 %v553, %v772
        %v774 = vpop.f32.mrb[0].mxu0
        %v775 = vpop.f32.mrb[0].mxu0
        %v776 = vadd.f32 %v553, %v775
        %v777 = vpop.f32.mrb[0].mxu0
        %778 = vmatprep.mubr.bf16.mxu0 0
        %779 = vmatmul.mubr.bf16.gmra.mrb[0].mxu0 %v507
        %v780 = vpop.f32.mrb[0].mxu0
        %v781 = vadd.f32 %v553, %v780
        %v782 = vpop.f32.mrb[0].mxu0
        %v783 = vpop.f32.mrb[0].mxu0
        %v784 = vadd.f32 %v553, %v783
        %v785 = vpop.f32.mrb[0].mxu0
        %786 = vdwg.mxu0
        %v787 = vpack.c.bf16 %v720, %v720
        %v788 = vpack.c.bf16 %v724, %v724
        %v789 = vpack.c.bf16 %v730, %v730
        %v790 = vpack.c.bf16 %v734, %v734
        %v791 = vpack.c.bf16 %v722, %v722
        %v792 = vpack.c.bf16 %v726, %v726
        %v793 = vpack.c.bf16 %v732, %v732
        %v794 = vpack.c.bf16 %v736, %v736
        %v795 = vpack.c.bf16 %v773, %v773
        %v796 = vpack.c.bf16 %v776, %v776
        %v797 = vpack.c.bf16 %v781, %v781
        %v798 = vpack.c.bf16 %v784, %v784
        %vm799 = vcmask 261120
        %v801 = vsel %vm799, %v787, 0
        %v804 = vsel %vm799, %v791, 0
        %806 = vmatprep.subr.bf16.mxu0 0
        %807 = vmatpush1.bf16.xpose.msra.mxu0 %v804
        %808 = vmatprep.subr.bf16.mxu0 0
        %809 = vmatpush1.bf16.xpose.msra.mxu0 0
        %810 = vmatprep.subr.bf16.mxu0 0
        %811 = vmatpush1.bf16.xpose.msra.mxu0 0
        %812 = vmatprep.subr.bf16.mxu0 0
        %813 = vmatpush1.bf16.xpose.msra.mxu0 0
        %814 = vmatprep.subr.bf16.mxu0 0
        %815 = vmatpush1.bf16.xpose.msra.mxu0 0
        %816 = vmatprep.subr.bf16.mxu0 0
        %817 = vmatpush1.bf16.xpose.msra.mxu0 0
        %818 = vmatprep.subr.bf16.mxu0 0
        %819 = vmatpush1.bf16.xpose.msra.mxu0 0
        %820 = vmatprep.subr.bf16.mxu0 0
        %821 = vmatpush1.bf16.xpose.msra.mxu0 0
        %822 = vmatprep.subr.bf16.mxu0 0
        %823 = vmatpush1.bf16.xpose.msra.mxu0 0
        %824 = vmatprep.subr.bf16.mxu0 0
        %825 = vmatpush1.bf16.xpose.msra.mxu0 0
        %826 = vmatprep.subr.bf16.mxu0 0
        %827 = vmatpush1.bf16.xpose.msra.mxu0 0
        %828 = vmatprep.subr.bf16.mxu0 0
        %829 = vmatpush1.bf16.xpose.msra.mxu0 0
        %830 = vmatprep.subr.bf16.mxu0 0
        %831 = vmatpush1.bf16.xpose.msra.mxu0 0
        %832 = vmatprep.subr.bf16.mxu0 0
        %833 = vmatpush1.bf16.xpose.msra.mxu0 0
        %834 = vmatprep.subr.bf16.mxu0 0
        %835 = vmatpush1.bf16.xpose.msra.mxu0 0
        %836 = vmatprep.subr.bf16.mxu0 0
        %837 = vmatpush1.bf16.xpose.msra.mxu0 0
        %838 = vmatprep.mubr.bf16.mxu0 0
        %839 = vmatmul.mubr.bf16.gmra.mrb[0].mxu0 %v801
        %v840 = vpop.f32.mrb[0].mxu0
        %v841 = vadd.f32 0.0, %v840
        %v842 = vpop.f32.mrb[0].mxu0
        %v843 = vpop.f32.mrb[0].mxu0
        %v844 = vpop.f32.mrb[0].mxu0
        %845 = vdwg.mxu0
        %v847 = vsel %vm799, %v788, 0
        %v850 = vsel %vm799, %v792, 0
        %852 = vmatprep.subr.bf16.mxu0 0
        %853 = vmatpush1.bf16.xpose.msra.mxu0 %v850
        %854 = vmatprep.subr.bf16.mxu0 0
        %855 = vmatpush1.bf16.xpose.msra.mxu0 0
        %856 = vmatprep.subr.bf16.mxu0 0
        %857 = vmatpush1.bf16.xpose.msra.mxu0 0
        %858 = vmatprep.subr.bf16.mxu0 0
        %859 = vmatpush1.bf16.xpose.msra.mxu0 0
        %860 = vmatprep.subr.bf16.mxu0 0
        %861 = vmatpush1.bf16.xpose.msra.mxu0 0
        %862 = vmatprep.subr.bf16.mxu0 0
        %863 = vmatpush1.bf16.xpose.msra.mxu0 0
        %864 = vmatprep.subr.bf16.mxu0 0
        %865 = vmatpush1.bf16.xpose.msra.mxu0 0
        %866 = vmatprep.subr.bf16.mxu0 0
        %867 = vmatpush1.bf16.xpose.msra.mxu0 0
        %868 = vmatprep.subr.bf16.mxu0 0
        %869 = vmatpush1.bf16.xpose.msra.mxu0 0
        %870 = vmatprep.subr.bf16.mxu0 0
        %871 = vmatpush1.bf16.xpose.msra.mxu0 0
        %872 = vmatprep.subr.bf16.mxu0 0
        %873 = vmatpush1.bf16.xpose.msra.mxu0 0
        %874 = vmatprep.subr.bf16.mxu0 0
        %875 = vmatpush1.bf16.xpose.msra.mxu0 0
        %876 = vmatprep.subr.bf16.mxu0 0
        %877 = vmatpush1.bf16.xpose.msra.mxu0 0
        %878 = vmatprep.subr.bf16.mxu0 0
        %879 = vmatpush1.bf16.xpose.msra.mxu0 0
        %880 = vmatprep.subr.bf16.mxu0 0
        %881 = vmatpush1.bf16.xpose.msra.mxu0 0
        %882 = vmatprep.subr.bf16.mxu0 0
        %883 = vmatpush1.bf16.xpose.msra.mxu0 0
        %884 = vmatprep.mubr.bf16.mxu0 0
        %885 = vmatmul.mubr.bf16.gmra.mrb[0].mxu0 %v847
        %v886 = vpop.f32.mrb[0].mxu0
        %v887 = vadd.f32 0.0, %v886
        %v888 = vpop.f32.mrb[0].mxu0
        %v889 = vpop.f32.mrb[0].mxu0
        %v890 = vpop.f32.mrb[0].mxu0
        %891 = vdwg.mxu0
        %v893 = vsel %vm799, %v789, 0
        %v896 = vsel %vm799, %v793, 0
        %898 = vmatprep.subr.bf16.mxu0 0
        %899 = vmatpush1.bf16.xpose.msra.mxu0 %v896
        %900 = vmatprep.subr.bf16.mxu0 0
        %901 = vmatpush1.bf16.xpose.msra.mxu0 0
        %902 = vmatprep.subr.bf16.mxu0 0
        %903 = vmatpush1.bf16.xpose.msra.mxu0 0
        %904 = vmatprep.subr.bf16.mxu0 0
        %905 = vmatpush1.bf16.xpose.msra.mxu0 0
        %906 = vmatprep.subr.bf16.mxu0 0
        %907 = vmatpush1.bf16.xpose.msra.mxu0 0
        %908 = vmatprep.subr.bf16.mxu0 0
        %909 = vmatpush1.bf16.xpose.msra.mxu0 0
        %910 = vmatprep.subr.bf16.mxu0 0
        %911 = vmatpush1.bf16.xpose.msra.mxu0 0
        %912 = vmatprep.subr.bf16.mxu0 0
        %913 = vmatpush1.bf16.xpose.msra.mxu0 0
        %914 = vmatprep.subr.bf16.mxu0 0
        %915 = vmatpush1.bf16.xpose.msra.mxu0 0
        %916 = vmatprep.subr.bf16.mxu0 0
        %917 = vmatpush1.bf16.xpose.msra.mxu0 0
        %918 = vmatprep.subr.bf16.mxu0 0
        %919 = vmatpush1.bf16.xpose.msra.mxu0 0
        %920 = vmatprep.subr.bf16.mxu0 0
        %921 = vmatpush1.bf16.xpose.msra.mxu0 0
        %922 = vmatprep.subr.bf16.mxu0 0
        %923 = vmatpush1.bf16.xpose.msra.mxu0 0
        %924 = vmatprep.subr.bf16.mxu0 0
        %925 = vmatpush1.bf16.xpose.msra.mxu0 0
        %926 = vmatprep.subr.bf16.mxu0 0
        %927 = vmatpush1.bf16.xpose.msra.mxu0 0
        %928 = vmatprep.subr.bf16.mxu0 0
        %929 = vmatpush1.bf16.xpose.msra.mxu0 0
        %930 = vmatprep.mubr.bf16.mxu0 0
        %931 = vmatmul.mubr.bf16.gmra.mrb[0].mxu0 %v893
        %v932 = vpop.f32.mrb[0].mxu0
        %v933 = vadd.f32 0.0, %v932
        %v934 = vpop.f32.mrb[0].mxu0
        %v935 = vpop.f32.mrb[0].mxu0
        %v936 = vpop.f32.mrb[0].mxu0
        %937 = vdwg.mxu0
        %v939 = vsel %vm799, %v790, 0
        %v942 = vsel %vm799, %v794, 0
        %944 = vmatprep.subr.bf16.mxu0 0
        %945 = vmatpush1.bf16.xpose.msra.mxu0 %v942
        %946 = vmatprep.subr.bf16.mxu0 0
        %947 = vmatpush1.bf16.xpose.msra.mxu0 0
        %948 = vmatprep.subr.bf16.mxu0 0
        %949 = vmatpush1.bf16.xpose.msra.mxu0 0
        %950 = vmatprep.subr.bf16.mxu0 0
        %951 = vmatpush1.bf16.xpose.msra.mxu0 0
        %952 = vmatprep.subr.bf16.mxu0 0
        %953 = vmatpush1.bf16.xpose.msra.mxu0 0
        %954 = vmatprep.subr.bf16.mxu0 0
        %955 = vmatpush1.bf16.xpose.msra.mxu0 0
        %956 = vmatprep.subr.bf16.mxu0 0
        %957 = vmatpush1.bf16.xpose.msra.mxu0 0
        %958 = vmatprep.subr.bf16.mxu0 0
        %959 = vmatpush1.bf16.xpose.msra.mxu0 0
        %960 = vmatprep.subr.bf16.mxu0 0
        %961 = vmatpush1.bf16.xpose.msra.mxu0 0
        %962 = vmatprep.subr.bf16.mxu0 0
        %963 = vmatpush1.bf16.xpose.msra.mxu0 0
        %964 = vmatprep.subr.bf16.mxu0 0
        %965 = vmatpush1.bf16.xpose.msra.mxu0 0
        %966 = vmatprep.subr.bf16.mxu0 0
        %967 = vmatpush1.bf16.xpose.msra.mxu0 0
        %968 = vmatprep.subr.bf16.mxu0 0
        %969 = vmatpush1.bf16.xpose.msra.mxu0 0
        %970 = vmatprep.subr.bf16.mxu0 0
        %971 = vmatpush1.bf16.xpose.msra.mxu0 0
        %972 = vmatprep.subr.bf16.mxu0 0
        %973 = vmatpush1.bf16.xpose.msra.mxu0 0
        %974 = vmatprep.subr.bf16.mxu0 0
        %975 = vmatpush1.bf16.xpose.msra.mxu0 0
        %976 = vmatprep.mubr.bf16.mxu0 0
        %977 = vmatmul.mubr.bf16.gmra.mrb[0].mxu0 %v939
        %v978 = vpop.f32.mrb[0].mxu0
        %v979 = vadd.f32 0.0, %v978
        %v980 = vpop.f32.mrb[0].mxu0
        %v981 = vpop.f32.mrb[0].mxu0
        %v982 = vpop.f32.mrb[0].mxu0
        %983 = vdwg.mxu0
        %v984 = vmul.f32 %v841, 0.17677669
        %v985 = vmul.f32 %v887, 0.17677669
        %v986 = vmul.f32 %v933, 0.17677669
        %v987 = vmul.f32 %v979, 0.17677669
        %vm988 = vcmask 64512
        %v989 = vsel %vm988, %v984, -inf
        %990 = vmax.xlane.f32.xlu0 %v989
        %v991 = vpop.xlane.xlu0 %990
        %v992 = vsel %vm988, %v985, -inf
        %993 = vmax.xlane.f32.xlu0 %v992
        %v994 = vpop.xlane.xlu0 %993
        %v995 = vsel %vm988, %v986, -inf
        %996 = vmax.xlane.f32.xlu0 %v995
        %v997 = vpop.xlane.xlu0 %996
        %v998 = vsel %vm988, %v987, -inf
        %999 = vmax.xlane.f32.xlu0 %v998
        %v1000 = vpop.xlane.xlu0 %999
        %v1001 = vsub.f32 %v984, %v991
        %v1002 = vsub.f32 %v985, %v994
        %v1003 = vsub.f32 %v986, %v997
        %v1004 = vsub.f32 %v987, %v1000
        %v1005 = vmul.f32 %v1001, 1.442695
        %v1006 = vpow.pop %v1005
        %v1007 = vmul.f32 %v1002, 1.442695
        %v1008 = vpow.pop %v1007
        %v1009 = vmul.f32 %v1003, 1.442695
        %v1010 = vpow.pop %v1009
        %v1011 = vmul.f32 %v1004, 1.442695
        %v1012 = vpow.pop %v1011
        %v1013 = vsel %vm988, %v1006, 0.0
        %1014 = vadd.xlane.f32.xlu0 %v1013
        %v1015 = vpop.xlane.xlu0 %1014
        %v1016 = vsel %vm988, %v1008, 0.0
        %1017 = vadd.xlane.f32.xlu0 %v1016
        %v1018 = vpop.xlane.xlu0 %1017
        %v1019 = vsel %vm988, %v1010, 0.0
        %1020 = vadd.xlane.f32.xlu0 %v1019
        %v1021 = vpop.xlane.xlu0 %1020
        %v1022 = vsel %vm988, %v1012, 0.0
        %1023 = vadd.xlane.f32.xlu0 %v1022
        %v1024 = vpop.xlane.xlu0 %1023
        %v1025 = vrcp.pop %v1015
        %v1026 = vrcp.pop %v1018
        %v1027 = vrcp.pop %v1021
        %v1028 = vrcp.pop %v1024
        %v1029 = vmul.f32 %v1006, %v1025
        %v1030 = vmul.f32 %v1008, %v1026
        %v1031 = vmul.f32 %v1010, %v1027
        %v1032 = vmul.f32 %v1012, %v1028
        %v1033 = vpack.c.bf16 %v1029, %v1029
        %v1034 = vpack.c.bf16 %v1030, %v1030
        %v1035 = vpack.c.bf16 %v1031, %v1031
        %v1036 = vpack.c.bf16 %v1032, %v1032
        %v1038 = vsel %vm988, %v1033, 0
        %vm1040 = vcmask 1043456
        %v1042 = vsel %vm1040, %v795, 0
        %1044 = vmatprep.subr.bf16.mxu0 0
        %1045 = vmatpush1.bf16.msra.mxu0 %v1042
        %1046 = vmatprep.subr.bf16.mxu0 0
        %1047 = vmatpush1.bf16.msra.mxu0 0
        %1048 = vmatprep.subr.bf16.mxu0 0
        %1049 = vmatpush1.bf16.msra.mxu0 0
        %1050 = vmatprep.subr.bf16.mxu0 0
        %1051 = vmatpush1.bf16.msra.mxu0 0
        %1052 = vmatprep.subr.bf16.mxu0 0
        %1053 = vmatpush1.bf16.msra.mxu0 0
        %1054 = vmatprep.subr.bf16.mxu0 0
        %1055 = vmatpush1.bf16.msra.mxu0 0
        %1056 = vmatprep.subr.bf16.mxu0 0
        %1057 = vmatpush1.bf16.msra.mxu0 0
        %1058 = vmatprep.subr.bf16.mxu0 0
        %1059 = vmatpush1.bf16.msra.mxu0 0
        %1060 = vmatprep.subr.bf16.mxu0 0
        %1061 = vmatpush1.bf16.msra.mxu0 0
        %1062 = vmatprep.subr.bf16.mxu0 0
        %1063 = vmatpush1.bf16.msra.mxu0 0
        %1064 = vmatprep.subr.bf16.mxu0 0
        %1065 = vmatpush1.bf16.msra.mxu0 0
        %1066 = vmatprep.subr.bf16.mxu0 0
        %1067 = vmatpush1.bf16.msra.mxu0 0
        %1068 = vmatprep.subr.bf16.mxu0 0
        %1069 = vmatpush1.bf16.msra.mxu0 0
        %1070 = vmatprep.subr.bf16.mxu0 0
        %1071 = vmatpush1.bf16.msra.mxu0 0
        %1072 = vmatprep.subr.bf16.mxu0 0
        %1073 = vmatpush1.bf16.msra.mxu0 0
        %1074 = vmatprep.subr.bf16.mxu0 0
        %1075 = vmatpush1.bf16.msra.mxu0 0
        %1076 = vmatprep.mubr.bf16.mxu0 0
        %1077 = vmatmul.mubr.bf16.gmra.mrb[0].mxu0 %v1038
        %v1078 = vpop.f32.mrb[0].mxu0
        %v1079 = vadd.f32 0.0, %v1078
        %v1080 = vpop.f32.mrb[0].mxu0
        %v1081 = vpop.f32.mrb[0].mxu0
        %v1082 = vpop.f32.mrb[0].mxu0
        %1083 = vdwg.mxu0
        %v1085 = vsel %vm988, %v1034, 0
        %v1088 = vsel %vm1040, %v796, 0
        %1090 = vmatprep.subr.bf16.mxu0 0
        %1091 = vmatpush1.bf16.msra.mxu0 %v1088
        %1092 = vmatprep.subr.bf16.mxu0 0
        %1093 = vmatpush1.bf16.msra.mxu0 0
        %1094 = vmatprep.subr.bf16.mxu0 0
        %1095 = vmatpush1.bf16.msra.mxu0 0
        %1096 = vmatprep.subr.bf16.mxu0 0
        %1097 = vmatpush1.bf16.msra.mxu0 0
        %1098 = vmatprep.subr.bf16.mxu0 0
        %1099 = vmatpush1.bf16.msra.mxu0 0
        %1100 = vmatprep.subr.bf16.mxu0 0
        %1101 = vmatpush1.bf16.msra.mxu0 0
        %1102 = vmatprep.subr.bf16.mxu0 0
        %1103 = vmatpush1.bf16.msra.mxu0 0
        %1104 = vmatprep.subr.bf16.mxu0 0
        %1105 = vmatpush1.bf16.msra.mxu0 0
        %1106 = vmatprep.subr.bf16.mxu0 0
        %1107 = vmatpush1.bf16.msra.mxu0 0
        %1108 = vmatprep.subr.bf16.mxu0 0
        %1109 = vmatpush1.bf16.msra.mxu0 0
        %1110 = vmatprep.subr.bf16.mxu0 0
        %1111 = vmatpush1.bf16.msra.mxu0 0
        %1112 = vmatprep.subr.bf16.mxu0 0
        %1113 = vmatpush1.bf16.msra.mxu0 0
        %1114 = vmatprep.subr.bf16.mxu0 0
        %1115 = vmatpush1.bf16.msra.mxu0 0
        %1116 = vmatprep.subr.bf16.mxu0 0
        %1117 = vmatpush1.bf16.msra.mxu0 0
        %1118 = vmatprep.subr.bf16.mxu0 0
        %1119 = vmatpush1.bf16.msra.mxu0 0
        %1120 = vmatprep.subr.bf16.mxu0 0
        %1121 = vmatpush1.bf16.msra.mxu0 0
        %1122 = vmatprep.mubr.bf16.mxu0 0
        %1123 = vmatmul.mubr.bf16.gmra.mrb[0].mxu0 %v1085
        %v1124 = vpop.f32.mrb[0].mxu0
        %v1125 = vadd.f32 0.0, %v1124
        %v1126 = vpop.f32.mrb[0].mxu0
        %v1127 = vpop.f32.mrb[0].mxu0
        %v1128 = vpop.f32.mrb[0].mxu0
        %1129 = vdwg.mxu0
        %v1131 = vsel %vm988, %v1035, 0
        %v1134 = vsel %vm1040, %v797, 0
        %1136 = vmatprep.subr.bf16.mxu0 0
        %1137 = vmatpush1.bf16.msra.mxu0 %v1134
        %1138 = vmatprep.subr.bf16.mxu0 0
        %1139 = vmatpush1.bf16.msra.mxu0 0
        %1140 = vmatprep.subr.bf16.mxu0 0
        %1141 = vmatpush1.bf16.msra.mxu0 0
        %1142 = vmatprep.subr.bf16.mxu0 0
        %1143 = vmatpush1.bf16.msra.mxu0 0
        %1144 = vmatprep.subr.bf16.mxu0 0
        %1145 = vmatpush1.bf16.msra.mxu0 0
        %1146 = vmatprep.subr.bf16.mxu0 0
        %1147 = vmatpush1.bf16.msra.mxu0 0
        %1148 = vmatprep.subr.bf16.mxu0 0
        %1149 = vmatpush1.bf16.msra.mxu0 0
        %1150 = vmatprep.subr.bf16.mxu0 0
        %1151 = vmatpush1.bf16.msra.mxu0 0
        %1152 = vmatprep.subr.bf16.mxu0 0
        %1153 = vmatpush1.bf16.msra.mxu0 0
        %1154 = vmatprep.subr.bf16.mxu0 0
        %1155 = vmatpush1.bf16.msra.mxu0 0
        %1156 = vmatprep.subr.bf16.mxu0 0
        %1157 = vmatpush1.bf16.msra.mxu0 0
        %1158 = vmatprep.subr.bf16.mxu0 0
        %1159 = vmatpush1.bf16.msra.mxu0 0
        %1160 = vmatprep.subr.bf16.mxu0 0
        %1161 = vmatpush1.bf16.msra.mxu0 0
        %1162 = vmatprep.subr.bf16.mxu0 0
        %1163 = vmatpush1.bf16.msra.mxu0 0
        %1164 = vmatprep.subr.bf16.mxu0 0
        %1165 = vmatpush1.bf16.msra.mxu0 0
        %1166 = vmatprep.subr.bf16.mxu0 0
        %1167 = vmatpush1.bf16.msra.mxu0 0
        %1168 = vmatprep.mubr.bf16.mxu0 0
        %1169 = vmatmul.mubr.bf16.gmra.mrb[0].mxu0 %v1131
        %v1170 = vpop.f32.mrb[0].mxu0
        %v1171 = vadd.f32 0.0, %v1170
        %v1172 = vpop.f32.mrb[0].mxu0
        %v1173 = vpop.f32.mrb[0].mxu0
        %v1174 = vpop.f32.mrb[0].mxu0
        %1175 = vdwg.mxu0
        %v1177 = vsel %vm988, %v1036, 0
        %v1180 = vsel %vm1040, %v798, 0
        %1182 = vmatprep.subr.bf16.mxu0 0
        %1183 = vmatpush1.bf16.msra.mxu0 %v1180
        %1184 = vmatprep.subr.bf16.mxu0 0
        %1185 = vmatpush1.bf16.msra.mxu0 0
        %1186 = vmatprep.subr.bf16.mxu0 0
        %1187 = vmatpush1.bf16.msra.mxu0 0
        %1188 = vmatprep.subr.bf16.mxu0 0
        %1189 = vmatpush1.bf16.msra.mxu0 0
        %1190 = vmatprep.subr.bf16.mxu0 0
        %1191 = vmatpush1.bf16.msra.mxu0 0
        %1192 = vmatprep.subr.bf16.mxu0 0
        %1193 = vmatpush1.bf16.msra.mxu0 0
        %1194 = vmatprep.subr.bf16.mxu0 0
        %1195 = vmatpush1.bf16.msra.mxu0 0
        %1196 = vmatprep.subr.bf16.mxu0 0
        %1197 = vmatpush1.bf16.msra.mxu0 0
        %1198 = vmatprep.subr.bf16.mxu0 0
        %1199 = vmatpush1.bf16.msra.mxu0 0
        %1200 = vmatprep.subr.bf16.mxu0 0
        %1201 = vmatpush1.bf16.msra.mxu0 0
        %1202 = vmatprep.subr.bf16.mxu0 0
        %1203 = vmatpush1.bf16.msra.mxu0 0
        %1204 = vmatprep.subr.bf16.mxu0 0
        %1205 = vmatpush1.bf16.msra.mxu0 0
        %1206 = vmatprep.subr.bf16.mxu0 0
        %1207 = vmatpush1.bf16.msra.mxu0 0
        %1208 = vmatprep.subr.bf16.mxu0 0
        %1209 = vmatpush1.bf16.msra.mxu0 0
        %1210 = vmatprep.subr.bf16.mxu0 0
        %1211 = vmatpush1.bf16.msra.mxu0 0
        %1212 = vmatprep.subr.bf16.mxu0 0
        %1213 = vmatpush1.bf16.msra.mxu0 0
        %1214 = vmatprep.mubr.bf16.mxu0 0
        %1215 = vmatmul.mubr.bf16.gmra.mrb[0].mxu0 %v1177
        %v1216 = vpop.f32.mrb[0].mxu0
        %v1217 = vadd.f32 0.0, %v1216
        %v1218 = vpop.f32.mrb[0].mxu0
        %v1219 = vpop.f32.mrb[0].mxu0
        %v1220 = vpop.f32.mrb[0].mxu0
        %1221 = vdwg.mxu0
        %v1222 = vpack.c.bf16 %v1125, %v1079
        %v1223 = vpack.c.bf16 %v1217, %v1171
        %v1224 = vld [vmem:[#allocation8] sm:$0xf]
        %v1225 = vld [vmem:[#allocation8 + $0x4] sm:$0xf]
        %v1226 = vld [vmem:[#allocation8 + $0x8] sm:$0xf]
        %v1227 = vld [vmem:[#allocation8 + $0xc] sm:$0xf]
        %1229 = vrot.lane.b32.xlu0 %v787, 96
        %v1230 = vpop.permute.xlu0 %1229
        %1232 = vrot.lane.b32.xlu0 %v791, 96
        %v1233 = vpop.permute.xlu0 %1232
        %v1235 = vsel %vm799, %v1230, 0
        %v1238 = vsel %vm799, %v1233, 0
        %1240 = vmatprep.subr.bf16.mxu0 0
        %1241 = vmatpush1.bf16.xpose.msra.mxu0 %v1238
        %1242 = vmatprep.subr.bf16.mxu0 0
        %1243 = vmatpush1.bf16.xpose.msra.mxu0 0
        %1244 = vmatprep.subr.bf16.mxu0 0
        %1245 = vmatpush1.bf16.xpose.msra.mxu0 0
        %1246 = vmatprep.subr.bf16.mxu0 0
        %1247 = vmatpush1.bf16.xpose.msra.mxu0 0
        %1248 = vmatprep.subr.bf16.mxu0 0
        %1249 = vmatpush1.bf16.xpose.msra.mxu0 0
        %1250 = vmatprep.subr.bf16.mxu0 0
        %1251 = vmatpush1.bf16.xpose.msra.mxu0 0
        %1252 = vmatprep.subr.bf16.mxu0 0
        %1253 = vmatpush1.bf16.xpose.msra.mxu0 0
        %1254 = vmatprep.subr.bf16.mxu0 0
        %1255 = vmatpush1.bf16.xpose.msra.mxu0 0
        %1256 = vmatprep.subr.bf16.mxu0 0
        %1257 = vmatpush1.bf16.xpose.msra.mxu0 0
        %1258 = vmatprep.subr.bf16.mxu0 0
        %1259 = vmatpush1.bf16.xpose.msra.mxu0 0
        %1260 = vmatprep.subr.bf16.mxu0 0
        %1261 = vmatpush1.bf16.xpose.msra.mxu0 0
        %1262 = vmatprep.subr.bf16.mxu0 0
        %1263 = vmatpush1.bf16.xpose.msra.mxu0 0
        %1264 = vmatprep.subr.bf16.mxu0 0
        %1265 = vmatpush1.bf16.xpose.msra.mxu0 0
        %1266 = vmatprep.subr.bf16.mxu0 0
        %1267 = vmatpush1.bf16.xpose.msra.mxu0 0
        %1268 = vmatprep.subr.bf16.mxu0 0
        %1269 = vmatpush1.bf16.xpose.msra.mxu0 0
        %1270 = vmatprep.subr.bf16.mxu0 0
        %1271 = vmatpush1.bf16.xpose.msra.mxu0 0
        %1272 = vmatprep.mubr.bf16.mxu0 0
        %1273 = vmatmul.mubr.bf16.gmra.mrb[0].mxu0 %v1235
        %v1274 = vpop.f32.mrb[0].mxu0
        %v1275 = vadd.f32 0.0, %v1274
        %v1276 = vpop.f32.mrb[0].mxu0
        %v1277 = vpop.f32.mrb[0].mxu0
        %v1278 = vpop.f32.mrb[0].mxu0
        %1279 = vdwg.mxu0
        %1281 = vrot.lane.b32.xlu0 %v788, 96
        %v1282 = vpop.permute.xlu0 %1281
        %1284 = vrot.lane.b32.xlu0 %v792, 96
        %v1285 = vpop.permute.xlu0 %1284
        %v1287 = vsel %vm799, %v1282, 0
        %v1290 = vsel %vm799, %v1285, 0
        %1292 = vmatprep.subr.bf16.mxu0 0
        %1293 = vmatpush1.bf16.xpose.msra.mxu0 %v1290
        %1294 = vmatprep.subr.bf16.mxu0 0
        %1295 = vmatpush1.bf16.xpose.msra.mxu0 0
        %1296 = vmatprep.subr.bf16.mxu0 0
        %1297 = vmatpush1.bf16.xpose.msra.mxu0 0
        %1298 = vmatprep.subr.bf16.mxu0 0
        %1299 = vmatpush1.bf16.xpose.msra.mxu0 0
        %1300 = vmatprep.subr.bf16.mxu0 0
        %1301 = vmatpush1.bf16.xpose.msra.mxu0 0
        %1302 = vmatprep.subr.bf16.mxu0 0
        %1303 = vmatpush1.bf16.xpose.msra.mxu0 0
        %1304 = vmatprep.subr.bf16.mxu0 0
        %1305 = vmatpush1.bf16.xpose.msra.mxu0 0
        %1306 = vmatprep.subr.bf16.mxu0 0
        %1307 = vmatpush1.bf16.xpose.msra.mxu0 0
        %1308 = vmatprep.subr.bf16.mxu0 0
        %1309 = vmatpush1.bf16.xpose.msra.mxu0 0
        %1310 = vmatprep.subr.bf16.mxu0 0
        %1311 = vmatpush1.bf16.xpose.msra.mxu0 0
        %1312 = vmatprep.subr.bf16.mxu0 0
        %1313 = vmatpush1.bf16.xpose.msra.mxu0 0
        %1314 = vmatprep.subr.bf16.mxu0 0
        %1315 = vmatpush1.bf16.xpose.msra.mxu0 0
        %1316 = vmatprep.subr.bf16.mxu0 0
        %1317 = vmatpush1.bf16.xpose.msra.mxu0 0
        %1318 = vmatprep.subr.bf16.mxu0 0
        %1319 = vmatpush1.bf16.xpose.msra.mxu0 0
        %1320 = vmatprep.subr.bf16.mxu0 0
        %1321 = vmatpush1.bf16.xpose.msra.mxu0 0
        %1322 = vmatprep.subr.bf16.mxu0 0
        %1323 = vmatpush1.bf16.xpose.msra.mxu0 0
        %1324 = vmatprep.mubr.bf16.mxu0 0
        %1325 = vmatmul.mubr.bf16.gmra.mrb[0].mxu0 %v1287
        %v1326 = vpop.f32.mrb[0].mxu0
        %v1327 = vadd.f32 0.0, %v1326
        %v1328 = vpop.f32.mrb[0].mxu0
        %v1329 = vpop.f32.mrb[0].mxu0
        %v1330 = vpop.f32.mrb[0].mxu0
        %1331 = vdwg.mxu0
        %1333 = vrot.lane.b32.xlu0 %v789, 96
        %v1334 = vpop.permute.xlu0 %1333
        %1336 = vrot.lane.b32.xlu0 %v793, 96
        %v1337 = vpop.permute.xlu0 %1336
        %v1339 = vsel %vm799, %v1334, 0
        %v1342 = vsel %vm799, %v1337, 0
        %1344 = vmatprep.subr.bf16.mxu0 0
        %1345 = vmatpush1.bf16.xpose.msra.mxu0 %v1342
        %1346 = vmatprep.subr.bf16.mxu0 0
        %1347 = vmatpush1.bf16.xpose.msra.mxu0 0
        %1348 = vmatprep.subr.bf16.mxu0 0
        %1349 = vmatpush1.bf16.xpose.msra.mxu0 0
        %1350 = vmatprep.subr.bf16.mxu0 0
        %1351 = vmatpush1.bf16.xpose.msra.mxu0 0
        %1352 = vmatprep.subr.bf16.mxu0 0
        %1353 = vmatpush1.bf16.xpose.msra.mxu0 0
        %1354 = vmatprep.subr.bf16.mxu0 0
        %1355 = vmatpush1.bf16.xpose.msra.mxu0 0
        %1356 = vmatprep.subr.bf16.mxu0 0
        %1357 = vmatpush1.bf16.xpose.msra.mxu0 0
        %1358 = vmatprep.subr.bf16.mxu0 0
        %1359 = vmatpush1.bf16.xpose.msra.mxu0 0
        %1360 = vmatprep.subr.bf16.mxu0 0
        %1361 = vmatpush1.bf16.xpose.msra.mxu0 0
        %1362 = vmatprep.subr.bf16.mxu0 0
        %1363 = vmatpush1.bf16.xpose.msra.mxu0 0
        %1364 = vmatprep.subr.bf16.mxu0 0
        %1365 = vmatpush1.bf16.xpose.msra.mxu0 0
        %1366 = vmatprep.subr.bf16.mxu0 0
        %1367 = vmatpush1.bf16.xpose.msra.mxu0 0
        %1368 = vmatprep.subr.bf16.mxu0 0
        %1369 = vmatpush1.bf16.xpose.msra.mxu0 0
        %1370 = vmatprep.subr.bf16.mxu0 0
        %1371 = vmatpush1.bf16.xpose.msra.mxu0 0
        %1372 = vmatprep.subr.bf16.mxu0 0
        %1373 = vmatpush1.bf16.xpose.msra.mxu0 0
        %1374 = vmatprep.subr.bf16.mxu0 0
        %1375 = vmatpush1.bf16.xpose.msra.mxu0 0
        %1376 = vmatprep.mubr.bf16.mxu0 0
        %1377 = vmatmul.mubr.bf16.gmra.mrb[0].mxu0 %v1339
        %v1378 = vpop.f32.mrb[0].mxu0
        %v1379 = vadd.f32 0.0, %v1378
        %v1380 = vpop.f32.mrb[0].mxu0
        %v1381 = vpop.f32.mrb[0].mxu0
        %v1382 = vpop.f32.mrb[0].mxu0
        %1383 = vdwg.mxu0
        %1385 = vrot.lane.b32.xlu0 %v790, 96
        %v1386 = vpop.permute.xlu0 %1385
        %1388 = vrot.lane.b32.xlu0 %v794, 96
        %v1389 = vpop.permute.xlu0 %1388
        %v1391 = vsel %vm799, %v1386, 0
        %v1394 = vsel %vm799, %v1389, 0
        %1396 = vmatprep.subr.bf16.mxu0 0
        %1397 = vmatpush1.bf16.xpose.msra.mxu0 %v1394
        %1398 = vmatprep.subr.bf16.mxu0 0
        %1399 = vmatpush1.bf16.xpose.msra.mxu0 0
        %1400 = vmatprep.subr.bf16.mxu0 0
        %1401 = vmatpush1.bf16.xpose.msra.mxu0 0
        %1402 = vmatprep.subr.bf16.mxu0 0
        %1403 = vmatpush1.bf16.xpose.msra.mxu0 0
        %1404 = vmatprep.subr.bf16.mxu0 0
        %1405 = vmatpush1.bf16.xpose.msra.mxu0 0
        %1406 = vmatprep.subr.bf16.mxu0 0
        %1407 = vmatpush1.bf16.xpose.msra.mxu0 0
        %1408 = vmatprep.subr.bf16.mxu0 0
        %1409 = vmatpush1.bf16.xpose.msra.mxu0 0
        %1410 = vmatprep.subr.bf16.mxu0 0
        %1411 = vmatpush1.bf16.xpose.msra.mxu0 0
        %1412 = vmatprep.subr.bf16.mxu0 0
        %1413 = vmatpush1.bf16.xpose.msra.mxu0 0
        %1414 = vmatprep.subr.bf16.mxu0 0
        %1415 = vmatpush1.bf16.xpose.msra.mxu0 0
        %1416 = vmatprep.subr.bf16.mxu0 0
        %1417 = vmatpush1.bf16.xpose.msra.mxu0 0
        %1418 = vmatprep.subr.bf16.mxu0 0
        %1419 = vmatpush1.bf16.xpose.msra.mxu0 0
        %1420 = vmatprep.subr.bf16.mxu0 0
        %1421 = vmatpush1.bf16.xpose.msra.mxu0 0
        %1422 = vmatprep.subr.bf16.mxu0 0
        %1423 = vmatpush1.bf16.xpose.msra.mxu0 0
        %1424 = vmatprep.subr.bf16.mxu0 0
        %1425 = vmatpush1.bf16.xpose.msra.mxu0 0
        %1426 = vmatprep.subr.bf16.mxu0 0
        %1427 = vmatpush1.bf16.xpose.msra.mxu0 0
        %1428 = vmatprep.mubr.bf16.mxu0 0
        %1429 = vmatmul.mubr.bf16.gmra.mrb[0].mxu0 %v1391
        %v1430 = vpop.f32.mrb[0].mxu0
        %v1431 = vadd.f32 0.0, %v1430
        %v1432 = vpop.f32.mrb[0].mxu0
        %v1433 = vpop.f32.mrb[0].mxu0
        %v1434 = vpop.f32.mrb[0].mxu0
        %1435 = vdwg.mxu0
        %v1436 = vmul.f32 %v1275, 0.17677669
        %v1437 = vmul.f32 %v1327, 0.17677669
        %v1438 = vmul.f32 %v1379, 0.17677669
        %v1439 = vmul.f32 %v1431, 0.17677669
        %v1440 = vsel %vm988, %v1436, -inf
        %1441 = vmax.xlane.f32.xlu0 %v1440
        %v1442 = vpop.xlane.xlu0 %1441
        %v1443 = vsel %vm988, %v1437, -inf
        %1444 = vmax.xlane.f32.xlu0 %v1443
        %v1445 = vpop.xlane.xlu0 %1444
        %v1446 = vsel %vm988, %v1438, -inf
        %1447 = vmax.xlane.f32.xlu0 %v1446
        %v1448 = vpop.xlane.xlu0 %1447
        %v1449 = vsel %vm988, %v1439, -inf
        %1450 = vmax.xlane.f32.xlu0 %v1449
        %v1451 = vpop.xlane.xlu0 %1450
        %v1452 = vsub.f32 %v1436, %v1442
        %v1453 = vsub.f32 %v1437, %v1445
        %v1454 = vsub.f32 %v1438, %v1448
        %v1455 = vsub.f32 %v1439, %v1451
        %v1456 = vmul.f32 %v1452, 1.442695
        %v1457 = vpow.pop %v1456
        %v1458 = vmul.f32 %v1453, 1.442695
        %v1459 = vpow.pop %v1458
        %v1460 = vmul.f32 %v1454, 1.442695
        %v1461 = vpow.pop %v1460
        %v1462 = vmul.f32 %v1455, 1.442695
        %v1463 = vpow.pop %v1462
        %v1464 = vsel %vm988, %v1457, 0.0
        %1465 = vadd.xlane.f32.xlu0 %v1464
        %v1466 = vpop.xlane.xlu0 %1465
        %v1467 = vsel %vm988, %v1459, 0.0
        %1468 = vadd.xlane.f32.xlu0 %v1467
        %v1469 = vpop.xlane.xlu0 %1468
        %v1470 = vsel %vm988, %v1461, 0.0
        %1471 = vadd.xlane.f32.xlu0 %v1470
        %v1472 = vpop.xlane.xlu0 %1471
        %v1473 = vsel %vm988, %v1463, 0.0
        %1474 = vadd.xlane.f32.xlu0 %v1473
        %v1475 = vpop.xlane.xlu0 %1474
        %v1476 = vrcp.pop %v1466
        %v1477 = vrcp.pop %v1469
        %v1478 = vrcp.pop %v1472
        %v1479 = vrcp.pop %v1475
        %v1480 = vmul.f32 %v1457, %v1476
        %v1481 = vmul.f32 %v1459, %v1477
        %v1482 = vmul.f32 %v1461, %v1478
        %v1483 = vmul.f32 %v1463, %v1479
        %v1484 = vpack.c.bf16 %v1480, %v1480
        %v1485 = vpack.c.bf16 %v1481, %v1481
        %v1486 = vpack.c.bf16 %v1482, %v1482
        %v1487 = vpack.c.bf16 %v1483, %v1483
        %1489 = vrot.lane.b32.xlu0 %v795, 96
        %v1490 = vpop.permute.xlu0 %1489
        %v1492 = vsel %vm988, %v1484, 0
        %v1495 = vsel %vm1040, %v1490, 0
        %1497 = vmatprep.subr.bf16.mxu0 0
        %1498 = vmatpush1.bf16.msra.mxu0 %v1495
        %1499 = vmatprep.subr.bf16.mxu0 0
        %1500 = vmatpush1.bf16.msra.mxu0 0
        %1501 = vmatprep.subr.bf16.mxu0 0
        %1502 = vmatpush1.bf16.msra.mxu0 0
        %1503 = vmatprep.subr.bf16.mxu0 0
        %1504 = vmatpush1.bf16.msra.mxu0 0
        %1505 = vmatprep.subr.bf16.mxu0 0
        %1506 = vmatpush1.bf16.msra.mxu0 0
        %1507 = vmatprep.subr.bf16.mxu0 0
        %1508 = vmatpush1.bf16.msra.mxu0 0
        %1509 = vmatprep.subr.bf16.mxu0 0
        %1510 = vmatpush1.bf16.msra.mxu0 0
        %1511 = vmatprep.subr.bf16.mxu0 0
        %1512 = vmatpush1.bf16.msra.mxu0 0
        %1513 = vmatprep.subr.bf16.mxu0 0
        %1514 = vmatpush1.bf16.msra.mxu0 0
        %1515 = vmatprep.subr.bf16.mxu0 0
        %1516 = vmatpush1.bf16.msra.mxu0 0
        %1517 = vmatprep.subr.bf16.mxu0 0
        %1518 = vmatpush1.bf16.msra.mxu0 0
        %1519 = vmatprep.subr.bf16.mxu0 0
        %1520 = vmatpush1.bf16.msra.mxu0 0
        %1521 = vmatprep.subr.bf16.mxu0 0
        %1522 = vmatpush1.bf16.msra.mxu0 0
        %1523 = vmatprep.subr.bf16.mxu0 0
        %1524 = vmatpush1.bf16.msra.mxu0 0
        %1525 = vmatprep.subr.bf16.mxu0 0
        %1526 = vmatpush1.bf16.msra.mxu0 0
        %1527 = vmatprep.subr.bf16.mxu0 0
        %1528 = vmatpush1.bf16.msra.mxu0 0
        %1529 = vmatprep.mubr.bf16.mxu0 0
        %1530 = vmatmul.mubr.bf16.gmra.mrb[0].mxu0 %v1492
        %v1531 = vpop.f32.mrb[0].mxu0
        %v1532 = vadd.f32 0.0, %v1531
        %v1533 = vpop.f32.mrb[0].mxu0
        %v1534 = vpop.f32.mrb[0].mxu0
        %v1535 = vpop.f32.mrb[0].mxu0
        %1536 = vdwg.mxu0
        %1538 = vrot.lane.b32.xlu0 %v796, 96
        %v1539 = vpop.permute.xlu0 %1538
        %v1541 = vsel %vm988, %v1485, 0
        %v1544 = vsel %vm1040, %v1539, 0
        %1546 = vmatprep.subr.bf16.mxu0 0
        %1547 = vmatpush1.bf16.msra.mxu0 %v1544
        %1548 = vmatprep.subr.bf16.mxu0 0
        %1549 = vmatpush1.bf16.msra.mxu0 0
        %1550 = vmatprep.subr.bf16.mxu0 0
        %1551 = vmatpush1.bf16.msra.mxu0 0
        %1552 = vmatprep.subr.bf16.mxu0 0
        %1553 = vmatpush1.bf16.msra.mxu0 0
        %1554 = vmatprep.subr.bf16.mxu0 0
        %1555 = vmatpush1.bf16.msra.mxu0 0
        %1556 = vmatprep.subr.bf16.mxu0 0
        %1557 = vmatpush1.bf16.msra.mxu0 0
        %1558 = vmatprep.subr.bf16.mxu0 0
        %1559 = vmatpush1.bf16.msra.mxu0 0
        %1560 = vmatprep.subr.bf16.mxu0 0
        %1561 = vmatpush1.bf16.msra.mxu0 0
        %1562 = vmatprep.subr.bf16.mxu0 0
        %1563 = vmatpush1.bf16.msra.mxu0 0
        %1564 = vmatprep.subr.bf16.mxu0 0
        %1565 = vmatpush1.bf16.msra.mxu0 0
        %1566 = vmatprep.subr.bf16.mxu0 0
        %1567 = vmatpush1.bf16.msra.mxu0 0
        %1568 = vmatprep.subr.bf16.mxu0 0
        %1569 = vmatpush1.bf16.msra.mxu0 0
        %1570 = vmatprep.subr.bf16.mxu0 0
        %1571 = vmatpush1.bf16.msra.mxu0 0
        %1572 = vmatprep.subr.bf16.mxu0 0
        %1573 = vmatpush1.bf16.msra.mxu0 0
        %1574 = vmatprep.subr.bf16.mxu0 0
        %1575 = vmatpush1.bf16.msra.mxu0 0
        %1576 = vmatprep.subr.bf16.mxu0 0
        %1577 = vmatpush1.bf16.msra.mxu0 0
        %1578 = vmatprep.mubr.bf16.mxu0 0
        %1579 = vmatmul.mubr.bf16.gmra.mrb[0].mxu0 %v1541
        %v1580 = vpop.f32.mrb[0].mxu0
        %v1581 = vadd.f32 0.0, %v1580
        %v1582 = vpop.f32.mrb[0].mxu0
        %v1583 = vpop.f32.mrb[0].mxu0
        %v1584 = vpop.f32.mrb[0].mxu0
        %1585 = vdwg.mxu0
        %1587 = vrot.lane.b32.xlu0 %v797, 96
        %v1588 = vpop.permute.xlu0 %1587
        %v1590 = vsel %vm988, %v1486, 0
        %v1593 = vsel %vm1040, %v1588, 0
        %1595 = vmatprep.subr.bf16.mxu0 0
        %1596 = vmatpush1.bf16.msra.mxu0 %v1593
        %1597 = vmatprep.subr.bf16.mxu0 0
        %1598 = vmatpush1.bf16.msra.mxu0 0
        %1599 = vmatprep.subr.bf16.mxu0 0
        %1600 = vmatpush1.bf16.msra.mxu0 0
        %1601 = vmatprep.subr.bf16.mxu0 0
        %1602 = vmatpush1.bf16.msra.mxu0 0
        %1603 = vmatprep.subr.bf16.mxu0 0
        %1604 = vmatpush1.bf16.msra.mxu0 0
        %1605 = vmatprep.subr.bf16.mxu0 0
        %1606 = vmatpush1.bf16.msra.mxu0 0
        %1607 = vmatprep.subr.bf16.mxu0 0
        %1608 = vmatpush1.bf16.msra.mxu0 0
        %1609 = vmatprep.subr.bf16.mxu0 0
        %1610 = vmatpush1.bf16.msra.mxu0 0
        %1611 = vmatprep.subr.bf16.mxu0 0
        %1612 = vmatpush1.bf16.msra.mxu0 0
        %1613 = vmatprep.subr.bf16.mxu0 0
        %1614 = vmatpush1.bf16.msra.mxu0 0
        %1615 = vmatprep.subr.bf16.mxu0 0
        %1616 = vmatpush1.bf16.msra.mxu0 0
        %1617 = vmatprep.subr.bf16.mxu0 0
        %1618 = vmatpush1.bf16.msra.mxu0 0
        %1619 = vmatprep.subr.bf16.mxu0 0
        %1620 = vmatpush1.bf16.msra.mxu0 0
        %1621 = vmatprep.subr.bf16.mxu0 0
        %1622 = vmatpush1.bf16.msra.mxu0 0
        %1623 = vmatprep.subr.bf16.mxu0 0
        %1624 = vmatpush1.bf16.msra.mxu0 0
        %1625 = vmatprep.subr.bf16.mxu0 0
        %1626 = vmatpush1.bf16.msra.mxu0 0
        %1627 = vmatprep.mubr.bf16.mxu0 0
        %1628 = vmatmul.mubr.bf16.gmra.mrb[0].mxu0 %v1590
        %v1629 = vpop.f32.mrb[0].mxu0
        %v1630 = vadd.f32 0.0, %v1629
        %v1631 = vpop.f32.mrb[0].mxu0
        %v1632 = vpop.f32.mrb[0].mxu0
        %v1633 = vpop.f32.mrb[0].mxu0
        %1634 = vdwg.mxu0
        %1636 = vrot.lane.b32.xlu0 %v798, 96
        %v1637 = vpop.permute.xlu0 %1636
        %v1639 = vsel %vm988, %v1487, 0
        %v1642 = vsel %vm1040, %v1637, 0
        %1644 = vmatprep.subr.bf16.mxu0 0
        %1645 = vmatpush1.bf16.msra.mxu0 %v1642
        %1646 = vmatprep.subr.bf16.mxu0 0
        %1647 = vmatpush1.bf16.msra.mxu0 0
        %1648 = vmatprep.subr.bf16.mxu0 0
        %1649 = vmatpush1.bf16.msra.mxu0 0
        %1650 = vmatprep.subr.bf16.mxu0 0
        %1651 = vmatpush1.bf16.msra.mxu0 0
        %1652 = vmatprep.subr.bf16.mxu0 0
        %1653 = vmatpush1.bf16.msra.mxu0 0
        %1654 = vmatprep.subr.bf16.mxu0 0
        %1655 = vmatpush1.bf16.msra.mxu0 0
        %1656 = vmatprep.subr.bf16.mxu0 0
        %1657 = vmatpush1.bf16.msra.mxu0 0
        %1658 = vmatprep.subr.bf16.mxu0 0
        %1659 = vmatpush1.bf16.msra.mxu0 0
        %1660 = vmatprep.subr.bf16.mxu0 0
        %1661 = vmatpush1.bf16.msra.mxu0 0
        %1662 = vmatprep.subr.bf16.mxu0 0
        %1663 = vmatpush1.bf16.msra.mxu0 0
        %1664 = vmatprep.subr.bf16.mxu0 0
        %1665 = vmatpush1.bf16.msra.mxu0 0
        %1666 = vmatprep.subr.bf16.mxu0 0
        %1667 = vmatpush1.bf16.msra.mxu0 0
        %1668 = vmatprep.subr.bf16.mxu0 0
        %1669 = vmatpush1.bf16.msra.mxu0 0
        %1670 = vmatprep.subr.bf16.mxu0 0
        %1671 = vmatpush1.bf16.msra.mxu0 0
        %1672 = vmatprep.subr.bf16.mxu0 0
        %1673 = vmatpush1.bf16.msra.mxu0 0
        %1674 = vmatprep.subr.bf16.mxu0 0
        %1675 = vmatpush1.bf16.msra.mxu0 0
        %1676 = vmatprep.mubr.bf16.mxu0 0
        %1677 = vmatmul.mubr.bf16.gmra.mrb[0].mxu0 %v1639
        %v1678 = vpop.f32.mrb[0].mxu0
        %v1679 = vadd.f32 0.0, %v1678
        %v1680 = vpop.f32.mrb[0].mxu0
        %v1681 = vpop.f32.mrb[0].mxu0
        %v1682 = vpop.f32.mrb[0].mxu0
        %1683 = vdwg.mxu0
        %v1684 = vpack.c.bf16 %v1581, %v1532
        %v1685 = vpack.c.bf16 %v1679, %v1630
        %v1686 = vld [vmem:[#allocation8 + $0x10] sm:$0xf]
        %v1687 = vld [vmem:[#allocation8 + $0x14] sm:$0xf]
        %v1688 = vld [vmem:[#allocation8 + $0x18] sm:$0xf]
        %v1689 = vld [vmem:[#allocation8 + $0x1c] sm:$0xf]
        %v1694 = vunpack.c.l.b16 %v1686
        %v1695 = vunpack.c.l.b16 %v1687
        %v1696 = vunpack.c.l.b16 %v1688
        %v1697 = vunpack.c.l.b16 %v1689
        %v1698 = vpack.c.b16 %v1695, %v1694
        %v1699 = vpack.c.b16 %v1697, %v1696
        %v1703 = vsel %vm799, %v1684, 0
        %v1706 = vsel %vm799, %v1685, 0
        %1708 = vmatprep.subr.bf16.mxu0 0
        %1709 = vmatpush1.bf16.msra.mxu0 %v1698
        %1710 = vmatprep.subr.bf16.mxu0 0
        %1711 = vmatpush1.bf16.msra.mxu0 %v1699
        %1712 = vmatprep.subr.bf16.mxu0 0
        %1713 = vmatpush1.bf16.msra.mxu0 0
        %1714 = vmatprep.subr.bf16.mxu0 0
        %1715 = vmatpush1.bf16.msra.mxu0 0
        %1716 = vmatprep.subr.bf16.mxu0 0
        %1717 = vmatpush1.bf16.msra.mxu0 0
        %1718 = vmatprep.subr.bf16.mxu0 0
        %1719 = vmatpush1.bf16.msra.mxu0 0
        %1720 = vmatprep.subr.bf16.mxu0 0
        %1721 = vmatpush1.bf16.msra.mxu0 0
        %1722 = vmatprep.subr.bf16.mxu0 0
        %1723 = vmatpush1.bf16.msra.mxu0 0
        %1724 = vmatprep.subr.bf16.mxu0 0
        %1725 = vmatpush1.bf16.msra.mxu0 0
        %1726 = vmatprep.subr.bf16.mxu0 0
        %1727 = vmatpush1.bf16.msra.mxu0 0
        %1728 = vmatprep.subr.bf16.mxu0 0
        %1729 = vmatpush1.bf16.msra.mxu0 0
        %1730 = vmatprep.subr.bf16.mxu0 0
        %1731 = vmatpush1.bf16.msra.mxu0 0
        %1732 = vmatprep.subr.bf16.mxu0 0
        %1733 = vmatpush1.bf16.msra.mxu0 0
        %1734 = vmatprep.subr.bf16.mxu0 0
        %1735 = vmatpush1.bf16.msra.mxu0 0
        %1736 = vmatprep.subr.bf16.mxu0 0
        %1737 = vmatpush1.bf16.msra.mxu0 0
        %1738 = vmatprep.subr.bf16.mxu0 0
        %1739 = vmatpush1.bf16.msra.mxu0 0
        %1740 = vmatprep.mubr.bf16.mxu0 0
        %1741 = vmatmul.mubr.bf16.gmra.mrb[0].mxu0 %v1703
        %v1742 = vpop.f32.mrb[0].mxu0
        %v1743 = vadd.f32 0.0, %v1742
        %v1744 = vpop.f32.mrb[0].mxu0
        %v1745 = vpop.f32.mrb[0].mxu0
        %v1746 = vadd.f32 0.0, %v1745
        %v1747 = vpop.f32.mrb[0].mxu0
        %1748 = vmatprep.mubr.bf16.mxu0 0
        %1749 = vmatmul.mubr.bf16.gmra.mrb[0].mxu0 %v1706
        %v1750 = vpop.f32.mrb[0].mxu0
        %v1751 = vadd.f32 0.0, %v1750
        %v1752 = vpop.f32.mrb[0].mxu0
        %v1753 = vpop.f32.mrb[0].mxu0
        %v1754 = vadd.f32 0.0, %v1753
        %v1755 = vpop.f32.mrb[0].mxu0
        %1756 = vdwg.mxu0
        %v1761 = vunpack.c.l.b16 %v1224
        %v1762 = vunpack.c.l.b16 %v1225
        %v1763 = vunpack.c.l.b16 %v1226
        %v1764 = vunpack.c.l.b16 %v1227
        %v1765 = vpack.c.b16 %v1762, %v1761
        %v1766 = vpack.c.b16 %v1764, %v1763
        %v1770 = vsel %vm799, %v1222, 0
        %v1773 = vsel %vm799, %v1223, 0
        %1775 = vmatprep.subr.bf16.mxu0 0
        %1776 = vmatpush1.bf16.msra.mxu0 %v1765
        %1777 = vmatprep.subr.bf16.mxu0 0
        %1778 = vmatpush1.bf16.msra.mxu0 %v1766
        %1779 = vmatprep.subr.bf16.mxu0 0
        %1780 = vmatpush1.bf16.msra.mxu0 0
        %1781 = vmatprep.subr.bf16.mxu0 0
        %1782 = vmatpush1.bf16.msra.mxu0 0
        %1783 = vmatprep.subr.bf16.mxu0 0
        %1784 = vmatpush1.bf16.msra.mxu0 0
        %1785 = vmatprep.subr.bf16.mxu0 0
        %1786 = vmatpush1.bf16.msra.mxu0 0
        %1787 = vmatprep.subr.bf16.mxu0 0
        %1788 = vmatpush1.bf16.msra.mxu0 0
        %1789 = vmatprep.subr.bf16.mxu0 0
        %1790 = vmatpush1.bf16.msra.mxu0 0
        %1791 = vmatprep.subr.bf16.mxu0 0
        %1792 = vmatpush1.bf16.msra.mxu0 0
        %1793 = vmatprep.subr.bf16.mxu0 0
        %1794 = vmatpush1.bf16.msra.mxu0 0
        %1795 = vmatprep.subr.bf16.mxu0 0
        %1796 = vmatpush1.bf16.msra.mxu0 0
        %1797 = vmatprep.subr.bf16.mxu0 0
        %1798 = vmatpush1.bf16.msra.mxu0 0
        %1799 = vmatprep.subr.bf16.mxu0 0
        %1800 = vmatpush1.bf16.msra.mxu0 0
        %1801 = vmatprep.subr.bf16.mxu0 0
        %1802 = vmatpush1.bf16.msra.mxu0 0
        %1803 = vmatprep.subr.bf16.mxu0 0
        %1804 = vmatpush1.bf16.msra.mxu0 0
        %1805 = vmatprep.subr.bf16.mxu0 0
        %1806 = vmatpush1.bf16.msra.mxu0 0
        %1807 = vmatprep.mubr.bf16.mxu0 0
        %1808 = vmatmul.mubr.bf16.gmra.mrb[0].mxu0 %v1770
        %v1809 = vpop.f32.mrb[0].mxu0
        %v1810 = vadd.f32 %v1743, %v1809
        %v1811 = vpop.f32.mrb[0].mxu0
        %v1812 = vpop.f32.mrb[0].mxu0
        %v1813 = vadd.f32 %v1746, %v1812
        %v1814 = vpop.f32.mrb[0].mxu0
        %1815 = vmatprep.mubr.bf16.mxu0 0
        %1816 = vmatmul.mubr.bf16.gmra.mrb[0].mxu0 %v1773
        %v1817 = vpop.f32.mrb[0].mxu0
        %v1818 = vadd.f32 %v1751, %v1817
        %v1819 = vpop.f32.mrb[0].mxu0
        %v1820 = vpop.f32.mrb[0].mxu0
        %v1821 = vadd.f32 %v1754, %v1820
        %v1822 = vpop.f32.mrb[0].mxu0
        %1823 = vdwg.mxu0
        %1824 = vrot.lane.b32.xlu0 %v787, 64
        %v1825 = vpop.permute.xlu0 %1824
        %1826 = vrot.lane.b32.xlu0 %v791, 64
        %v1827 = vpop.permute.xlu0 %1826
        %v1829 = vsel %vm799, %v1825, 0
        %v1832 = vsel %vm799, %v1827, 0
        %1834 = vmatprep.subr.bf16.mxu0 0
        %1835 = vmatpush1.bf16.xpose.msra.mxu0 %v1832
        %1836 = vmatprep.subr.bf16.mxu0 0
        %1837 = vmatpush1.bf16.xpose.msra.mxu0 0
        %1838 = vmatprep.subr.bf16.mxu0 0
        %1839 = vmatpush1.bf16.xpose.msra.mxu0 0
        %1840 = vmatprep.subr.bf16.mxu0 0
        %1841 = vmatpush1.bf16.xpose.msra.mxu0 0
        %1842 = vmatprep.subr.bf16.mxu0 0
        %1843 = vmatpush1.bf16.xpose.msra.mxu0 0
        %1844 = vmatprep.subr.bf16.mxu0 0
        %1845 = vmatpush1.bf16.xpose.msra.mxu0 0
        %1846 = vmatprep.subr.bf16.mxu0 0
        %1847 = vmatpush1.bf16.xpose.msra.mxu0 0
        %1848 = vmatprep.subr.bf16.mxu0 0
        %1849 = vmatpush1.bf16.xpose.msra.mxu0 0
        %1850 = vmatprep.subr.bf16.mxu0 0
        %1851 = vmatpush1.bf16.xpose.msra.mxu0 0
        %1852 = vmatprep.subr.bf16.mxu0 0
        %1853 = vmatpush1.bf16.xpose.msra.mxu0 0
        %1854 = vmatprep.subr.bf16.mxu0 0
        %1855 = vmatpush1.bf16.xpose.msra.mxu0 0
        %1856 = vmatprep.subr.bf16.mxu0 0
        %1857 = vmatpush1.bf16.xpose.msra.mxu0 0
        %1858 = vmatprep.subr.bf16.mxu0 0
        %1859 = vmatpush1.bf16.xpose.msra.mxu0 0
        %1860 = vmatprep.subr.bf16.mxu0 0
        %1861 = vmatpush1.bf16.xpose.msra.mxu0 0
        %1862 = vmatprep.subr.bf16.mxu0 0
        %1863 = vmatpush1.bf16.xpose.msra.mxu0 0
        %1864 = vmatprep.subr.bf16.mxu0 0
        %1865 = vmatpush1.bf16.xpose.msra.mxu0 0
        %1866 = vmatprep.mubr.bf16.mxu0 0
        %1867 = vmatmul.mubr.bf16.gmra.mrb[0].mxu0 %v1829
        %v1868 = vpop.f32.mrb[0].mxu0
        %v1869 = vadd.f32 0.0, %v1868
        %v1870 = vpop.f32.mrb[0].mxu0
        %v1871 = vpop.f32.mrb[0].mxu0
        %v1872 = vpop.f32.mrb[0].mxu0
        %1873 = vdwg.mxu0
        %1874 = vrot.lane.b32.xlu0 %v788, 64
        %v1875 = vpop.permute.xlu0 %1874
        %1876 = vrot.lane.b32.xlu0 %v792, 64
        %v1877 = vpop.permute.xlu0 %1876
        %v1879 = vsel %vm799, %v1875, 0
        %v1882 = vsel %vm799, %v1877, 0
        %1884 = vmatprep.subr.bf16.mxu0 0
        %1885 = vmatpush1.bf16.xpose.msra.mxu0 %v1882
        %1886 = vmatprep.subr.bf16.mxu0 0
        %1887 = vmatpush1.bf16.xpose.msra.mxu0 0
        %1888 = vmatprep.subr.bf16.mxu0 0
        %1889 = vmatpush1.bf16.xpose.msra.mxu0 0
        %1890 = vmatprep.subr.bf16.mxu0 0
        %1891 = vmatpush1.bf16.xpose.msra.mxu0 0
        %1892 = vmatprep.subr.bf16.mxu0 0
        %1893 = vmatpush1.bf16.xpose.msra.mxu0 0
        %1894 = vmatprep.subr.bf16.mxu0 0
        %1895 = vmatpush1.bf16.xpose.msra.mxu0 0
        %1896 = vmatprep.subr.bf16.mxu0 0
        %1897 = vmatpush1.bf16.xpose.msra.mxu0 0
        %1898 = vmatprep.subr.bf16.mxu0 0
        %1899 = vmatpush1.bf16.xpose.msra.mxu0 0
        %1900 = vmatprep.subr.bf16.mxu0 0
        %1901 = vmatpush1.bf16.xpose.msra.mxu0 0
        %1902 = vmatprep.subr.bf16.mxu0 0
        %1903 = vmatpush1.bf16.xpose.msra.mxu0 0
        %1904 = vmatprep.subr.bf16.mxu0 0
        %1905 = vmatpush1.bf16.xpose.msra.mxu0 0
        %1906 = vmatprep.subr.bf16.mxu0 0
        %1907 = vmatpush1.bf16.xpose.msra.mxu0 0
        %1908 = vmatprep.subr.bf16.mxu0 0
        %1909 = vmatpush1.bf16.xpose.msra.mxu0 0
        %1910 = vmatprep.subr.bf16.mxu0 0
        %1911 = vmatpush1.bf16.xpose.msra.mxu0 0
        %1912 = vmatprep.subr.bf16.mxu0 0
        %1913 = vmatpush1.bf16.xpose.msra.mxu0 0
        %1914 = vmatprep.subr.bf16.mxu0 0
        %1915 = vmatpush1.bf16.xpose.msra.mxu0 0
        %1916 = vmatprep.mubr.bf16.mxu0 0
        %1917 = vmatmul.mubr.bf16.gmra.mrb[0].mxu0 %v1879
        %v1918 = vpop.f32.mrb[0].mxu0
        %v1919 = vadd.f32 0.0, %v1918
        %v1920 = vpop.f32.mrb[0].mxu0
        %v1921 = vpop.f32.mrb[0].mxu0
        %v1922 = vpop.f32.mrb[0].mxu0
        %1923 = vdwg.mxu0
        %1924 = vrot.lane.b32.xlu0 %v789, 64
        %v1925 = vpop.permute.xlu0 %1924
        %1926 = vrot.lane.b32.xlu0 %v793, 64
        %v1927 = vpop.permute.xlu0 %1926
        %v1929 = vsel %vm799, %v1925, 0
        %v1932 = vsel %vm799, %v1927, 0
        %1934 = vmatprep.subr.bf16.mxu0 0
        %1935 = vmatpush1.bf16.xpose.msra.mxu0 %v1932
        %1936 = vmatprep.subr.bf16.mxu0 0
        %1937 = vmatpush1.bf16.xpose.msra.mxu0 0
        %1938 = vmatprep.subr.bf16.mxu0 0
        %1939 = vmatpush1.bf16.xpose.msra.mxu0 0
        %1940 = vmatprep.subr.bf16.mxu0 0
        %1941 = vmatpush1.bf16.xpose.msra.mxu0 0
        %1942 = vmatprep.subr.bf16.mxu0 0
        %1943 = vmatpush1.bf16.xpose.msra.mxu0 0
        %1944 = vmatprep.subr.bf16.mxu0 0
        %1945 = vmatpush1.bf16.xpose.msra.mxu0 0
        %1946 = vmatprep.subr.bf16.mxu0 0
        %1947 = vmatpush1.bf16.xpose.msra.mxu0 0
        %1948 = vmatprep.subr.bf16.mxu0 0
        %1949 = vmatpush1.bf16.xpose.msra.mxu0 0
        %1950 = vmatprep.subr.bf16.mxu0 0
        %1951 = vmatpush1.bf16.xpose.msra.mxu0 0
        %1952 = vmatprep.subr.bf16.mxu0 0
        %1953 = vmatpush1.bf16.xpose.msra.mxu0 0
        %1954 = vmatprep.subr.bf16.mxu0 0
        %1955 = vmatpush1.bf16.xpose.msra.mxu0 0
        %1956 = vmatprep.subr.bf16.mxu0 0
        %1957 = vmatpush1.bf16.xpose.msra.mxu0 0
        %1958 = vmatprep.subr.bf16.mxu0 0
        %1959 = vmatpush1.bf16.xpose.msra.mxu0 0
        %1960 = vmatprep.subr.bf16.mxu0 0
        %1961 = vmatpush1.bf16.xpose.msra.mxu0 0
        %1962 = vmatprep.subr.bf16.mxu0 0
        %1963 = vmatpush1.bf16.xpose.msra.mxu0 0
        %1964 = vmatprep.subr.bf16.mxu0 0
        %1965 = vmatpush1.bf16.xpose.msra.mxu0 0
        %1966 = vmatprep.mubr.bf16.mxu0 0
        %1967 = vmatmul.mubr.bf16.gmra.mrb[0].mxu0 %v1929
        %v1968 = vpop.f32.mrb[0].mxu0
        %v1969 = vadd.f32 0.0, %v1968
        %v1970 = vpop.f32.mrb[0].mxu0
        %v1971 = vpop.f32.mrb[0].mxu0
        %v1972 = vpop.f32.mrb[0].mxu0
        %1973 = vdwg.mxu0
        %1974 = vrot.lane.b32.xlu0 %v790, 64
        %v1975 = vpop.permute.xlu0 %1974
        %1976 = vrot.lane.b32.xlu0 %v794, 64
        %v1977 = vpop.permute.xlu0 %1976
        %v1979 = vsel %vm799, %v1975, 0
        %v1982 = vsel %vm799, %v1977, 0
        %1984 = vmatprep.subr.bf16.mxu0 0
        %1985 = vmatpush1.bf16.xpose.msra.mxu0 %v1982
        %1986 = vmatprep.subr.bf16.mxu0 0
        %1987 = vmatpush1.bf16.xpose.msra.mxu0 0
        %1988 = vmatprep.subr.bf16.mxu0 0
        %1989 = vmatpush1.bf16.xpose.msra.mxu0 0
        %1990 = vmatprep.subr.bf16.mxu0 0
        %1991 = vmatpush1.bf16.xpose.msra.mxu0 0
        %1992 = vmatprep.subr.bf16.mxu0 0
        %1993 = vmatpush1.bf16.xpose.msra.mxu0 0
        %1994 = vmatprep.subr.bf16.mxu0 0
        %1995 = vmatpush1.bf16.xpose.msra.mxu0 0
        %1996 = vmatprep.subr.bf16.mxu0 0
        %1997 = vmatpush1.bf16.xpose.msra.mxu0 0
        %1998 = vmatprep.subr.bf16.mxu0 0
        %1999 = vmatpush1.bf16.xpose.msra.mxu0 0
        %2000 = vmatprep.subr.bf16.mxu0 0
        %2001 = vmatpush1.bf16.xpose.msra.mxu0 0
        %2002 = vmatprep.subr.bf16.mxu0 0
        %2003 = vmatpush1.bf16.xpose.msra.mxu0 0
        %2004 = vmatprep.subr.bf16.mxu0 0
        %2005 = vmatpush1.bf16.xpose.msra.mxu0 0
        %2006 = vmatprep.subr.bf16.mxu0 0
        %2007 = vmatpush1.bf16.xpose.msra.mxu0 0
        %2008 = vmatprep.subr.bf16.mxu0 0
        %2009 = vmatpush1.bf16.xpose.msra.mxu0 0
        %2010 = vmatprep.subr.bf16.mxu0 0
        %2011 = vmatpush1.bf16.xpose.msra.mxu0 0
        %2012 = vmatprep.subr.bf16.mxu0 0
        %2013 = vmatpush1.bf16.xpose.msra.mxu0 0
        %2014 = vmatprep.subr.bf16.mxu0 0
        %2015 = vmatpush1.bf16.xpose.msra.mxu0 0
        %2016 = vmatprep.mubr.bf16.mxu0 0
        %2017 = vmatmul.mubr.bf16.gmra.mrb[0].mxu0 %v1979
        %v2018 = vpop.f32.mrb[0].mxu0
        %v2019 = vadd.f32 0.0, %v2018
        %v2020 = vpop.f32.mrb[0].mxu0
        %v2021 = vpop.f32.mrb[0].mxu0
        %v2022 = vpop.f32.mrb[0].mxu0
        %2023 = vdwg.mxu0
        %v2024 = vmul.f32 %v1869, 0.17677669
        %v2025 = vmul.f32 %v1919, 0.17677669
        %v2026 = vmul.f32 %v1969, 0.17677669
        %v2027 = vmul.f32 %v2019, 0.17677669
        %v2028 = vsel %vm988, %v2024, -inf
        %2029 = vmax.xlane.f32.xlu0 %v2028
        %v2030 = vpop.xlane.xlu0 %2029
        %v2031 = vsel %vm988, %v2025, -inf
        %2032 = vmax.xlane.f32.xlu0 %v2031
        %v2033 = vpop.xlane.xlu0 %2032
        %v2034 = vsel %vm988, %v2026, -inf
        %2035 = vmax.xlane.f32.xlu0 %v2034
        %v2036 = vpop.xlane.xlu0 %2035
        %v2037 = vsel %vm988, %v2027, -inf
        %2038 = vmax.xlane.f32.xlu0 %v2037
        %v2039 = vpop.xlane.xlu0 %2038
        %v2040 = vsub.f32 %v2024, %v2030
        %v2041 = vsub.f32 %v2025, %v2033
        %v2042 = vsub.f32 %v2026, %v2036
        %v2043 = vsub.f32 %v2027, %v2039
        %v2044 = vmul.f32 %v2040, 1.442695
        %v2045 = vpow.pop %v2044
        %v2046 = vmul.f32 %v2041, 1.442695
        %v2047 = vpow.pop %v2046
        %v2048 = vmul.f32 %v2042, 1.442695
        %v2049 = vpow.pop %v2048
        %v2050 = vmul.f32 %v2043, 1.442695
        %v2051 = vpow.pop %v2050
        %v2052 = vsel %vm988, %v2045, 0.0
        %2053 = vadd.xlane.f32.xlu0 %v2052
        %v2054 = vpop.xlane.xlu0 %2053
        %v2055 = vsel %vm988, %v2047, 0.0
        %2056 = vadd.xlane.f32.xlu0 %v2055
        %v2057 = vpop.xlane.xlu0 %2056
        %v2058 = vsel %vm988, %v2049, 0.0
        %2059 = vadd.xlane.f32.xlu0 %v2058
        %v2060 = vpop.xlane.xlu0 %2059
        %v2061 = vsel %vm988, %v2051, 0.0
        %2062 = vadd.xlane.f32.xlu0 %v2061
        %v2063 = vpop.xlane.xlu0 %2062
        %v2064 = vrcp.pop %v2054
        %v2065 = vrcp.pop %v2057
        %v2066 = vrcp.pop %v2060
        %v2067 = vrcp.pop %v2063
        %v2068 = vmul.f32 %v2045, %v2064
        %v2069 = vmul.f32 %v2047, %v2065
        %v2070 = vmul.f32 %v2049, %v2066
        %v2071 = vmul.f32 %v2051, %v2067
        %v2072 = vpack.c.bf16 %v2068, %v2068
        %v2073 = vpack.c.bf16 %v2069, %v2069
        %v2074 = vpack.c.bf16 %v2070, %v2070
        %v2075 = vpack.c.bf16 %v2071, %v2071
        %2076 = vrot.lane.b32.xlu0 %v795, 64
        %v2077 = vpop.permute.xlu0 %2076
        %v2079 = vsel %vm988, %v2072, 0
        %v2082 = vsel %vm1040, %v2077, 0
        %2084 = vmatprep.subr.bf16.mxu0 0
        %2085 = vmatpush1.bf16.msra.mxu0 %v2082
        %2086 = vmatprep.subr.bf16.mxu0 0
        %2087 = vmatpush1.bf16.msra.mxu0 0
        %2088 = vmatprep.subr.bf16.mxu0 0
        %2089 = vmatpush1.bf16.msra.mxu0 0
        %2090 = vmatprep.subr.bf16.mxu0 0
        %2091 = vmatpush1.bf16.msra.mxu0 0
        %2092 = vmatprep.subr.bf16.mxu0 0
        %2093 = vmatpush1.bf16.msra.mxu0 0
        %2094 = vmatprep.subr.bf16.mxu0 0
        %2095 = vmatpush1.bf16.msra.mxu0 0
        %2096 = vmatprep.subr.bf16.mxu0 0
        %2097 = vmatpush1.bf16.msra.mxu0 0
        %2098 = vmatprep.subr.bf16.mxu0 0
        %2099 = vmatpush1.bf16.msra.mxu0 0
        %2100 = vmatprep.subr.bf16.mxu0 0
        %2101 = vmatpush1.bf16.msra.mxu0 0
        %2102 = vmatprep.subr.bf16.mxu0 0
        %2103 = vmatpush1.bf16.msra.mxu0 0
        %2104 = vmatprep.subr.bf16.mxu0 0
        %2105 = vmatpush1.bf16.msra.mxu0 0
        %2106 = vmatprep.subr.bf16.mxu0 0
        %2107 = vmatpush1.bf16.msra.mxu0 0
        %2108 = vmatprep.subr.bf16.mxu0 0
        %2109 = vmatpush1.bf16.msra.mxu0 0
        %2110 = vmatprep.subr.bf16.mxu0 0
        %2111 = vmatpush1.bf16.msra.mxu0 0
        %2112 = vmatprep.subr.bf16.mxu0 0
        %2113 = vmatpush1.bf16.msra.mxu0 0
        %2114 = vmatprep.subr.bf16.mxu0 0
        %2115 = vmatpush1.bf16.msra.mxu0 0
        %2116 = vmatprep.mubr.bf16.mxu0 0
        %2117 = vmatmul.mubr.bf16.gmra.mrb[0].mxu0 %v2079
        %v2118 = vpop.f32.mrb[0].mxu0
        %v2119 = vadd.f32 0.0, %v2118
        %v2120 = vpop.f32.mrb[0].mxu0
        %v2121 = vpop.f32.mrb[0].mxu0
        %v2122 = vpop.f32.mrb[0].mxu0
        %2123 = vdwg.mxu0
        %2124 = vrot.lane.b32.xlu0 %v796, 64
        %v2125 = vpop.permute.xlu0 %2124
        %v2127 = vsel %vm988, %v2073, 0
        %v2130 = vsel %vm1040, %v2125, 0
        %2132 = vmatprep.subr.bf16.mxu0 0
        %2133 = vmatpush1.bf16.msra.mxu0 %v2130
        %2134 = vmatprep.subr.bf16.mxu0 0
        %2135 = vmatpush1.bf16.msra.mxu0 0
        %2136 = vmatprep.subr.bf16.mxu0 0
        %2137 = vmatpush1.bf16.msra.mxu0 0
        %2138 = vmatprep.subr.bf16.mxu0 0
        %2139 = vmatpush1.bf16.msra.mxu0 0
        %2140 = vmatprep.subr.bf16.mxu0 0
        %2141 = vmatpush1.bf16.msra.mxu0 0
        %2142 = vmatprep.subr.bf16.mxu0 0
        %2143 = vmatpush1.bf16.msra.mxu0 0
        %2144 = vmatprep.subr.bf16.mxu0 0
        %2145 = vmatpush1.bf16.msra.mxu0 0
        %2146 = vmatprep.subr.bf16.mxu0 0
        %2147 = vmatpush1.bf16.msra.mxu0 0
        %2148 = vmatprep.subr.bf16.mxu0 0
        %2149 = vmatpush1.bf16.msra.mxu0 0
        %2150 = vmatprep.subr.bf16.mxu0 0
        %2151 = vmatpush1.bf16.msra.mxu0 0
        %2152 = vmatprep.subr.bf16.mxu0 0
        %2153 = vmatpush1.bf16.msra.mxu0 0
        %2154 = vmatprep.subr.bf16.mxu0 0
        %2155 = vmatpush1.bf16.msra.mxu0 0
        %2156 = vmatprep.subr.bf16.mxu0 0
        %2157 = vmatpush1.bf16.msra.mxu0 0
        %2158 = vmatprep.subr.bf16.mxu0 0
        %2159 = vmatpush1.bf16.msra.mxu0 0
        %2160 = vmatprep.subr.bf16.mxu0 0
        %2161 = vmatpush1.bf16.msra.mxu0 0
        %2162 = vmatprep.subr.bf16.mxu0 0
        %2163 = vmatpush1.bf16.msra.mxu0 0
        %2164 = vmatprep.mubr.bf16.mxu0 0
        %2165 = vmatmul.mubr.bf16.gmra.mrb[0].mxu0 %v2127
        %v2166 = vpop.f32.mrb[0].mxu0
        %v2167 = vadd.f32 0.0, %v2166
        %v2168 = vpop.f32.mrb[0].mxu0
        %v2169 = vpop.f32.mrb[0].mxu0
        %v2170 = vpop.f32.mrb[0].mxu0
        %2171 = vdwg.mxu0
        %2172 = vrot.lane.b32.xlu0 %v797, 64
        %v2173 = vpop.permute.xlu0 %2172
        %v2175 = vsel %vm988, %v2074, 0
        %v2178 = vsel %vm1040, %v2173, 0
        %2180 = vmatprep.subr.bf16.mxu0 0
        %2181 = vmatpush1.bf16.msra.mxu0 %v2178
        %2182 = vmatprep.subr.bf16.mxu0 0
        %2183 = vmatpush1.bf16.msra.mxu0 0
        %2184 = vmatprep.subr.bf16.mxu0 0
        %2185 = vmatpush1.bf16.msra.mxu0 0
        %2186 = vmatprep.subr.bf16.mxu0 0
        %2187 = vmatpush1.bf16.msra.mxu0 0
        %2188 = vmatprep.subr.bf16.mxu0 0
        %2189 = vmatpush1.bf16.msra.mxu0 0
        %2190 = vmatprep.subr.bf16.mxu0 0
        %2191 = vmatpush1.bf16.msra.mxu0 0
        %2192 = vmatprep.subr.bf16.mxu0 0
        %2193 = vmatpush1.bf16.msra.mxu0 0
        %2194 = vmatprep.subr.bf16.mxu0 0
        %2195 = vmatpush1.bf16.msra.mxu0 0
        %2196 = vmatprep.subr.bf16.mxu0 0
        %2197 = vmatpush1.bf16.msra.mxu0 0
        %2198 = vmatprep.subr.bf16.mxu0 0
        %2199 = vmatpush1.bf16.msra.mxu0 0
        %2200 = vmatprep.subr.bf16.mxu0 0
        %2201 = vmatpush1.bf16.msra.mxu0 0
        %2202 = vmatprep.subr.bf16.mxu0 0
        %2203 = vmatpush1.bf16.msra.mxu0 0
        %2204 = vmatprep.subr.bf16.mxu0 0
        %2205 = vmatpush1.bf16.msra.mxu0 0
        %2206 = vmatprep.subr.bf16.mxu0 0
        %2207 = vmatpush1.bf16.msra.mxu0 0
        %2208 = vmatprep.subr.bf16.mxu0 0
        %2209 = vmatpush1.bf16.msra.mxu0 0
        %2210 = vmatprep.subr.bf16.mxu0 0
        %2211 = vmatpush1.bf16.msra.mxu0 0
        %2212 = vmatprep.mubr.bf16.mxu0 0
        %2213 = vmatmul.mubr.bf16.gmra.mrb[0].mxu0 %v2175
        %v2214 = vpop.f32.mrb[0].mxu0
        %v2215 = vadd.f32 0.0, %v2214
        %v2216 = vpop.f32.mrb[0].mxu0
        %v2217 = vpop.f32.mrb[0].mxu0
        %v2218 = vpop.f32.mrb[0].mxu0
        %2219 = vdwg.mxu0
        %2220 = vrot.lane.b32.xlu0 %v798, 64
        %v2221 = vpop.permute.xlu0 %2220
        %v2223 = vsel %vm988, %v2075, 0
        %v2226 = vsel %vm1040, %v2221, 0
        %2228 = vmatprep.subr.bf16.mxu0 0
        %2229 = vmatpush1.bf16.msra.mxu0 %v2226
        %2230 = vmatprep.subr.bf16.mxu0 0
        %2231 = vmatpush1.bf16.msra.mxu0 0
        %2232 = vmatprep.subr.bf16.mxu0 0
        %2233 = vmatpush1.bf16.msra.mxu0 0
        %2234 = vmatprep.subr.bf16.mxu0 0
        %2235 = vmatpush1.bf16.msra.mxu0 0
        %2236 = vmatprep.subr.bf16.mxu0 0
        %2237 = vmatpush1.bf16.msra.mxu0 0
        %2238 = vmatprep.subr.bf16.mxu0 0
        %2239 = vmatpush1.bf16.msra.mxu0 0
        %2240 = vmatprep.subr.bf16.mxu0 0
        %2241 = vmatpush1.bf16.msra.mxu0 0
        %2242 = vmatprep.subr.bf16.mxu0 0
        %2243 = vmatpush1.bf16.msra.mxu0 0
        %2244 = vmatprep.subr.bf16.mxu0 0
        %2245 = vmatpush1.bf16.msra.mxu0 0
        %2246 = vmatprep.subr.bf16.mxu0 0
        %2247 = vmatpush1.bf16.msra.mxu0 0
        %2248 = vmatprep.subr.bf16.mxu0 0
        %2249 = vmatpush1.bf16.msra.mxu0 0
        %2250 = vmatprep.subr.bf16.mxu0 0
        %2251 = vmatpush1.bf16.msra.mxu0 0
        %2252 = vmatprep.subr.bf16.mxu0 0
        %2253 = vmatpush1.bf16.msra.mxu0 0
        %2254 = vmatprep.subr.bf16.mxu0 0
        %2255 = vmatpush1.bf16.msra.mxu0 0
        %2256 = vmatprep.subr.bf16.mxu0 0
        %2257 = vmatpush1.bf16.msra.mxu0 0
        %2258 = vmatprep.subr.bf16.mxu0 0
        %2259 = vmatpush1.bf16.msra.mxu0 0
        %2260 = vmatprep.mubr.bf16.mxu0 0
        %2261 = vmatmul.mubr.bf16.gmra.mrb[0].mxu0 %v2223
        %v2262 = vpop.f32.mrb[0].mxu0
        %v2263 = vadd.f32 0.0, %v2262
        %v2264 = vpop.f32.mrb[0].mxu0
        %v2265 = vpop.f32.mrb[0].mxu0
        %v2266 = vpop.f32.mrb[0].mxu0
        %2267 = vdwg.mxu0
        %v2268 = vpack.c.bf16 %v2167, %v2119
        %v2269 = vpack.c.bf16 %v2263, %v2215
        %v2270 = vld [vmem:[#allocation8 + $0x20] sm:$0xf]
        %v2271 = vld [vmem:[#allocation8 + $0x24] sm:$0xf]
        %v2272 = vld [vmem:[#allocation8 + $0x28] sm:$0xf]
        %v2273 = vld [vmem:[#allocation8 + $0x2c] sm:$0xf]
        %v2278 = vunpack.c.l.b16 %v2270
        %v2279 = vunpack.c.l.b16 %v2271
        %v2280 = vunpack.c.l.b16 %v2272
        %v2281 = vunpack.c.l.b16 %v2273
        %v2282 = vpack.c.b16 %v2279, %v2278
        %v2283 = vpack.c.b16 %v2281, %v2280
        %v2287 = vsel %vm799, %v2268, 0
        %v2290 = vsel %vm799, %v2269, 0
        %2292 = vmatprep.subr.bf16.mxu0 0
        %2293 = vmatpush1.bf16.msra.mxu0 %v2282
        %2294 = vmatprep.subr.bf16.mxu0 0
        %2295 = vmatpush1.bf16.msra.mxu0 %v2283
        %2296 = vmatprep.subr.bf16.mxu0 0
        %2297 = vmatpush1.bf16.msra.mxu0 0
        %2298 = vmatprep.subr.bf16.mxu0 0
        %2299 = vmatpush1.bf16.msra.mxu0 0
        %2300 = vmatprep.subr.bf16.mxu0 0
        %2301 = vmatpush1.bf16.msra.mxu0 0
        %2302 = vmatprep.subr.bf16.mxu0 0
        %2303 = vmatpush1.bf16.msra.mxu0 0
        %2304 = vmatprep.subr.bf16.mxu0 0
        %2305 = vmatpush1.bf16.msra.mxu0 0
        %2306 = vmatprep.subr.bf16.mxu0 0
        %2307 = vmatpush1.bf16.msra.mxu0 0
        %2308 = vmatprep.subr.bf16.mxu0 0
        %2309 = vmatpush1.bf16.msra.mxu0 0
        %2310 = vmatprep.subr.bf16.mxu0 0
        %2311 = vmatpush1.bf16.msra.mxu0 0
        %2312 = vmatprep.subr.bf16.mxu0 0
        %2313 = vmatpush1.bf16.msra.mxu0 0
        %2314 = vmatprep.subr.bf16.mxu0 0
        %2315 = vmatpush1.bf16.msra.mxu0 0
        %2316 = vmatprep.subr.bf16.mxu0 0
        %2317 = vmatpush1.bf16.msra.mxu0 0
        %2318 = vmatprep.subr.bf16.mxu0 0
        %2319 = vmatpush1.bf16.msra.mxu0 0
        %2320 = vmatprep.subr.bf16.mxu0 0
        %2321 = vmatpush1.bf16.msra.mxu0 0
        %2322 = vmatprep.subr.bf16.mxu0 0
        %2323 = vmatpush1.bf16.msra.mxu0 0
        %2324 = vmatprep.mubr.bf16.mxu0 0
        %2325 = vmatmul.mubr.bf16.gmra.mrb[0].mxu0 %v2287
        %v2326 = vpop.f32.mrb[0].mxu0
        %v2327 = vadd.f32 0.0, %v2326
        %v2328 = vpop.f32.mrb[0].mxu0
        %v2329 = vpop.f32.mrb[0].mxu0
        %v2330 = vadd.f32 0.0, %v2329
        %v2331 = vpop.f32.mrb[0].mxu0
        %2332 = vmatprep.mubr.bf16.mxu0 0
        %2333 = vmatmul.mubr.bf16.gmra.mrb[0].mxu0 %v2290
        %v2334 = vpop.f32.mrb[0].mxu0
        %v2335 = vadd.f32 0.0, %v2334
        %v2336 = vpop.f32.mrb[0].mxu0
        %v2337 = vpop.f32.mrb[0].mxu0
        %v2338 = vadd.f32 0.0, %v2337
        %v2339 = vpop.f32.mrb[0].mxu0
        %2340 = vdwg.mxu0
        %v2341 = vadd.f32 %v1810, %v2327
        %v2342 = vadd.f32 %v1813, %v2330
        %v2343 = vadd.f32 %v1818, %v2335
        %v2344 = vadd.f32 %v1821, %v2338
        %2345 = vrot.lane.b32.xlu0 %v787, 32
        %v2346 = vpop.permute.xlu0 %2345
        %2347 = vrot.lane.b32.xlu0 %v791, 32
        %v2348 = vpop.permute.xlu0 %2347
        %v2350 = vsel %vm799, %v2346, 0
        %v2353 = vsel %vm799, %v2348, 0
        %2355 = vmatprep.subr.bf16.mxu0 0
        %2356 = vmatpush1.bf16.xpose.msra.mxu0 %v2353
        %2357 = vmatprep.subr.bf16.mxu0 0
        %2358 = vmatpush1.bf16.xpose.msra.mxu0 0
        %2359 = vmatprep.subr.bf16.mxu0 0
        %2360 = vmatpush1.bf16.xpose.msra.mxu0 0
        %2361 = vmatprep.subr.bf16.mxu0 0
        %2362 = vmatpush1.bf16.xpose.msra.mxu0 0
        %2363 = vmatprep.subr.bf16.mxu0 0
        %2364 = vmatpush1.bf16.xpose.msra.mxu0 0
        %2365 = vmatprep.subr.bf16.mxu0 0
        %2366 = vmatpush1.bf16.xpose.msra.mxu0 0
        %2367 = vmatprep.subr.bf16.mxu0 0
        %2368 = vmatpush1.bf16.xpose.msra.mxu0 0
        %2369 = vmatprep.subr.bf16.mxu0 0
        %2370 = vmatpush1.bf16.xpose.msra.mxu0 0
        %2371 = vmatprep.subr.bf16.mxu0 0
        %2372 = vmatpush1.bf16.xpose.msra.mxu0 0
        %2373 = vmatprep.subr.bf16.mxu0 0
        %2374 = vmatpush1.bf16.xpose.msra.mxu0 0
        %2375 = vmatprep.subr.bf16.mxu0 0
        %2376 = vmatpush1.bf16.xpose.msra.mxu0 0
        %2377 = vmatprep.subr.bf16.mxu0 0
        %2378 = vmatpush1.bf16.xpose.msra.mxu0 0
        %2379 = vmatprep.subr.bf16.mxu0 0
        %2380 = vmatpush1.bf16.xpose.msra.mxu0 0
        %2381 = vmatprep.subr.bf16.mxu0 0
        %2382 = vmatpush1.bf16.xpose.msra.mxu0 0
        %2383 = vmatprep.subr.bf16.mxu0 0
        %2384 = vmatpush1.bf16.xpose.msra.mxu0 0
        %2385 = vmatprep.subr.bf16.mxu0 0
        %2386 = vmatpush1.bf16.xpose.msra.mxu0 0
        %2387 = vmatprep.mubr.bf16.mxu0 0
        %2388 = vmatmul.mubr.bf16.gmra.mrb[0].mxu0 %v2350
        %v2389 = vpop.f32.mrb[0].mxu0
        %v2390 = vadd.f32 0.0, %v2389
        %v2391 = vpop.f32.mrb[0].mxu0
        %v2392 = vpop.f32.mrb[0].mxu0
        %v2393 = vpop.f32.mrb[0].mxu0
        %2394 = vdwg.mxu0
        %2395 = vrot.lane.b32.xlu0 %v788, 32
        %v2396 = vpop.permute.xlu0 %2395
        %2397 = vrot.lane.b32.xlu0 %v792, 32
        %v2398 = vpop.permute.xlu0 %2397
        %v2400 = vsel %vm799, %v2396, 0
        %v2403 = vsel %vm799, %v2398, 0
        %2405 = vmatprep.subr.bf16.mxu0 0
        %2406 = vmatpush1.bf16.xpose.msra.mxu0 %v2403
        %2407 = vmatprep.subr.bf16.mxu0 0
        %2408 = vmatpush1.bf16.xpose.msra.mxu0 0
        %2409 = vmatprep.subr.bf16.mxu0 0
        %2410 = vmatpush1.bf16.xpose.msra.mxu0 0
        %2411 = vmatprep.subr.bf16.mxu0 0
        %2412 = vmatpush1.bf16.xpose.msra.mxu0 0
        %2413 = vmatprep.subr.bf16.mxu0 0
        %2414 = vmatpush1.bf16.xpose.msra.mxu0 0
        %2415 = vmatprep.subr.bf16.mxu0 0
        %2416 = vmatpush1.bf16.xpose.msra.mxu0 0
        %2417 = vmatprep.subr.bf16.mxu0 0
        %2418 = vmatpush1.bf16.xpose.msra.mxu0 0
        %2419 = vmatprep.subr.bf16.mxu0 0
        %2420 = vmatpush1.bf16.xpose.msra.mxu0 0
        %2421 = vmatprep.subr.bf16.mxu0 0
        %2422 = vmatpush1.bf16.xpose.msra.mxu0 0
        %2423 = vmatprep.subr.bf16.mxu0 0
        %2424 = vmatpush1.bf16.xpose.msra.mxu0 0
        %2425 = vmatprep.subr.bf16.mxu0 0
        %2426 = vmatpush1.bf16.xpose.msra.mxu0 0
        %2427 = vmatprep.subr.bf16.mxu0 0
        %2428 = vmatpush1.bf16.xpose.msra.mxu0 0
        %2429 = vmatprep.subr.bf16.mxu0 0
        %2430 = vmatpush1.bf16.xpose.msra.mxu0 0
        %2431 = vmatprep.subr.bf16.mxu0 0
        %2432 = vmatpush1.bf16.xpose.msra.mxu0 0
        %2433 = vmatprep.subr.bf16.mxu0 0
        %2434 = vmatpush1.bf16.xpose.msra.mxu0 0
        %2435 = vmatprep.subr.bf16.mxu0 0
        %2436 = vmatpush1.bf16.xpose.msra.mxu0 0
        %2437 = vmatprep.mubr.bf16.mxu0 0
        %2438 = vmatmul.mubr.bf16.gmra.mrb[0].mxu0 %v2400
        %v2439 = vpop.f32.mrb[0].mxu0
        %v2440 = vadd.f32 0.0, %v2439
        %v2441 = vpop.f32.mrb[0].mxu0
        %v2442 = vpop.f32.mrb[0].mxu0
        %v2443 = vpop.f32.mrb[0].mxu0
        %2444 = vdwg.mxu0
        %2445 = vrot.lane.b32.xlu0 %v789, 32
        %v2446 = vpop.permute.xlu0 %2445
        %2447 = vrot.lane.b32.xlu0 %v793, 32
        %v2448 = vpop.permute.xlu0 %2447
        %v2450 = vsel %vm799, %v2446, 0
        %v2453 = vsel %vm799, %v2448, 0
        %2455 = vmatprep.subr.bf16.mxu0 0
        %2456 = vmatpush1.bf16.xpose.msra.mxu0 %v2453
        %2457 = vmatprep.subr.bf16.mxu0 0
        %2458 = vmatpush1.bf16.xpose.msra.mxu0 0
        %2459 = vmatprep.subr.bf16.mxu0 0
        %2460 = vmatpush1.bf16.xpose.msra.mxu0 0
        %2461 = vmatprep.subr.bf16.mxu0 0
        %2462 = vmatpush1.bf16.xpose.msra.mxu0 0
        %2463 = vmatprep.subr.bf16.mxu0 0
        %2464 = vmatpush1.bf16.xpose.msra.mxu0 0
        %2465 = vmatprep.subr.bf16.mxu0 0
        %2466 = vmatpush1.bf16.xpose.msra.mxu0 0
        %2467 = vmatprep.subr.bf16.mxu0 0
        %2468 = vmatpush1.bf16.xpose.msra.mxu0 0
        %2469 = vmatprep.subr.bf16.mxu0 0
        %2470 = vmatpush1.bf16.xpose.msra.mxu0 0
        %2471 = vmatprep.subr.bf16.mxu0 0
        %2472 = vmatpush1.bf16.xpose.msra.mxu0 0
        %2473 = vmatprep.subr.bf16.mxu0 0
        %2474 = vmatpush1.bf16.xpose.msra.mxu0 0
        %2475 = vmatprep.subr.bf16.mxu0 0
        %2476 = vmatpush1.bf16.xpose.msra.mxu0 0
        %2477 = vmatprep.subr.bf16.mxu0 0
        %2478 = vmatpush1.bf16.xpose.msra.mxu0 0
        %2479 = vmatprep.subr.bf16.mxu0 0
        %2480 = vmatpush1.bf16.xpose.msra.mxu0 0
        %2481 = vmatprep.subr.bf16.mxu0 0
        %2482 = vmatpush1.bf16.xpose.msra.mxu0 0
        %2483 = vmatprep.subr.bf16.mxu0 0
        %2484 = vmatpush1.bf16.xpose.msra.mxu0 0
        %2485 = vmatprep.subr.bf16.mxu0 0
        %2486 = vmatpush1.bf16.xpose.msra.mxu0 0
        %2487 = vmatprep.mubr.bf16.mxu0 0
        %2488 = vmatmul.mubr.bf16.gmra.mrb[0].mxu0 %v2450
        %v2489 = vpop.f32.mrb[0].mxu0
        %v2490 = vadd.f32 0.0, %v2489
        %v2491 = vpop.f32.mrb[0].mxu0
        %v2492 = vpop.f32.mrb[0].mxu0
        %v2493 = vpop.f32.mrb[0].mxu0
        %2494 = vdwg.mxu0
        %2495 = vrot.lane.b32.xlu0 %v790, 32
        %v2496 = vpop.permute.xlu0 %2495
        %2497 = vrot.lane.b32.xlu0 %v794, 32
        %v2498 = vpop.permute.xlu0 %2497
        %v2500 = vsel %vm799, %v2496, 0
        %v2503 = vsel %vm799, %v2498, 0
        %2505 = vmatprep.subr.bf16.mxu0 0
        %2506 = vmatpush1.bf16.xpose.msra.mxu0 %v2503
        %2507 = vmatprep.subr.bf16.mxu0 0
        %2508 = vmatpush1.bf16.xpose.msra.mxu0 0
        %2509 = vmatprep.subr.bf16.mxu0 0
        %2510 = vmatpush1.bf16.xpose.msra.mxu0 0
        %2511 = vmatprep.subr.bf16.mxu0 0
        %2512 = vmatpush1.bf16.xpose.msra.mxu0 0
        %2513 = vmatprep.subr.bf16.mxu0 0
        %2514 = vmatpush1.bf16.xpose.msra.mxu0 0
        %2515 = vmatprep.subr.bf16.mxu0 0
        %2516 = vmatpush1.bf16.xpose.msra.mxu0 0
        %2517 = vmatprep.subr.bf16.mxu0 0
        %2518 = vmatpush1.bf16.xpose.msra.mxu0 0
        %2519 = vmatprep.subr.bf16.mxu0 0
        %2520 = vmatpush1.bf16.xpose.msra.mxu0 0
        %2521 = vmatprep.subr.bf16.mxu0 0
        %2522 = vmatpush1.bf16.xpose.msra.mxu0 0
        %2523 = vmatprep.subr.bf16.mxu0 0
        %2524 = vmatpush1.bf16.xpose.msra.mxu0 0
        %2525 = vmatprep.subr.bf16.mxu0 0
        %2526 = vmatpush1.bf16.xpose.msra.mxu0 0
        %2527 = vmatprep.subr.bf16.mxu0 0
        %2528 = vmatpush1.bf16.xpose.msra.mxu0 0
        %2529 = vmatprep.subr.bf16.mxu0 0
        %2530 = vmatpush1.bf16.xpose.msra.mxu0 0
        %2531 = vmatprep.subr.bf16.mxu0 0
        %2532 = vmatpush1.bf16.xpose.msra.mxu0 0
        %2533 = vmatprep.subr.bf16.mxu0 0
        %2534 = vmatpush1.bf16.xpose.msra.mxu0 0
        %2535 = vmatprep.subr.bf16.mxu0 0
        %2536 = vmatpush1.bf16.xpose.msra.mxu0 0
        %2537 = vmatprep.mubr.bf16.mxu0 0
        %2538 = vmatmul.mubr.bf16.gmra.mrb[0].mxu0 %v2500
        %v2539 = vpop.f32.mrb[0].mxu0
        %v2540 = vadd.f32 0.0, %v2539
        %v2541 = vpop.f32.mrb[0].mxu0
        %v2542 = vpop.f32.mrb[0].mxu0
        %v2543 = vpop.f32.mrb[0].mxu0
        %2544 = vdwg.mxu0
        %v2545 = vmul.f32 %v2390, 0.17677669
        %v2546 = vmul.f32 %v2440, 0.17677669
        %v2547 = vmul.f32 %v2490, 0.17677669
        %v2548 = vmul.f32 %v2540, 0.17677669
        %v2549 = vsel %vm988, %v2545, -inf
        %2550 = vmax.xlane.f32.xlu0 %v2549
        %v2551 = vpop.xlane.xlu0 %2550
        %v2552 = vsel %vm988, %v2546, -inf
        %2553 = vmax.xlane.f32.xlu0 %v2552
        %v2554 = vpop.xlane.xlu0 %2553
        %v2555 = vsel %vm988, %v2547, -inf
        %2556 = vmax.xlane.f32.xlu0 %v2555
        %v2557 = vpop.xlane.xlu0 %2556
        %v2558 = vsel %vm988, %v2548, -inf
        %2559 = vmax.xlane.f32.xlu0 %v2558
        %v2560 = vpop.xlane.xlu0 %2559
        %v2561 = vsub.f32 %v2545, %v2551
        %v2562 = vsub.f32 %v2546, %v2554
        %v2563 = vsub.f32 %v2547, %v2557
        %v2564 = vsub.f32 %v2548, %v2560
        %v2565 = vmul.f32 %v2561, 1.442695
        %v2566 = vpow.pop %v2565
        %v2567 = vmul.f32 %v2562, 1.442695
        %v2568 = vpow.pop %v2567
        %v2569 = vmul.f32 %v2563, 1.442695
        %v2570 = vpow.pop %v2569
        %v2571 = vmul.f32 %v2564, 1.442695
        %v2572 = vpow.pop %v2571
        %v2573 = vsel %vm988, %v2566, 0.0
        %2574 = vadd.xlane.f32.xlu0 %v2573
        %v2575 = vpop.xlane.xlu0 %2574
        %v2576 = vsel %vm988, %v2568, 0.0
        %2577 = vadd.xlane.f32.xlu0 %v2576
        %v2578 = vpop.xlane.xlu0 %2577
        %v2579 = vsel %vm988, %v2570, 0.0
        %2580 = vadd.xlane.f32.xlu0 %v2579
        %v2581 = vpop.xlane.xlu0 %2580
        %v2582 = vsel %vm988, %v2572, 0.0
        %2583 = vadd.xlane.f32.xlu0 %v2582
        %v2584 = vpop.xlane.xlu0 %2583
        %v2585 = vrcp.pop %v2575
        %v2586 = vrcp.pop %v2578
        %v2587 = vrcp.pop %v2581
        %v2588 = vrcp.pop %v2584
        %v2589 = vmul.f32 %v2566, %v2585
        %v2590 = vmul.f32 %v2568, %v2586
        %v2591 = vmul.f32 %v2570, %v2587
        %v2592 = vmul.f32 %v2572, %v2588
        %v2593 = vpack.c.bf16 %v2589, %v2589
        %v2594 = vpack.c.bf16 %v2590, %v2590
        %v2595 = vpack.c.bf16 %v2591, %v2591
        %v2596 = vpack.c.bf16 %v2592, %v2592
        %2597 = vrot.lane.b32.xlu0 %v795, 32
        %v2598 = vpop.permute.xlu0 %2597
        %v2600 = vsel %vm988, %v2593, 0
        %v2603 = vsel %vm1040, %v2598, 0
        %2605 = vmatprep.subr.bf16.mxu0 0
        %2606 = vmatpush1.bf16.msra.mxu0 %v2603
        %2607 = vmatprep.subr.bf16.mxu0 0
        %2608 = vmatpush1.bf16.msra.mxu0 0
        %2609 = vmatprep.subr.bf16.mxu0 0
        %2610 = vmatpush1.bf16.msra.mxu0 0
        %2611 = vmatprep.subr.bf16.mxu0 0
        %2612 = vmatpush1.bf16.msra.mxu0 0
        %2613 = vmatprep.subr.bf16.mxu0 0
        %2614 = vmatpush1.bf16.msra.mxu0 0
        %2615 = vmatprep.subr.bf16.mxu0 0
        %2616 = vmatpush1.bf16.msra.mxu0 0
        %2617 = vmatprep.subr.bf16.mxu0 0
        %2618 = vmatpush1.bf16.msra.mxu0 0
        %2619 = vmatprep.subr.bf16.mxu0 0
        %2620 = vmatpush1.bf16.msra.mxu0 0
        %2621 = vmatprep.subr.bf16.mxu0 0
        %2622 = vmatpush1.bf16.msra.mxu0 0
        %2623 = vmatprep.subr.bf16.mxu0 0
        %2624 = vmatpush1.bf16.msra.mxu0 0
        %2625 = vmatprep.subr.bf16.mxu0 0
        %2626 = vmatpush1.bf16.msra.mxu0 0
        %2627 = vmatprep.subr.bf16.mxu0 0
        %2628 = vmatpush1.bf16.msra.mxu0 0
        %2629 = vmatprep.subr.bf16.mxu0 0
        %2630 = vmatpush1.bf16.msra.mxu0 0
        %2631 = vmatprep.subr.bf16.mxu0 0
        %2632 = vmatpush1.bf16.msra.mxu0 0
        %2633 = vmatprep.subr.bf16.mxu0 0
        %2634 = vmatpush1.bf16.msra.mxu0 0
        %2635 = vmatprep.subr.bf16.mxu0 0
        %2636 = vmatpush1.bf16.msra.mxu0 0
        %2637 = vmatprep.mubr.bf16.mxu0 0
        %2638 = vmatmul.mubr.bf16.gmra.mrb[0].mxu0 %v2600
        %v2639 = vpop.f32.mrb[0].mxu0
        %v2640 = vadd.f32 0.0, %v2639
        %v2641 = vpop.f32.mrb[0].mxu0
        %v2642 = vpop.f32.mrb[0].mxu0
        %v2643 = vpop.f32.mrb[0].mxu0
        %2644 = vdwg.mxu0
        %2645 = vrot.lane.b32.xlu0 %v796, 32
        %v2646 = vpop.permute.xlu0 %2645
        %v2648 = vsel %vm988, %v2594, 0
        %v2651 = vsel %vm1040, %v2646, 0
        %2653 = vmatprep.subr.bf16.mxu0 0
        %2654 = vmatpush1.bf16.msra.mxu0 %v2651
        %2655 = vmatprep.subr.bf16.mxu0 0
        %2656 = vmatpush1.bf16.msra.mxu0 0
        %2657 = vmatprep.subr.bf16.mxu0 0
        %2658 = vmatpush1.bf16.msra.mxu0 0
        %2659 = vmatprep.subr.bf16.mxu0 0
        %2660 = vmatpush1.bf16.msra.mxu0 0
        %2661 = vmatprep.subr.bf16.mxu0 0
        %2662 = vmatpush1.bf16.msra.mxu0 0
        %2663 = vmatprep.subr.bf16.mxu0 0
        %2664 = vmatpush1.bf16.msra.mxu0 0
        %2665 = vmatprep.subr.bf16.mxu0 0
        %2666 = vmatpush1.bf16.msra.mxu0 0
        %2667 = vmatprep.subr.bf16.mxu0 0
        %2668 = vmatpush1.bf16.msra.mxu0 0
        %2669 = vmatprep.subr.bf16.mxu0 0
        %2670 = vmatpush1.bf16.msra.mxu0 0
        %2671 = vmatprep.subr.bf16.mxu0 0
        %2672 = vmatpush1.bf16.msra.mxu0 0
        %2673 = vmatprep.subr.bf16.mxu0 0
        %2674 = vmatpush1.bf16.msra.mxu0 0
        %2675 = vmatprep.subr.bf16.mxu0 0
        %2676 = vmatpush1.bf16.msra.mxu0 0
        %2677 = vmatprep.subr.bf16.mxu0 0
        %2678 = vmatpush1.bf16.msra.mxu0 0
        %2679 = vmatprep.subr.bf16.mxu0 0
        %2680 = vmatpush1.bf16.msra.mxu0 0
        %2681 = vmatprep.subr.bf16.mxu0 0
        %2682 = vmatpush1.bf16.msra.mxu0 0
        %2683 = vmatprep.subr.bf16.mxu0 0
        %2684 = vmatpush1.bf16.msra.mxu0 0
        %2685 = vmatprep.mubr.bf16.mxu0 0
        %2686 = vmatmul.mubr.bf16.gmra.mrb[0].mxu0 %v2648
        %v2687 = vpop.f32.mrb[0].mxu0
        %v2688 = vadd.f32 0.0, %v2687
        %v2689 = vpop.f32.mrb[0].mxu0
        %v2690 = vpop.f32.mrb[0].mxu0
        %v2691 = vpop.f32.mrb[0].mxu0
        %2692 = vdwg.mxu0
        %2693 = vrot.lane.b32.xlu0 %v797, 32
        %v2694 = vpop.permute.xlu0 %2693
        %v2696 = vsel %vm988, %v2595, 0
        %v2699 = vsel %vm1040, %v2694, 0
        %2701 = vmatprep.subr.bf16.mxu0 0
        %2702 = vmatpush1.bf16.msra.mxu0 %v2699
        %2703 = vmatprep.subr.bf16.mxu0 0
        %2704 = vmatpush1.bf16.msra.mxu0 0
        %2705 = vmatprep.subr.bf16.mxu0 0
        %2706 = vmatpush1.bf16.msra.mxu0 0
        %2707 = vmatprep.subr.bf16.mxu0 0
        %2708 = vmatpush1.bf16.msra.mxu0 0
        %2709 = vmatprep.subr.bf16.mxu0 0
        %2710 = vmatpush1.bf16.msra.mxu0 0
        %2711 = vmatprep.subr.bf16.mxu0 0
        %2712 = vmatpush1.bf16.msra.mxu0 0
        %2713 = vmatprep.subr.bf16.mxu0 0
        %2714 = vmatpush1.bf16.msra.mxu0 0
        %2715 = vmatprep.subr.bf16.mxu0 0
        %2716 = vmatpush1.bf16.msra.mxu0 0
        %2717 = vmatprep.subr.bf16.mxu0 0
        %2718 = vmatpush1.bf16.msra.mxu0 0
        %2719 = vmatprep.subr.bf16.mxu0 0
        %2720 = vmatpush1.bf16.msra.mxu0 0
        %2721 = vmatprep.subr.bf16.mxu0 0
        %2722 = vmatpush1.bf16.msra.mxu0 0
        %2723 = vmatprep.subr.bf16.mxu0 0
        %2724 = vmatpush1.bf16.msra.mxu0 0
        %2725 = vmatprep.subr.bf16.mxu0 0
        %2726 = vmatpush1.bf16.msra.mxu0 0
        %2727 = vmatprep.subr.bf16.mxu0 0
        %2728 = vmatpush1.bf16.msra.mxu0 0
        %2729 = vmatprep.subr.bf16.mxu0 0
        %2730 = vmatpush1.bf16.msra.mxu0 0
        %2731 = vmatprep.subr.bf16.mxu0 0
        %2732 = vmatpush1.bf16.msra.mxu0 0
        %2733 = vmatprep.mubr.bf16.mxu0 0
        %2734 = vmatmul.mubr.bf16.gmra.mrb[0].mxu0 %v2696
        %v2735 = vpop.f32.mrb[0].mxu0
        %v2736 = vadd.f32 0.0, %v2735
        %v2737 = vpop.f32.mrb[0].mxu0
        %v2738 = vpop.f32.mrb[0].mxu0
        %v2739 = vpop.f32.mrb[0].mxu0
        %2740 = vdwg.mxu0
        %2741 = vrot.lane.b32.xlu0 %v798, 32
        %v2742 = vpop.permute.xlu0 %2741
        %v2744 = vsel %vm988, %v2596, 0
        %v2747 = vsel %vm1040, %v2742, 0
        %2749 = vmatprep.subr.bf16.mxu0 0
        %2750 = vmatpush1.bf16.msra.mxu0 %v2747
        %2751 = vmatprep.subr.bf16.mxu0 0
        %2752 = vmatpush1.bf16.msra.mxu0 0
        %2753 = vmatprep.subr.bf16.mxu0 0
        %2754 = vmatpush1.bf16.msra.mxu0 0
        %2755 = vmatprep.subr.bf16.mxu0 0
        %2756 = vmatpush1.bf16.msra.mxu0 0
        %2757 = vmatprep.subr.bf16.mxu0 0
        %2758 = vmatpush1.bf16.msra.mxu0 0
        %2759 = vmatprep.subr.bf16.mxu0 0
        %2760 = vmatpush1.bf16.msra.mxu0 0
        %2761 = vmatprep.subr.bf16.mxu0 0
        %2762 = vmatpush1.bf16.msra.mxu0 0
        %2763 = vmatprep.subr.bf16.mxu0 0
        %2764 = vmatpush1.bf16.msra.mxu0 0
        %2765 = vmatprep.subr.bf16.mxu0 0
        %2766 = vmatpush1.bf16.msra.mxu0 0
        %2767 = vmatprep.subr.bf16.mxu0 0
        %2768 = vmatpush1.bf16.msra.mxu0 0
        %2769 = vmatprep.subr.bf16.mxu0 0
        %2770 = vmatpush1.bf16.msra.mxu0 0
        %2771 = vmatprep.subr.bf16.mxu0 0
        %2772 = vmatpush1.bf16.msra.mxu0 0
        %2773 = vmatprep.subr.bf16.mxu0 0
        %2774 = vmatpush1.bf16.msra.mxu0 0
        %2775 = vmatprep.subr.bf16.mxu0 0
        %2776 = vmatpush1.bf16.msra.mxu0 0
        %2777 = vmatprep.subr.bf16.mxu0 0
        %2778 = vmatpush1.bf16.msra.mxu0 0
        %2779 = vmatprep.subr.bf16.mxu0 0
        %2780 = vmatpush1.bf16.msra.mxu0 0
        %2781 = vmatprep.mubr.bf16.mxu0 0
        %2782 = vmatmul.mubr.bf16.gmra.mrb[0].mxu0 %v2744
        %v2783 = vpop.f32.mrb[0].mxu0
        %v2784 = vadd.f32 0.0, %v2783
        %v2785 = vpop.f32.mrb[0].mxu0
        %v2786 = vpop.f32.mrb[0].mxu0
        %v2787 = vpop.f32.mrb[0].mxu0
        %2788 = vdwg.mxu0
        %v2789 = vpack.c.bf16 %v2688, %v2640
        %v2790 = vpack.c.bf16 %v2784, %v2736
        %v2791 = vld [vmem:[#allocation8 + $0x30] sm:$0xf]
        %v2792 = vld [vmem:[#allocation8 + $0x34] sm:$0xf]
        %v2793 = vld [vmem:[#allocation8 + $0x38] sm:$0xf]
        %v2794 = vld [vmem:[#allocation8 + $0x3c] sm:$0xf]
        %v2799 = vunpack.c.l.b16 %v2791
        %v2800 = vunpack.c.l.b16 %v2792
        %v2801 = vunpack.c.l.b16 %v2793
        %v2802 = vunpack.c.l.b16 %v2794
        %v2803 = vpack.c.b16 %v2800, %v2799
        %v2804 = vpack.c.b16 %v2802, %v2801
        %v2808 = vsel %vm799, %v2789, 0
        %v2811 = vsel %vm799, %v2790, 0
        %2813 = vmatprep.subr.bf16.mxu0 0
        %2814 = vmatpush1.bf16.msra.mxu0 %v2803
        %2815 = vmatprep.subr.bf16.mxu0 0
        %2816 = vmatpush1.bf16.msra.mxu0 %v2804
        %2817 = vmatprep.subr.bf16.mxu0 0
        %2818 = vmatpush1.bf16.msra.mxu0 0
        %2819 = vmatprep.subr.bf16.mxu0 0
        %2820 = vmatpush1.bf16.msra.mxu0 0
        %2821 = vmatprep.subr.bf16.mxu0 0
        %2822 = vmatpush1.bf16.msra.mxu0 0
        %2823 = vmatprep.subr.bf16.mxu0 0
        %2824 = vmatpush1.bf16.msra.mxu0 0
        %2825 = vmatprep.subr.bf16.mxu0 0
        %2826 = vmatpush1.bf16.msra.mxu0 0
        %2827 = vmatprep.subr.bf16.mxu0 0
        %2828 = vmatpush1.bf16.msra.mxu0 0
        %2829 = vmatprep.subr.bf16.mxu0 0
        %2830 = vmatpush1.bf16.msra.mxu0 0
        %2831 = vmatprep.subr.bf16.mxu0 0
        %2832 = vmatpush1.bf16.msra.mxu0 0
        %2833 = vmatprep.subr.bf16.mxu0 0
        %2834 = vmatpush1.bf16.msra.mxu0 0
        %2835 = vmatprep.subr.bf16.mxu0 0
        %2836 = vmatpush1.bf16.msra.mxu0 0
        %2837 = vmatprep.subr.bf16.mxu0 0
        %2838 = vmatpush1.bf16.msra.mxu0 0
        %2839 = vmatprep.subr.bf16.mxu0 0
        %2840 = vmatpush1.bf16.msra.mxu0 0
        %2841 = vmatprep.subr.bf16.mxu0 0
        %2842 = vmatpush1.bf16.msra.mxu0 0
        %2843 = vmatprep.subr.bf16.mxu0 0
        %2844 = vmatpush1.bf16.msra.mxu0 0
        %2845 = vmatprep.mubr.bf16.mxu0 0
        %2846 = vmatmul.mubr.bf16.gmra.mrb[0].mxu0 %v2808
        %v2847 = vpop.f32.mrb[0].mxu0
        %v2848 = vadd.f32 0.0, %v2847
        %v2849 = vpop.f32.mrb[0].mxu0
        %v2850 = vpop.f32.mrb[0].mxu0
        %v2851 = vadd.f32 0.0, %v2850
        %v2852 = vpop.f32.mrb[0].mxu0
        %2853 = vmatprep.mubr.bf16.mxu0 0
        %2854 = vmatmul.mubr.bf16.gmra.mrb[0].mxu0 %v2811
        %v2855 = vpop.f32.mrb[0].mxu0
        %v2856 = vadd.f32 0.0, %v2855
        %v2857 = vpop.f32.mrb[0].mxu0
        %v2858 = vpop.f32.mrb[0].mxu0
        %v2859 = vadd.f32 0.0, %v2858
        %v2860 = vpop.f32.mrb[0].mxu0
        %2861 = vdwg.mxu0
        %v2862 = vadd.f32 %v2341, %v2848
        %v2863 = vadd.f32 %v2342, %v2851
        %v2864 = vadd.f32 %v2343, %v2856
        %v2865 = vadd.f32 %v2344, %v2859
        %v2866 = vadd.f32 %v457, %v2862
        %v2867 = vadd.f32 %v458, %v2863
        %v2868 = vadd.f32 %v459, %v2864
        %v2869 = vadd.f32 %v460, %v2865
        %v2870 = vld [vmem:[%s5] sm:$0x1]
        %v2872 = vlaneseq
        %v2873 = vshrl.u32 %v2872, 7
        %v2874 = vsub.s32 0, %v2873
        %v2875 = vrot.slane %v2870, %v2874
        %v2877 = vadd.f32 %v2866, %v2875
        %v2878 = vadd.f32 %v2867, %v2875
        %v2879 = vadd.f32 %v2868, %v2875
        %v2880 = vadd.f32 %v2869, %v2875
        %2881 = vadd.xlane.f32.xlu0 %v2877
        %v2882 = vpop.xlane.xlu0 %2881
        %2883 = vadd.xlane.f32.xlu0 %v2878
        %v2884 = vpop.xlane.xlu0 %2883
        %2885 = vadd.xlane.f32.xlu0 %v2879
        %v2886 = vpop.xlane.xlu0 %2885
        %2887 = vadd.xlane.f32.xlu0 %v2880
        %v2888 = vpop.xlane.xlu0 %2887
        %v2889 = vmul.f32 %v2882, %v469
        %v2890 = vmul.f32 %v2884, %v469
        %v2891 = vmul.f32 %v2886, %v469
        %v2892 = vmul.f32 %v2888, %v469
        %v2893 = vsub.f32 %v2877, %v2889
        %v2894 = vsub.f32 %v2878, %v2890
        %v2895 = vsub.f32 %v2879, %v2891
        %v2896 = vsub.f32 %v2880, %v2892
        %v2897 = vmul.f32 %v2893, %v2893
        %v2898 = vmul.f32 %v2894, %v2894
        %v2899 = vmul.f32 %v2895, %v2895
        %v2900 = vmul.f32 %v2896, %v2896
        %2901 = vadd.xlane.f32.xlu0 %v2897
        %v2902 = vpop.xlane.xlu0 %2901
        %2903 = vadd.xlane.f32.xlu0 %v2898
        %v2904 = vpop.xlane.xlu0 %2903
        %2905 = vadd.xlane.f32.xlu0 %v2899
        %v2906 = vpop.xlane.xlu0 %2905
        %2907 = vadd.xlane.f32.xlu0 %v2900
        %v2908 = vpop.xlane.xlu0 %2907
        %v2909 = vmul.f32 %v2902, %v469
        %v2910 = vmul.f32 %v2904, %v469
        %v2911 = vmul.f32 %v2906, %v469
        %v2912 = vmul.f32 %v2908, %v469
        %v2913 = vadd.f32 %v2909, 1e-05
        %v2914 = vadd.f32 %v2910, 1e-05
        %v2915 = vadd.f32 %v2911, 1e-05
        %v2916 = vadd.f32 %v2912, 1e-05
        %v2917 = vrsqrt.pop %v2913
        %v2918 = vrsqrt.pop %v2914
        %v2919 = vrsqrt.pop %v2915
        %v2920 = vrsqrt.pop %v2916
        %v2921 = vmul.f32 %v2893, %v2917
        %v2922 = vmul.f32 %v2894, %v2918
        %v2923 = vmul.f32 %v2895, %v2919
        %v2924 = vmul.f32 %v2896, %v2920
        %v2925 = vpack.c.bf16 %v2922, %v2921
        %v2926 = vpack.c.bf16 %v2924, %v2923
        %v2927 = vld [vmem:[#allocation10] sm:$0xff]
        %v2928 = vld [vmem:[#allocation10 + $0x8] sm:$0xff]
        %v2929 = vld [vmem:[#allocation10 + $0x10] sm:$0xff]
        %v2930 = vld [vmem:[#allocation10 + $0x18] sm:$0xff]
        %v2931 = vld [vmem:[#allocation10 + $0x20] sm:$0xff]
        %v2932 = vld [vmem:[#allocation10 + $0x28] sm:$0xff]
        %v2933 = vld [vmem:[#allocation10 + $0x30] sm:$0xff]
        %v2934 = vld [vmem:[#allocation10 + $0x38] sm:$0xff]
        %v2935 = vld [vmem:[#allocation10 + $0x40] sm:$0xff]
        %v2936 = vld [vmem:[#allocation10 + $0x48] sm:$0xff]
        %v2937 = vld [vmem:[#allocation10 + $0x50] sm:$0xff]
        %v2938 = vld [vmem:[#allocation10 + $0x58] sm:$0xff]
        %v2939 = vld [vmem:[#allocation10 + $0x60] sm:$0xff]
        %v2940 = vld [vmem:[#allocation10 + $0x68] sm:$0xff]
        %v2941 = vld [vmem:[#allocation10 + $0x70] sm:$0xff]
        %v2942 = vld [vmem:[#allocation10 + $0x78] sm:$0xff]
        %v2943 = vld [vmem:[%s7] sm:$0x3]
        %v2945 = vlaneseq
        %v2946 = vshrl.u32 %v2945, 7
        %v2947 = vsub.s32 0, %v2946
        %v2948 = vrot.slane %v2943, %v2947
        %v2949 = vlaneseq
        %v2950 = vshrl.u32 %v2949, 7
        %v2951 = vsub.s32 1, %v2950
        %v2952 = vrot.slane %v2943, %v2951
        %v2971 = vunpack.c.l.b16 %v2927
        %v2972 = vunpack.c.h.b16 %v2927
        %v2973 = vunpack.c.l.b16 %v2928
        %v2974 = vunpack.c.h.b16 %v2928
        %v2975 = vunpack.c.l.b16 %v2929
        %v2976 = vunpack.c.h.b16 %v2929
        %v2977 = vunpack.c.l.b16 %v2930
        %v2978 = vunpack.c.h.b16 %v2930
        %v2979 = vunpack.c.l.b16 %v2931
        %v2980 = vunpack.c.h.b16 %v2931
        %v2981 = vunpack.c.l.b16 %v2932
        %v2982 = vunpack.c.h.b16 %v2932
        %v2983 = vunpack.c.l.b16 %v2933
        %v2984 = vunpack.c.h.b16 %v2933
        %v2985 = vunpack.c.l.b16 %v2934
        %v2986 = vunpack.c.h.b16 %v2934
        %v2987 = vunpack.c.l.b16 %v2935
        %v2988 = vunpack.c.h.b16 %v2935
        %v2989 = vunpack.c.l.b16 %v2936
        %v2990 = vunpack.c.h.b16 %v2936
        %v2991 = vunpack.c.l.b16 %v2937
        %v2992 = vunpack.c.h.b16 %v2937
        %v2993 = vunpack.c.l.b16 %v2938
        %v2994 = vunpack.c.h.b16 %v2938
        %v2995 = vunpack.c.l.b16 %v2939
        %v2996 = vunpack.c.h.b16 %v2939
        %v2997 = vunpack.c.l.b16 %v2940
        %v2998 = vunpack.c.h.b16 %v2940
        %v2999 = vunpack.c.l.b16 %v2941
        %v3000 = vunpack.c.h.b16 %v2941
        %v3001 = vunpack.c.l.b16 %v2942
        %v3002 = vunpack.c.h.b16 %v2942
        %v3003 = vpack.c.b16 %v2973, %v2971
        %v3004 = vpack.c.b16 %v2974, %v2972
        %v3005 = vpack.c.b16 %v2977, %v2975
        %v3006 = vpack.c.b16 %v2978, %v2976
        %v3007 = vpack.c.b16 %v2981, %v2979
        %v3008 = vpack.c.b16 %v2982, %v2980
        %v3009 = vpack.c.b16 %v2985, %v2983
        %v3010 = vpack.c.b16 %v2986, %v2984
        %v3011 = vpack.c.b16 %v2989, %v2987
        %v3012 = vpack.c.b16 %v2990, %v2988
        %v3013 = vpack.c.b16 %v2993, %v2991
        %v3014 = vpack.c.b16 %v2994, %v2992
        %v3015 = vpack.c.b16 %v2997, %v2995
        %v3016 = vpack.c.b16 %v2998, %v2996
        %v3017 = vpack.c.b16 %v3001, %v2999
        %v3018 = vpack.c.b16 %v3002, %v3000
        %3035 = vmatprep.subr.bf16.mxu0 %v3004
        %3036 = vmatpush1.bf16.msra.mxu0 %v3003
        %3037 = vmatprep.subr.bf16.mxu0 %v3006
        %3038 = vmatpush1.bf16.msra.mxu0 %v3005
        %3039 = vmatprep.subr.bf16.mxu0 %v3008
        %3040 = vmatpush1.bf16.msra.mxu0 %v3007
        %3041 = vmatprep.subr.bf16.mxu0 %v3010
        %3042 = vmatpush1.bf16.msra.mxu0 %v3009
        %3043 = vmatprep.subr.bf16.mxu0 %v3012
        %3044 = vmatpush1.bf16.msra.mxu0 %v3011
        %3045 = vmatprep.subr.bf16.mxu0 %v3014
        %3046 = vmatpush1.bf16.msra.mxu0 %v3013
        %3047 = vmatprep.subr.bf16.mxu0 %v3016
        %3048 = vmatpush1.bf16.msra.mxu0 %v3015
        %3049 = vmatprep.subr.bf16.mxu0 %v3018
        %3050 = vmatpush1.bf16.msra.mxu0 %v3017
        %3051 = vmatprep.subr.bf16.mxu0 0
        %3052 = vmatpush1.bf16.msra.mxu0 0
        %3053 = vmatprep.subr.bf16.mxu0 0
        %3054 = vmatpush1.bf16.msra.mxu0 0
        %3055 = vmatprep.subr.bf16.mxu0 0
        %3056 = vmatpush1.bf16.msra.mxu0 0
        %3057 = vmatprep.subr.bf16.mxu0 0
        %3058 = vmatpush1.bf16.msra.mxu0 0
        %3059 = vmatprep.subr.bf16.mxu0 0
        %3060 = vmatpush1.bf16.msra.mxu0 0
        %3061 = vmatprep.subr.bf16.mxu0 0
        %3062 = vmatpush1.bf16.msra.mxu0 0
        %3063 = vmatprep.subr.bf16.mxu0 0
        %3064 = vmatpush1.bf16.msra.mxu0 0
        %3065 = vmatprep.subr.bf16.mxu0 0
        %3066 = vmatpush1.bf16.msra.mxu0 0
        %3067 = vmatprep.mubr.bf16.mxu0 0
        %3068 = vmatmul.mubr.bf16.gmra.mrb[0].mxu0 %v2925
        %v3069 = vpop.f32.mrb[0].mxu0
        %v3070 = vadd.f32 %v2948, %v3069
        %v3071 = vpop.f32.mrb[0].mxu0
        %v3072 = vadd.f32 %v2952, %v3071
        %v3073 = vpop.f32.mrb[0].mxu0
        %v3074 = vadd.f32 %v2948, %v3073
        %v3075 = vpop.f32.mrb[0].mxu0
        %v3076 = vadd.f32 %v2952, %v3075
        %3077 = vmatprep.mubr.bf16.mxu0 0
        %3078 = vmatmul.mubr.bf16.gmra.mrb[0].mxu0 %v2926
        %v3079 = vpop.f32.mrb[0].mxu0
        %v3080 = vadd.f32 %v2948, %v3079
        %v3081 = vpop.f32.mrb[0].mxu0
        %v3082 = vadd.f32 %v2952, %v3081
        %v3083 = vpop.f32.mrb[0].mxu0
        %v3084 = vadd.f32 %v2948, %v3083
        %v3085 = vpop.f32.mrb[0].mxu0
        %v3086 = vadd.f32 %v2952, %v3085
        %3087 = vdwg.mxu0
        %v3088 = vmul.f32 %v3070, %v3070
        %v3089 = vmul.f32 %v3072, %v3072
        %v3090 = vmul.f32 %v3074, %v3074
        %v3091 = vmul.f32 %v3076, %v3076
        %v3092 = vmul.f32 %v3080, %v3080
        %v3093 = vmul.f32 %v3082, %v3082
        %v3094 = vmul.f32 %v3084, %v3084
        %v3095 = vmul.f32 %v3086, %v3086
        %v3096 = vmul.f32 %v3070, %v3088
        %v3097 = vmul.f32 %v3072, %v3089
        %v3098 = vmul.f32 %v3074, %v3090
        %v3099 = vmul.f32 %v3076, %v3091
        %v3100 = vmul.f32 %v3080, %v3092
        %v3101 = vmul.f32 %v3082, %v3093
        %v3102 = vmul.f32 %v3084, %v3094
        %v3103 = vmul.f32 %v3086, %v3095
        %v3104 = vmul.f32 %v3096, 0.044715
        %v3105 = vmul.f32 %v3097, 0.044715
        %v3106 = vmul.f32 %v3098, 0.044715
        %v3107 = vmul.f32 %v3099, 0.044715
        %v3108 = vmul.f32 %v3100, 0.044715
        %v3109 = vmul.f32 %v3101, 0.044715
        %v3110 = vmul.f32 %v3102, 0.044715
        %v3111 = vmul.f32 %v3103, 0.044715
        %v3112 = vadd.f32 %v3070, %v3104
        %v3113 = vadd.f32 %v3072, %v3105
        %v3114 = vadd.f32 %v3074, %v3106
        %v3115 = vadd.f32 %v3076, %v3107
        %v3116 = vadd.f32 %v3080, %v3108
        %v3117 = vadd.f32 %v3082, %v3109
        %v3118 = vadd.f32 %v3084, %v3110
        %v3119 = vadd.f32 %v3086, %v3111
        %v3120 = vmul.f32 %v3112, 0.7978846
        %v3121 = vmul.f32 %v3113, 0.7978846
        %v3122 = vmul.f32 %v3114, 0.7978846
        %v3123 = vmul.f32 %v3115, 0.7978846
        %v3124 = vmul.f32 %v3116, 0.7978846
        %v3125 = vmul.f32 %v3117, 0.7978846
        %v3126 = vmul.f32 %v3118, 0.7978846
        %v3127 = vmul.f32 %v3119, 0.7978846
        %v3128 = vtanh.pop %v3120
        %v3129 = vtanh.pop %v3121
        %v3130 = vtanh.pop %v3122
        %v3131 = vtanh.pop %v3123
        %v3132 = vtanh.pop %v3124
        %v3133 = vtanh.pop %v3125
        %v3134 = vtanh.pop %v3126
        %v3135 = vtanh.pop %v3127
        %v3136 = vadd.f32 %v3128, 1.0
        %v3137 = vadd.f32 %v3129, 1.0
        %v3138 = vadd.f32 %v3130, 1.0
        %v3139 = vadd.f32 %v3131, 1.0
        %v3140 = vadd.f32 %v3132, 1.0
        %v3141 = vadd.f32 %v3133, 1.0
        %v3142 = vadd.f32 %v3134, 1.0
        %v3143 = vadd.f32 %v3135, 1.0
        %v3144 = vmul.f32 %v3136, 0.5
        %v3145 = vmul.f32 %v3137, 0.5
        %v3146 = vmul.f32 %v3138, 0.5
        %v3147 = vmul.f32 %v3139, 0.5
        %v3148 = vmul.f32 %v3140, 0.5
        %v3149 = vmul.f32 %v3141, 0.5
        %v3150 = vmul.f32 %v3142, 0.5
        %v3151 = vmul.f32 %v3143, 0.5
        %v3152 = vmul.f32 %v3070, %v3144
        %v3153 = vmul.f32 %v3072, %v3145
        %v3154 = vmul.f32 %v3074, %v3146
        %v3155 = vmul.f32 %v3076, %v3147
        %v3156 = vmul.f32 %v3080, %v3148
        %v3157 = vmul.f32 %v3082, %v3149
        %v3158 = vmul.f32 %v3084, %v3150
        %v3159 = vmul.f32 %v3086, %v3151
        %v3160 = vpack.c.bf16 %v3154, %v3152
        %v3161 = vpack.c.bf16 %v3155, %v3153
        %v3162 = vpack.c.bf16 %v3158, %v3156
        %v3163 = vpack.c.bf16 %v3159, %v3157
        %v3164 = vld [vmem:[#allocation11] sm:$0xf]
        %v3165 = vld [vmem:[#allocation11 + $0x4] sm:$0xf]
        %v3166 = vld [vmem:[#allocation11 + $0x8] sm:$0xf]
        %v3167 = vld [vmem:[#allocation11 + $0xc] sm:$0xf]
        %v3168 = vld [vmem:[#allocation11 + $0x10] sm:$0xf]
        %v3169 = vld [vmem:[#allocation11 + $0x14] sm:$0xf]
        %v3170 = vld [vmem:[#allocation11 + $0x18] sm:$0xf]
        %v3171 = vld [vmem:[#allocation11 + $0x1c] sm:$0xf]
        %v3172 = vld [vmem:[#allocation11 + $0x20] sm:$0xf]
        %v3173 = vld [vmem:[#allocation11 + $0x24] sm:$0xf]
        %v3174 = vld [vmem:[#allocation11 + $0x28] sm:$0xf]
        %v3175 = vld [vmem:[#allocation11 + $0x2c] sm:$0xf]
        %v3176 = vld [vmem:[#allocation11 + $0x30] sm:$0xf]
        %v3177 = vld [vmem:[#allocation11 + $0x34] sm:$0xf]
        %v3178 = vld [vmem:[#allocation11 + $0x38] sm:$0xf]
        %v3179 = vld [vmem:[#allocation11 + $0x3c] sm:$0xf]
        %v3180 = vld [vmem:[#allocation11 + $0x40] sm:$0xf]
        %v3181 = vld [vmem:[#allocation11 + $0x44] sm:$0xf]
        %v3182 = vld [vmem:[#allocation11 + $0x48] sm:$0xf]
        %v3183 = vld [vmem:[#allocation11 + $0x4c] sm:$0xf]
        %v3184 = vld [vmem:[#allocation11 + $0x50] sm:$0xf]
        %v3185 = vld [vmem:[#allocation11 + $0x54] sm:$0xf]
        %v3186 = vld [vmem:[#allocation11 + $0x58] sm:$0xf]
        %v3187 = vld [vmem:[#allocation11 + $0x5c] sm:$0xf]
        %v3188 = vld [vmem:[#allocation11 + $0x60] sm:$0xf]
        %v3189 = vld [vmem:[#allocation11 + $0x64] sm:$0xf]
        %v3190 = vld [vmem:[#allocation11 + $0x68] sm:$0xf]
        %v3191 = vld [vmem:[#allocation11 + $0x6c] sm:$0xf]
        %v3192 = vld [vmem:[#allocation11 + $0x70] sm:$0xf]
        %v3193 = vld [vmem:[#allocation11 + $0x74] sm:$0xf]
        %v3194 = vld [vmem:[#allocation11 + $0x78] sm:$0xf]
        %v3195 = vld [vmem:[#allocation11 + $0x7c] sm:$0xf]
        %v3196 = vld [vmem:[%s9] sm:$0x1]
        %v3198 = vlaneseq
        %v3199 = vshrl.u32 %v3198, 7
        %v3200 = vsub.s32 0, %v3199
        %v3201 = vrot.slane %v3196, %v3200
        %v3235 = vunpack.c.l.b16 %v3164
        %v3236 = vunpack.c.l.b16 %v3165
        %v3237 = vunpack.c.l.b16 %v3166
        %v3238 = vunpack.c.l.b16 %v3167
        %v3239 = vunpack.c.l.b16 %v3168
        %v3240 = vunpack.c.l.b16 %v3169
        %v3241 = vunpack.c.l.b16 %v3170
        %v3242 = vunpack.c.l.b16 %v3171
        %v3243 = vunpack.c.l.b16 %v3172
        %v3244 = vunpack.c.l.b16 %v3173
        %v3245 = vunpack.c.l.b16 %v3174
        %v3246 = vunpack.c.l.b16 %v3175
        %v3247 = vunpack.c.l.b16 %v3176
        %v3248 = vunpack.c.l.b16 %v3177
        %v3249 = vunpack.c.l.b16 %v3178
        %v3250 = vunpack.c.l.b16 %v3179
        %v3251 = vunpack.c.l.b16 %v3180
        %v3252 = vunpack.c.l.b16 %v3181
        %v3253 = vunpack.c.l.b16 %v3182
        %v3254 = vunpack.c.l.b16 %v3183
        %v3255 = vunpack.c.l.b16 %v3184
        %v3256 = vunpack.c.l.b16 %v3185
        %v3257 = vunpack.c.l.b16 %v3186
        %v3258 = vunpack.c.l.b16 %v3187
        %v3259 = vunpack.c.l.b16 %v3188
        %v3260 = vunpack.c.l.b16 %v3189
        %v3261 = vunpack.c.l.b16 %v3190
        %v3262 = vunpack.c.l.b16 %v3191
        %v3263 = vunpack.c.l.b16 %v3192
        %v3264 = vunpack.c.l.b16 %v3193
        %v3265 = vunpack.c.l.b16 %v3194
        %v3266 = vunpack.c.l.b16 %v3195
        %v3267 = vpack.c.b16 %v3236, %v3235
        %v3268 = vpack.c.b16 %v3238, %v3237
        %v3269 = vpack.c.b16 %v3240, %v3239
        %v3270 = vpack.c.b16 %v3242, %v3241
        %v3271 = vpack.c.b16 %v3244, %v3243
        %v3272 = vpack.c.b16 %v3246, %v3245
        %v3273 = vpack.c.b16 %v3248, %v3247
        %v3274 = vpack.c.b16 %v3250, %v3249
        %v3275 = vpack.c.b16 %v3252, %v3251
        %v3276 = vpack.c.b16 %v3254, %v3253
        %v3277 = vpack.c.b16 %v3256, %v3255
        %v3278 = vpack.c.b16 %v3258, %v3257
        %v3279 = vpack.c.b16 %v3260, %v3259
        %v3280 = vpack.c.b16 %v3262, %v3261
        %v3281 = vpack.c.b16 %v3264, %v3263
        %v3282 = vpack.c.b16 %v3266, %v3265
        %3299 = vmatprep.subr.bf16.mxu0 0
        %3300 = vmatpush1.bf16.msra.mxu0 %v3267
        %3301 = vmatprep.subr.bf16.mxu0 0
        %3302 = vmatpush1.bf16.msra.mxu0 %v3268
        %3303 = vmatprep.subr.bf16.mxu0 0
        %3304 = vmatpush1.bf16.msra.mxu0 %v3269
        %3305 = vmatprep.subr.bf16.mxu0 0
        %3306 = vmatpush1.bf16.msra.mxu0 %v3270
        %3307 = vmatprep.subr.bf16.mxu0 0
        %3308 = vmatpush1.bf16.msra.mxu0 %v3271
        %3309 = vmatprep.subr.bf16.mxu0 0
        %3310 = vmatpush1.bf16.msra.mxu0 %v3272
        %3311 = vmatprep.subr.bf16.mxu0 0
        %3312 = vmatpush1.bf16.msra.mxu0 %v3273
        %3313 = vmatprep.subr.bf16.mxu0 0
        %3314 = vmatpush1.bf16.msra.mxu0 %v3274
        %3315 = vmatprep.subr.bf16.mxu0 0
        %3316 = vmatpush1.bf16.msra.mxu0 %v3275
        %3317 = vmatprep.subr.bf16.mxu0 0
        %3318 = vmatpush1.bf16.msra.mxu0 %v3276
        %3319 = vmatprep.subr.bf16.mxu0 0
        %3320 = vmatpush1.bf16.msra.mxu0 %v3277
        %3321 = vmatprep.subr.bf16.mxu0 0
        %3322 = vmatpush1.bf16.msra.mxu0 %v3278
        %3323 = vmatprep.subr.bf16.mxu0 0
        %3324 = vmatpush1.bf16.msra.mxu0 %v3279
        %3325 = vmatprep.subr.bf16.mxu0 0
        %3326 = vmatpush1.bf16.msra.mxu0 %v3280
        %3327 = vmatprep.subr.bf16.mxu0 0
        %3328 = vmatpush1.bf16.msra.mxu0 %v3281
        %3329 = vmatprep.subr.bf16.mxu0 0
        %3330 = vmatpush1.bf16.msra.mxu0 %v3282
        %3331 = vmatprep.mubr.bf16.mxu0 %v3161
        %3332 = vmatmul.mubr.bf16.gmra.mrb[0].mxu0 %v3160
        %v3333 = vpop.f32.mrb[0].mxu0
        %v3334 = vadd.f32 %v3201, %v3333
        %v3335 = vpop.f32.mrb[0].mxu0
        %v3336 = vpop.f32.mrb[0].mxu0
        %v3337 = vadd.f32 %v3201, %v3336
        %v3338 = vpop.f32.mrb[0].mxu0
        %3339 = vmatprep.mubr.bf16.mxu0 %v3163
        %3340 = vmatmul.mubr.bf16.gmra.mrb[0].mxu0 %v3162
        %v3341 = vpop.f32.mrb[0].mxu0
        %v3342 = vadd.f32 %v3201, %v3341
        %v3343 = vpop.f32.mrb[0].mxu0
        %v3344 = vpop.f32.mrb[0].mxu0
        %v3345 = vadd.f32 %v3201, %v3344
        %v3346 = vpop.f32.mrb[0].mxu0
        %3347 = vdwg.mxu0
        %v3348 = vadd.f32 %v2877, %v3334
        %v3349 = vadd.f32 %v2878, %v3337
        %v3350 = vadd.f32 %v2879, %v3342
        %v3351 = vadd.f32 %v2880, %v3345
        %3352 = vst [vmem:[%s448] sm:$0xff] %v3348
        %3353 = vst [vmem:[%s448 + $0x8] sm:$0xff] %v3349
        %3354 = vst [vmem:[%s448 + $0x10] sm:$0xff] %v3350
        %3355 = vst [vmem:[%s448 + $0x18] sm:$0xff] %v3351
        %s3356 = sand.u32 %s253, 1
        %s3357 = scalar_lea.sflag [#allocation4], %s3356
        %s3358 = sand.u32 %s253, 1
        %s3359 = smul.addr %s3358, 32
        %s3360 = scalar_lea.vmem [#allocation13], %s3359
        // Predicated region
        $region85: #{tpu_custom_call.1} parent=59 // pred_check
          %p3361 = pneg %p263
        $region86: #{tpu_custom_call.1} parent=59 // pred_check_branch
          %3363 = sbr.rel (%p3361) target = $region88
        $region87: #{tpu_custom_call.1} parent=59 // pred_region
          %s3364 = smul.u32 4, %s30
          %s3366 = ssub.s32 512, 512
          %3367 = vsyncadd %s3357, %s3366
          %s3368 = smul.addr %s3364, 128
          %s3369 = scalar_lea.hbm %s10, %s3368
          %s3370 = sshll.u32 %s3360, 4
          %s3371 = int_to_ptr.vmem [resolvable:$true] %s3370
          %3376 = dma.vmem_to_hbm [thread:$0]  %s3371, 512, %s3369, %s3357, 128, 128, 8
        $region88: #{tpu_custom_call.1} parent=59 // pred_fallthru
          _
      $region60: #{tpu_custom_call.1} parent=5 // pred_fallthru
        _
      %p3377 = scmp.le.s32.totalorder 2, %s25
      // Predicated region
      $region89: #{tpu_custom_call.1} parent=5 // pred_check
        %p3378 = pneg %p3377
      $region90: #{tpu_custom_call.1} parent=5 // pred_check_branch
        %3380 = sbr.rel (%p3378) target = $region92
      $region91: #{tpu_custom_call.1} parent=5 // pred_region
        %s3381 = ssub.s32 %s25, 2
        // Predicated region
        $region93: #{tpu_custom_call.1} parent=91 // pred_check
          %p3382 = pneg %p269
        $region94: #{tpu_custom_call.1} parent=91 // pred_check_branch
          %3384 = sbr.rel (%p3382) target = $region96
        $region95: #{tpu_custom_call.1} parent=91 // pred_region
          %s3385 = sand.u32 %s254, 1
          %s3386 = scalar_lea.sflag [#allocation4], %s3385
          %s3387 = sand.u32 %s254, 1
          %s3388 = smul.addr %s3387, 32
          %s3389 = scalar_lea.vmem [#allocation13], %s3388
          %3390 = dma.done %s3386, 512
        $region96: #{tpu_custom_call.1} parent=91 // pred_fallthru
          _
      $region92: #{tpu_custom_call.1} parent=5 // pred_fallthru
        _
    $region6: #{tpu_custom_call.1} parent=1 // loop_footer
      %s29 = sadd.s32 1, %s25
    $region7: #{tpu_custom_call.1} parent=1 // loop_footer_branch
      %24 = sbr.rel target = $region3
    $region8: #{tpu_custom_call.1} parent=1 // loop_exit
      _
    %3391 = vsyncpa [#allocation3], 1
    %s3392 = scalar_lea.sflag [#allocation3], 1
    %3393 = vsyncpa %s3392, 1
    %3394 = vsyncpa [#allocation6], 1
    %3395 = vsyncpa [#allocation9], 1
    %3396 = vsyncpa [#allocation12], 1
    %3397 = vsyncpa [#allocation4], 1
    %s3398 = scalar_lea.sflag [#allocation4], 1
    %3399 = vsyncpa %s3398, 1

</llo_original>
